<compile_context>
chip_gen: v7x
topology: tpu7x:2x2x1
jax: 0.10.0
libtpu: 0.0.40
codegen_flags: <defaults>
</compile_context>

<pallas_src>
import functools

import jax
import jax.numpy as jnp
from jax.experimental import pallas as pl
from jax.experimental.pallas import tpu as pltpu


def _round_up(n, m):
    return ((n + m - 1) // m) * m


def _disc_kernel(x_ref,
                 w1_ref, b1_ref,
                 w2_ref, b2_ref,
                 w3_ref, b3_ref,
                 w4_ref, b4_ref,
                 o_ref,
                 *, bf16_elementwise):
    """One batch tile of the MLP.  Weights (bf16) are VMEM-resident across
    grid steps; matmuls accumulate in f32 on the MXU."""

    def leaky_relu(h):
        return jnp.where(h > 0, h, 0.2 * h)

    def layer(h_bf16, w_ref, b_ref, cast_out):
        # MXU matmul: bf16 x bf16 -> f32 accumulation.
        acc = jnp.dot(h_bf16, w_ref[...], preferred_element_type=jnp.float32)
        # Dropout(0.3) after each hidden layer is identity in eval mode.
        # TODO(synk): train-mode dropout (pltpu.prng_random_bits mask) not emitted.
        if bf16_elementwise:
            # v6e/v7x: bias + LeakyReLU on the bf16 VPU path; halves the
            # (TM, N) elementwise vreg traffic and drops a per-layer cast.
            return leaky_relu(acc.astype(jnp.bfloat16) + b_ref[...])
        # v5e-safe f32 VPU path; cast to bf16 only to feed the next MXU matmul.
        h = leaky_relu(acc + b_ref[...])
        return h.astype(jnp.bfloat16) if cast_out else h

    h = layer(x_ref[...], w1_ref, b1_ref, cast_out=True)    # 784  -> 1024
    h = layer(h, w2_ref, b2_ref, cast_out=True)             # 1024 -> 512
    h = layer(h, w3_ref, b3_ref, cast_out=False)            # 512  -> 256

    # Layer 4: 256 -> 1.  N=1 is the worst MXU shape; do it on the VPU/XLU as
    # a multiply against the transposed (1, 256) weight row + lane reduce.
    z = jnp.sum(h.astype(jnp.float32) * w4_ref[...], axis=-1, keepdims=True) \
        + b4_ref[...]

    # Sigmoid routed through the EUP: exp + approximate reciprocal.
    o_ref[...] = pl.reciprocal(1.0 + jnp.exp(-z), approx=True)


def discriminator_forward(x, params, *, tile_m=512, bf16_elementwise=False,
                          vmem_limit_bytes=32 * 1024 * 1024):
    """x: (B, 1, 28, 28) or (B, 784) float.  Returns (B, 1) float32.

    Per-generation tuning:
      v5e : bf16_elementwise=False, tile_m up to 1024, vmem_limit ~64 MiB.
      v6e : bf16_elementwise=True,  tile_m up to 1024, vmem_limit ~64 MiB.
      v7x : bf16_elementwise=True,  tile_m<=512, keep the 32 MiB vmem limit.
    """
    B = x.shape[0]
    x2d = x.reshape(B, 784)

    (w1, b1), (w2, b2), (w3, b3), (w4, b4) = params

    # bf16 weights halve the (one-time) weight DMA and feed the MXU directly.
    w1b = w1.astype(jnp.bfloat16)
    w2b = w2.astype(jnp.bfloat16)
    w3b = w3.astype(jnp.bfloat16)
    bias_dt = jnp.bfloat16 if bf16_elementwise else jnp.float32
    b1c = b1.reshape(1, 1024).astype(bias_dt)
    b2c = b2.reshape(1, 512).astype(bias_dt)
    b3c = b3.reshape(1, 256).astype(bias_dt)
    w4_row = w4.reshape(1, 256).astype(jnp.float32)   # transposed row for VPU
    b4_sc = b4.reshape(1, 1).astype(jnp.float32)

    # Batch tile sized to the batch: <= 15 rows of padding per tile,
    # multiple of 16 (bf16 sublane packing), capped at tile_m.
    n_tiles = pl.cdiv(B, tile_m)
    TM = _round_up(pl.cdiv(B, n_tiles), 16)
    Bp = _round_up(B, TM)

    # x is the only per-grid-step HBM stream; DMA it as bf16 (halves the DMA
    # and removes the per-step in-kernel cast).
    xb = x2d.astype(jnp.bfloat16)
    if Bp != B:
        xb = jnp.pad(xb, ((0, Bp - B), (0, 0)))

    grid = (Bp // TM,)

    in_specs = [
        pl.BlockSpec((TM, 784), lambda i: (i, 0)),      # x tile (pipelined, bf16)
        pl.BlockSpec((784, 1024), lambda i: (0, 0)),    # w1 (resident, bf16)
        pl.BlockSpec((1, 1024), lambda i: (0, 0)),      # b1
        pl.BlockSpec((1024, 512), lambda i: (0, 0)),    # w2 (resident, bf16)
        pl.BlockSpec((1, 512), lambda i: (0, 0)),       # b2
        pl.BlockSpec((512, 256), lambda i: (0, 0)),     # w3 (resident, bf16)
        pl.BlockSpec((1, 256), lambda i: (0, 0)),       # b3
        pl.BlockSpec((1, 256), lambda i: (0, 0)),       # w4 row (f32, VPU)
        pl.BlockSpec((1, 1), lambda i: (0, 0)),         # b4
    ]
    out_specs = pl.BlockSpec((TM, 1), lambda i: (i, 0))

    kernel = functools.partial(_disc_kernel, bf16_elementwise=bf16_elementwise)

    out = pl.pallas_call(
        kernel,
        out_shape=jax.ShapeDtypeStruct((Bp, 1), jnp.float32),
        grid=grid,
        in_specs=in_specs,
        out_specs=out_specs,
        compiler_params=pltpu.CompilerParams(
            dimension_semantics=("parallel",),          # shard batch over TCs
            vmem_limit_bytes=vmem_limit_bytes,
        ),
    )(xb, w1b, b1c, w2b, b2c, w3b, b3c, w4_row, b4_sc)

    return out[:B]   # drop batch padding; torch's out.view(B, -1) -> (B, 1)


def init_params(key):
    """Deterministic parameter init matching the torch.nn.Linear layer shapes."""
    dims = [(784, 1024), (1024, 512), (512, 256), (256, 1)]
    params = []
    for i, (fan_in, fan_out) in enumerate(dims):
        kw, kb, key = jax.random.split(jax.random.fold_in(key, i), 3)
        bound = 1.0 / (fan_in ** 0.5)  # torch.nn.Linear default uniform bound
        w = jax.random.uniform(kw, (fan_in, fan_out), jnp.float32, -bound, bound)
        b = jax.random.uniform(kb, (1, fan_out), jnp.float32, -bound, bound)
        params.append((w, b))
    return params


def reference_forward(x, params, *, bf16_elementwise=False):
    """Plain-JAX reference mirroring the kernel's quantization choices."""
    (w1, b1), (w2, b2), (w3, b3), (w4, b4) = params
    B = x.shape[0]

    def layer(h, w, b, cast_out):
        acc = jnp.dot(h, w.astype(jnp.bfloat16),
                      preferred_element_type=jnp.float32)
        if bf16_elementwise:
            a = acc.astype(jnp.bfloat16) + b.reshape(1, -1).astype(jnp.bfloat16)
            return jnp.where(a > 0, a, 0.2 * a)
        a = acc + b.reshape(1, -1).astype(jnp.float32)
        a = jnp.where(a > 0, a, 0.2 * a)
        return a.astype(jnp.bfloat16) if cast_out else a

    h = layer(x.reshape(B, 784).astype(jnp.bfloat16), w1, b1, True)
    h = layer(h, w2, b2, True)
    h = layer(h, w3, b3, False)
    z = jnp.sum(h.astype(jnp.float32) * w4.reshape(1, 256).astype(jnp.float32),
                axis=-1, keepdims=True) + b4.reshape(1, 1).astype(jnp.float32)
    return jax.nn.sigmoid(z)


if __name__ == "__main__":
    key = jax.random.PRNGKey(0)
    params = init_params(key)

    # Case 1: small MNIST-like batch, (B, 1, 28, 28) -> (B, 784).
    x_small = jax.random.normal(jax.random.fold_in(key, 999), (8, 1, 28, 28),
                                dtype=jnp.float32)
    out_small = jax.block_until_ready(discriminator_forward(x_small, params))
    ref_small = reference_forward(x_small, params)
    assert out_small.shape == (8, 1), out_small.shape
    assert jnp.allclose(out_small, ref_small, atol=5e-3, rtol=0.0), (
        float(jnp.max(jnp.abs(out_small - ref_small))))

    # Case 2: B=300 -> single 304-row tile (TM sized to the batch; previously
    # this padded to 512 rows).
    x_big = jax.random.normal(jax.random.fold_in(key, 1234), (300, 784),
                              dtype=jnp.float32)
    out_big = jax.block_until_ready(discriminator_forward(x_big, params))
    ref_big = reference_forward(x_big, params)
    assert out_big.shape == (300, 1), out_big.shape
    assert jnp.allclose(out_big, ref_big, atol=5e-3, rtol=0.0), (
        float(jnp.max(jnp.abs(out_big - ref_big))))

    # Case 3: multi-tile grid (3 steps) + bf16 elementwise path (v6e/v7x option).
    x_mt = jax.random.normal(jax.random.fold_in(key, 77), (600, 784),
                             dtype=jnp.float32)
    out_mt = jax.block_until_ready(
        discriminator_forward(x_mt, params, tile_m=256, bf16_elementwise=True))
    ref_mt = reference_forward(x_mt, params, bf16_elementwise=True)
    assert out_mt.shape == (600, 1), out_mt.shape
    assert jnp.allclose(out_mt, ref_mt, atol=1e-2, rtol=0.0), (
        float(jnp.max(jnp.abs(out_mt - ref_mt))))

    print("KERNEL_OK")
</pallas_src>

<mosaic_0001>
module attributes {stable_mosaic.version = 11 : i64} {
  func.func @_disc_kernel(%arg0: i32, %arg1: memref<16x784xbf16, #tpu.memory_space<vmem>>, %arg2: memref<784x1024xbf16, #tpu.memory_space<vmem>>, %arg3: memref<1x1024xf32, #tpu.memory_space<vmem>>, %arg4: memref<1024x512xbf16, #tpu.memory_space<vmem>>, %arg5: memref<1x512xf32, #tpu.memory_space<vmem>>, %arg6: memref<512x256xbf16, #tpu.memory_space<vmem>>, %arg7: memref<1x256xf32, #tpu.memory_space<vmem>>, %arg8: memref<1x256xf32, #tpu.memory_space<vmem>>, %arg9: memref<1x1xf32, #tpu.memory_space<vmem>>, %arg10: memref<16x1xf32, #tpu.memory_space<vmem>>) attributes {dimension_semantics = [#tpu.dimension_semantics<parallel>], iteration_bounds = array<i64: 1>, scalar_prefetch = 0 : i64, scratch_operands = 0 : i64, tpu.core_type = #tpu.core_type<tc>, window_params = [{transform_indices = @transform_0, window_bounds = array<i64: 16, 784>}, {pipeline_mode = #tpu.pipeline_mode<synchronous>, transform_indices = @transform_1, window_bounds = array<i64: 784, 1024>}, {pipeline_mode = #tpu.pipeline_mode<synchronous>, transform_indices = @transform_2, window_bounds = array<i64: 1, 1024>}, {pipeline_mode = #tpu.pipeline_mode<synchronous>, transform_indices = @transform_3, window_bounds = array<i64: 1024, 512>}, {pipeline_mode = #tpu.pipeline_mode<synchronous>, transform_indices = @transform_4, window_bounds = array<i64: 1, 512>}, {pipeline_mode = #tpu.pipeline_mode<synchronous>, transform_indices = @transform_5, window_bounds = array<i64: 512, 256>}, {pipeline_mode = #tpu.pipeline_mode<synchronous>, transform_indices = @transform_6, window_bounds = array<i64: 1, 256>}, {pipeline_mode = #tpu.pipeline_mode<synchronous>, transform_indices = @transform_7, window_bounds = array<i64: 1, 256>}, {pipeline_mode = #tpu.pipeline_mode<synchronous>, transform_indices = @transform_8, window_bounds = array<i64: 1, 1>}, {transform_indices = @transform_9, window_bounds = array<i64: 16, 1>}]} {
    %c0 = arith.constant 0 : index
    %c0_0 = arith.constant 0 : index
    %0 = vector.load %arg1[%c0, %c0_0] : memref<16x784xbf16, #tpu.memory_space<vmem>>, vector<16x784xbf16>
    %c0_1 = arith.constant 0 : index
    %c0_2 = arith.constant 0 : index
    %1 = vector.load %arg2[%c0_1, %c0_2] : memref<784x1024xbf16, #tpu.memory_space<vmem>>, vector<784x1024xbf16>
    %cst = arith.constant dense<0.000000e+00> : vector<16x1024xf32>
    %2 = tpu.matmul %0, %1, %cst {dimension_numbers = #tpu.dot_dimension_numbers<[1], [0], [0], [1], [0, 0, 1, 1], [], []>} : vector<16x784xbf16>, vector<784x1024xbf16>, vector<16x1024xf32> -> vector<16x1024xf32>
    %c0_3 = arith.constant 0 : index
    %c0_4 = arith.constant 0 : index
    %3 = vector.load %arg3[%c0_3, %c0_4] : memref<1x1024xf32, #tpu.memory_space<vmem>>, vector<1x1024xf32>
    %4 = vector.broadcast %3 : vector<1x1024xf32> to vector<16x1024xf32>
    %5 = arith.addf %2, %4 : vector<16x1024xf32>
    %cst_5 = arith.constant 0.000000e+00 : f32
    %6 = vector.broadcast %cst_5 : f32 to vector<16x1024xf32>
    %7 = arith.cmpf ogt, %5, %6 : vector<16x1024xf32>
    %cst_6 = arith.constant 2.000000e-01 : f32
    %8 = vector.broadcast %cst_6 : f32 to vector<16x1024xf32>
    %9 = arith.mulf %8, %5 : vector<16x1024xf32>
    %10 = arith.select %7, %5, %9 : vector<16x1024xi1>, vector<16x1024xf32>
    %11 = arith.truncf %10 : vector<16x1024xf32> to vector<16x1024xbf16>
    %c0_7 = arith.constant 0 : index
    %c0_8 = arith.constant 0 : index
    %12 = vector.load %arg4[%c0_7, %c0_8] : memref<1024x512xbf16, #tpu.memory_space<vmem>>, vector<1024x512xbf16>
    %cst_9 = arith.constant dense<0.000000e+00> : vector<16x512xf32>
    %13 = tpu.matmul %11, %12, %cst_9 {dimension_numbers = #tpu.dot_dimension_numbers<[1], [0], [0], [1], [0, 0, 1, 1], [], []>} : vector<16x1024xbf16>, vector<1024x512xbf16>, vector<16x512xf32> -> vector<16x512xf32>
    %c0_10 = arith.constant 0 : index
    %c0_11 = arith.constant 0 : index
    %14 = vector.load %arg5[%c0_10, %c0_11] : memref<1x512xf32, #tpu.memory_space<vmem>>, vector<1x512xf32>
    %15 = vector.broadcast %14 : vector<1x512xf32> to vector<16x512xf32>
    %16 = arith.addf %13, %15 : vector<16x512xf32>
    %cst_12 = arith.constant 0.000000e+00 : f32
    %17 = vector.broadcast %cst_12 : f32 to vector<16x512xf32>
    %18 = arith.cmpf ogt, %16, %17 : vector<16x512xf32>
    %cst_13 = arith.constant 2.000000e-01 : f32
    %19 = vector.broadcast %cst_13 : f32 to vector<16x512xf32>
    %20 = arith.mulf %19, %16 : vector<16x512xf32>
    %21 = arith.select %18, %16, %20 : vector<16x512xi1>, vector<16x512xf32>
    %22 = arith.truncf %21 : vector<16x512xf32> to vector<16x512xbf16>
    %c0_14 = arith.constant 0 : index
    %c0_15 = arith.constant 0 : index
    %23 = vector.load %arg6[%c0_14, %c0_15] : memref<512x256xbf16, #tpu.memory_space<vmem>>, vector<512x256xbf16>
    %cst_16 = arith.constant dense<0.000000e+00> : vector<16x256xf32>
    %24 = tpu.matmul %22, %23, %cst_16 {dimension_numbers = #tpu.dot_dimension_numbers<[1], [0], [0], [1], [0, 0, 1, 1], [], []>} : vector<16x512xbf16>, vector<512x256xbf16>, vector<16x256xf32> -> vector<16x256xf32>
    %c0_17 = arith.constant 0 : index
    %c0_18 = arith.constant 0 : index
    %25 = vector.load %arg7[%c0_17, %c0_18] : memref<1x256xf32, #tpu.memory_space<vmem>>, vector<1x256xf32>
    %26 = vector.broadcast %25 : vector<1x256xf32> to vector<16x256xf32>
    %27 = arith.addf %24, %26 : vector<16x256xf32>
    %cst_19 = arith.constant 0.000000e+00 : f32
    %28 = vector.broadcast %cst_19 : f32 to vector<16x256xf32>
    %29 = arith.cmpf ogt, %27, %28 : vector<16x256xf32>
    %cst_20 = arith.constant 2.000000e-01 : f32
    %30 = vector.broadcast %cst_20 : f32 to vector<16x256xf32>
    %31 = arith.mulf %30, %27 : vector<16x256xf32>
    %32 = arith.select %29, %27, %31 : vector<16x256xi1>, vector<16x256xf32>
    %c0_21 = arith.constant 0 : index
    %c0_22 = arith.constant 0 : index
    %33 = vector.load %arg8[%c0_21, %c0_22] : memref<1x256xf32, #tpu.memory_space<vmem>>, vector<1x256xf32>
    %34 = vector.broadcast %33 : vector<1x256xf32> to vector<16x256xf32>
    %35 = arith.mulf %32, %34 : vector<16x256xf32>
    %cst_23 = arith.constant dense<0.000000e+00> : vector<16xf32>
    %36 = vector.multi_reduction <add>, %35, %cst_23 [1] : vector<16x256xf32> to vector<16xf32>
    %37 = vector.shape_cast %36 : vector<16xf32> to vector<16x1xf32>
    %c0_24 = arith.constant 0 : index
    %c0_25 = arith.constant 0 : index
    %38 = vector.load %arg9[%c0_24, %c0_25] : memref<1x1xf32, #tpu.memory_space<vmem>>, vector<1x1xf32>
    %39 = vector.broadcast %38 : vector<1x1xf32> to vector<16x1xf32>
    %40 = arith.addf %37, %39 : vector<16x1xf32>
    %cst_26 = arith.constant 0.000000e+00 : f32
    %41 = vector.broadcast %cst_26 : f32 to vector<16x1xf32>
    %42 = arith.subf %41, %40 : vector<16x1xf32>
    %43 = math.exp %42 : vector<16x1xf32>
    %cst_27 = arith.constant 1.000000e+00 : f32
    %44 = vector.broadcast %cst_27 : f32 to vector<16x1xf32>
    %45 = arith.addf %44, %43 : vector<16x1xf32>
    %46 = tpu.reciprocal %45 {approx = true} : vector<16x1xf32> -> vector<16x1xf32>
    %c0_28 = arith.constant 0 : index
    %c0_29 = arith.constant 0 : index
    %47 = vector.load %arg10[%c0_28, %c0_29] : memref<16x1xf32, #tpu.memory_space<vmem>>, vector<16x1xf32>
    tpu.vector_store %arg10[%c0_28, %c0_29], %46 {strides = array<i32>} : memref<16x1xf32, #tpu.memory_space<vmem>>, vector<16x1xf32>,
    return
  }
  func.func @transform_0(%arg0: i32) -> (i32, i32) {
    %c0_i32 = arith.constant 0 : i32
    %c0_i32_0 = arith.constant 0 : i32
    return %arg0, %c0_i32 : i32, i32
  }
  func.func @transform_1(%arg0: i32) -> (i32, i32) {
    %c0_i32 = arith.constant 0 : i32
    %c0_i32_0 = arith.constant 0 : i32
    %c0_i32_1 = arith.constant 0 : i32
    return %c0_i32, %c0_i32_0 : i32, i32
  }
  func.func @transform_2(%arg0: i32) -> (i32, i32) {
    %c0_i32 = arith.constant 0 : i32
    %c0_i32_0 = arith.constant 0 : i32
    %c0_i32_1 = arith.constant 0 : i32
    return %c0_i32, %c0_i32_0 : i32, i32
  }
  func.func @transform_3(%arg0: i32) -> (i32, i32) {
    %c0_i32 = arith.constant 0 : i32
    %c0_i32_0 = arith.constant 0 : i32
    %c0_i32_1 = arith.constant 0 : i32
    return %c0_i32, %c0_i32_0 : i32, i32
  }
  func.func @transform_4(%arg0: i32) -> (i32, i32) {
    %c0_i32 = arith.constant 0 : i32
    %c0_i32_0 = arith.constant 0 : i32
    %c0_i32_1 = arith.constant 0 : i32
    return %c0_i32, %c0_i32_0 : i32, i32
  }
  func.func @transform_5(%arg0: i32) -> (i32, i32) {
    %c0_i32 = arith.constant 0 : i32
    %c0_i32_0 = arith.constant 0 : i32
    %c0_i32_1 = arith.constant 0 : i32
    return %c0_i32, %c0_i32_0 : i32, i32
  }
  func.func @transform_6(%arg0: i32) -> (i32, i32) {
    %c0_i32 = arith.constant 0 : i32
    %c0_i32_0 = arith.constant 0 : i32
    %c0_i32_1 = arith.constant 0 : i32
    return %c0_i32, %c0_i32_0 : i32, i32
  }
  func.func @transform_7(%arg0: i32) -> (i32, i32) {
    %c0_i32 = arith.constant 0 : i32
    %c0_i32_0 = arith.constant 0 : i32
    %c0_i32_1 = arith.constant 0 : i32
    return %c0_i32, %c0_i32_0 : i32, i32
  }
  func.func @transform_8(%arg0: i32) -> (i32, i32) {
    %c0_i32 = arith.constant 0 : i32
    %c0_i32_0 = arith.constant 0 : i32
    %c0_i32_1 = arith.constant 0 : i32
    return %c0_i32, %c0_i32_0 : i32, i32
  }
  func.func @transform_9(%arg0: i32) -> (i32, i32) {
    %c0_i32 = arith.constant 0 : i32
    %c0_i32_0 = arith.constant 0 : i32
    return %arg0, %c0_i32 : i32, i32
  }
}

</mosaic_0001>

<llo_original>
// kernel: tpu_custom_call.1
$region0: #{tpu_custom_call.1}
  #allocation0 [shape = 'u32[]', space=smem, size = 0x4, offset = 0x4, fixed_abs, tag = 'smem constant byte address 0x4 - core index']
  #allocation1 [shape = 'u32[144,128]{1,0:T(1,128)}', space=vmem, size = 0x12000, scoped, tag = 'internal scratch']
  #allocation2 [shape = 'f32[1,1]{1,0:T(1,128)S(1)}', space=vmem, size = 0x200, scoped, tag = 'scoped memory for tpu_custom_call.1']
  %s0 = inlined_call_operand.hbm [shape: bf16[16,784], index: 0, kind: input, shape index: {}]
  %s1 = inlined_call_operand.hbm [shape: bf16[784,1024], index: 1, kind: input, shape index: {}]
  %s2 = inlined_call_operand.hbm [shape: f32[1,1024], index: 2, kind: input, shape index: {}]
  %s3 = inlined_call_operand.hbm [shape: bf16[1024,512], index: 3, kind: input, shape index: {}]
  %s4 = inlined_call_operand.hbm [shape: f32[1,512], index: 4, kind: input, shape index: {}]
  %s5 = inlined_call_operand.hbm [shape: bf16[512,256], index: 5, kind: input, shape index: {}]
  %s6 = inlined_call_operand.hbm [shape: f32[1,256], index: 6, kind: input, shape index: {}]
  %s7 = inlined_call_operand.hbm [shape: f32[1,256], index: 7, kind: input, shape index: {}]
  %s8 = inlined_call_operand.<no memory space> [shape: f32[1,1], index: 8, kind: input, shape index: {}]
  %s9 = inlined_call_operand.vmem [shape: f32[16,1], index: 9, kind: output, shape index: {}]
  %s10 = sld [smem:[#allocation0]]
  $region78: #{tpu_custom_call.1} parent=0
    _
  %s12 = ssub.s32 1, %s10
  %s13 = scalar_select 0, %s12, %s10
  %v14 = vstv %s8
  %15 = vst [vmem:[#allocation2] sm:$0x1] %v14
  $region1: #{tpu_custom_call.1} parent=0
    #allocation3 [shape = 'u8[28672]{0}', space=vmem, size = 0x7000, scoped, tag = 'input window, operand 0, single buffered']
    #allocation4 [shape = 's32[1]{0}', space=sflag, size = 0x4, scoped, tag = 'scoped memory for tpu_custom_call.1']
    #allocation5 [shape = 'u8[1605632]{0}', space=vmem, size = 0x188000, scoped, tag = 'input window, operand 1, single buffered']
    #allocation6 [shape = 's32[1]{0}', space=sflag, size = 0x4, scoped, tag = 'scoped memory for tpu_custom_call.1']
    #allocation7 [shape = 'u8[4096]{0}', space=vmem, size = 0x1000, scoped, tag = 'input window, operand 2, single buffered']
    #allocation8 [shape = 'u8[1048576]{0}', space=vmem, size = 0x100000, scoped, tag = 'input window, operand 3, single buffered']
    #allocation9 [shape = 's32[1]{0}', space=sflag, size = 0x4, scoped, tag = 'scoped memory for tpu_custom_call.1']
    #allocation10 [shape = 'u8[2048]{0}', space=vmem, size = 0x800, scoped, tag = 'input window, operand 4, single buffered']
    #allocation11 [shape = 'u8[262144]{0}', space=vmem, size = 0x40000, scoped, tag = 'input window, operand 5, single buffered']
    #allocation12 [shape = 's32[1]{0}', space=sflag, size = 0x4, scoped, tag = 'scoped memory for tpu_custom_call.1']
    #allocation13 [shape = 'u8[1024]{0}', space=vmem, size = 0x400, scoped, tag = 'input window, operand 6, single buffered']
    #allocation14 [shape = 'u8[1024]{0}', space=vmem, size = 0x400, scoped, tag = 'input window, operand 7, single buffered']
    #allocation15 [shape = 's32[1]{0}', space=sflag, size = 0x4, scoped, tag = 'scoped memory for tpu_custom_call.1']
    %16 = vsyncpa [#allocation4], 0
    %17 = vsyncpa [#allocation6], 0
    %18 = vsyncpa [#allocation9], 0
    %19 = vsyncpa [#allocation12], 0
    %20 = vsyncpa [#allocation15], 0
    // Predicated region
    $region2: #{tpu_custom_call.1} parent=1 // pred_check
      _
    $region3: #{tpu_custom_call.1} parent=1 // pred_check_branch
      %22 = sbr.rel (0) target = $region5
    $region4: #{tpu_custom_call.1} parent=1 // pred_region
      %s24 = ssub.s32 896, 896
      %25 = vsyncadd [#allocation4], %s24
      %s26 = sshll.u32 [#allocation3], 4
      %s27 = int_to_ptr.vmem [resolvable:$true] %s26
      %32 = dma.hbm_to_vmem [thread:$0]  %s0, 896, %s27, [#allocation4], 448, 448, 28
    $region5: #{tpu_custom_call.1} parent=1 // pred_fallthru
      _
    // Predicated region
    $region6: #{tpu_custom_call.1} parent=1 // pred_check
      _
    $region7: #{tpu_custom_call.1} parent=1 // pred_check_branch
      %34 = sbr.rel (0) target = $region9
    $region8: #{tpu_custom_call.1} parent=1 // pred_region
      %s36 = ssub.s32 50176, 50176
      %37 = vsyncadd [#allocation6], %s36
      %s38 = sshll.u32 [#allocation5], 4
      %s39 = int_to_ptr.vmem [resolvable:$true] %s38
      %44 = dma.hbm_to_vmem [thread:$0]  %s1, 50176, %s39, [#allocation6], 512, 512, 32
    $region9: #{tpu_custom_call.1} parent=1 // pred_fallthru
      _
    // Predicated region
    $region10: #{tpu_custom_call.1} parent=1 // pred_check
      _
    $region11: #{tpu_custom_call.1} parent=1 // pred_check_branch
      %46 = sbr.rel (0) target = $region13
    $region12: #{tpu_custom_call.1} parent=1 // pred_region
      %s48 = ssub.s32 128, 128
      %49 = vsyncadd [#allocation6], %s48
      %s51 = sshll.u32 [#allocation7], 4
      %s52 = int_to_ptr.vmem [resolvable:$true] %s51
      %54 = dma.hbm_to_vmem [thread:$0]  %s2, 128, %s52, [#allocation6]
    $region13: #{tpu_custom_call.1} parent=1 // pred_fallthru
      _
    // Predicated region
    $region14: #{tpu_custom_call.1} parent=1 // pred_check
      _
    $region15: #{tpu_custom_call.1} parent=1 // pred_check_branch
      %56 = sbr.rel (0) target = $region17
    $region16: #{tpu_custom_call.1} parent=1 // pred_region
      %s58 = ssub.s32 32768, 32768
      %59 = vsyncadd [#allocation9], %s58
      %s60 = sshll.u32 [#allocation8], 4
      %s61 = int_to_ptr.vmem [resolvable:$true] %s60
      %66 = dma.hbm_to_vmem [thread:$0]  %s3, 32768, %s61, [#allocation9], 256, 256, 16
    $region17: #{tpu_custom_call.1} parent=1 // pred_fallthru
      _
    // Predicated region
    $region18: #{tpu_custom_call.1} parent=1 // pred_check
      _
    $region19: #{tpu_custom_call.1} parent=1 // pred_check_branch
      %68 = sbr.rel (0) target = $region21
    $region20: #{tpu_custom_call.1} parent=1 // pred_region
      %s70 = ssub.s32 64, 64
      %71 = vsyncadd [#allocation9], %s70
      %s73 = sshll.u32 [#allocation10], 4
      %s74 = int_to_ptr.vmem [resolvable:$true] %s73
      %76 = dma.hbm_to_vmem [thread:$0]  %s4, 64, %s74, [#allocation9]
    $region21: #{tpu_custom_call.1} parent=1 // pred_fallthru
      _
    // Predicated region
    $region22: #{tpu_custom_call.1} parent=1 // pred_check
      _
    $region23: #{tpu_custom_call.1} parent=1 // pred_check_branch
      %78 = sbr.rel (0) target = $region25
    $region24: #{tpu_custom_call.1} parent=1 // pred_region
      %s80 = ssub.s32 8192, 8192
      %81 = vsyncadd [#allocation12], %s80
      %s82 = sshll.u32 [#allocation11], 4
      %s83 = int_to_ptr.vmem [resolvable:$true] %s82
      %88 = dma.hbm_to_vmem [thread:$0]  %s5, 8192, %s83, [#allocation12], 128, 128, 8
    $region25: #{tpu_custom_call.1} parent=1 // pred_fallthru
      _
    // Predicated region
    $region26: #{tpu_custom_call.1} parent=1 // pred_check
      _
    $region27: #{tpu_custom_call.1} parent=1 // pred_check_branch
      %90 = sbr.rel (0) target = $region29
    $region28: #{tpu_custom_call.1} parent=1 // pred_region
      %s92 = ssub.s32 32, 32
      %93 = vsyncadd [#allocation12], %s92
      %s95 = sshll.u32 [#allocation13], 4
      %s96 = int_to_ptr.vmem [resolvable:$true] %s95
      %98 = dma.hbm_to_vmem [thread:$0]  %s6, 32, %s96, [#allocation12]
    $region29: #{tpu_custom_call.1} parent=1 // pred_fallthru
      _
    // Predicated region
    $region30: #{tpu_custom_call.1} parent=1 // pred_check
      _
    $region31: #{tpu_custom_call.1} parent=1 // pred_check_branch
      %100 = sbr.rel (0) target = $region33
    $region32: #{tpu_custom_call.1} parent=1 // pred_region
      %s102 = ssub.s32 32, 32
      %103 = vsyncadd [#allocation15], %s102
      %s105 = sshll.u32 [#allocation14], 4
      %s106 = int_to_ptr.vmem [resolvable:$true] %s105
      %108 = dma.hbm_to_vmem [thread:$0]  %s7, 32, %s106, [#allocation15]
    $region33: #{tpu_custom_call.1} parent=1 // pred_fallthru
      _
    // Predicated region
    $region34: #{tpu_custom_call.1} parent=1 // pred_check
      _
    $region35: #{tpu_custom_call.1} parent=1 // pred_check_branch
      %110 = sbr.rel (0) target = $region37
    $region36: #{tpu_custom_call.1} parent=1 // pred_region
      _
    $region37: #{tpu_custom_call.1} parent=1 // pred_fallthru
      _
    // Predicated region
    $region38: #{tpu_custom_call.1} parent=1 // pred_check
      _
    $region39: #{tpu_custom_call.1} parent=1 // pred_check_branch
      %112 = sbr.rel (0) target = $region41
    $region40: #{tpu_custom_call.1} parent=1 // pred_region
      %113 = dma.done [#allocation4], 896
    $region41: #{tpu_custom_call.1} parent=1 // pred_fallthru
      _
    // Predicated region
    $region42: #{tpu_custom_call.1} parent=1 // pred_check
      _
    $region43: #{tpu_custom_call.1} parent=1 // pred_check_branch
      %115 = sbr.rel (0) target = $region45
    $region44: #{tpu_custom_call.1} parent=1 // pred_region
      %116 = dma.done [#allocation6], 50176
    $region45: #{tpu_custom_call.1} parent=1 // pred_fallthru
      _
    // Predicated region
    $region46: #{tpu_custom_call.1} parent=1 // pred_check
      _
    $region47: #{tpu_custom_call.1} parent=1 // pred_check_branch
      %118 = sbr.rel (0) target = $region49
    $region48: #{tpu_custom_call.1} parent=1 // pred_region
      %119 = dma.done [#allocation6], 128
    $region49: #{tpu_custom_call.1} parent=1 // pred_fallthru
      _
    // Predicated region
    $region50: #{tpu_custom_call.1} parent=1 // pred_check
      _
    $region51: #{tpu_custom_call.1} parent=1 // pred_check_branch
      %121 = sbr.rel (0) target = $region53
    $region52: #{tpu_custom_call.1} parent=1 // pred_region
      %122 = dma.done [#allocation9], 32768
    $region53: #{tpu_custom_call.1} parent=1 // pred_fallthru
      _
    // Predicated region
    $region54: #{tpu_custom_call.1} parent=1 // pred_check
      _
    $region55: #{tpu_custom_call.1} parent=1 // pred_check_branch
      %124 = sbr.rel (0) target = $region57
    $region56: #{tpu_custom_call.1} parent=1 // pred_region
      %125 = dma.done [#allocation9], 64
    $region57: #{tpu_custom_call.1} parent=1 // pred_fallthru
      _
    // Predicated region
    $region58: #{tpu_custom_call.1} parent=1 // pred_check
      _
    $region59: #{tpu_custom_call.1} parent=1 // pred_check_branch
      %127 = sbr.rel (0) target = $region61
    $region60: #{tpu_custom_call.1} parent=1 // pred_region
      %128 = dma.done [#allocation12], 8192
    $region61: #{tpu_custom_call.1} parent=1 // pred_fallthru
      _
    // Predicated region
    $region62: #{tpu_custom_call.1} parent=1 // pred_check
      _
    $region63: #{tpu_custom_call.1} parent=1 // pred_check_branch
      %130 = sbr.rel (0) target = $region65
    $region64: #{tpu_custom_call.1} parent=1 // pred_region
      %131 = dma.done [#allocation12], 32
    $region65: #{tpu_custom_call.1} parent=1 // pred_fallthru
      _
    // Predicated region
    $region66: #{tpu_custom_call.1} parent=1 // pred_check
      _
    $region67: #{tpu_custom_call.1} parent=1 // pred_check_branch
      %133 = sbr.rel (0) target = $region69
    $region68: #{tpu_custom_call.1} parent=1 // pred_region
      %134 = dma.done [#allocation15], 32
    $region69: #{tpu_custom_call.1} parent=1 // pred_fallthru
      _
    %v136 = vld [vmem:[#allocation3] sm:$0xff]
    %v137 = vld [vmem:[#allocation3 + $0x8] sm:$0xff]
    %v138 = vld [vmem:[#allocation3 + $0x10] sm:$0xff]
    %v139 = vld [vmem:[#allocation3 + $0x18] sm:$0xf]
    %v140 = vld [vmem:[#allocation3 + $0x1c] sm:$0xff]
    %v141 = vld [vmem:[#allocation3 + $0x24] sm:$0xff]
    %v142 = vld [vmem:[#allocation3 + $0x2c] sm:$0xff]
    %v143 = vld [vmem:[#allocation3 + $0x34] sm:$0xf]
    %v144 = vld [vmem:[#allocation5] sm:$0xff]
    %v145 = vld [vmem:[#allocation5 + $0x8] sm:$0xff]
    %v146 = vld [vmem:[#allocation5 + $0x10] sm:$0xff]
    %v147 = vld [vmem:[#allocation5 + $0x18] sm:$0xff]
    %v148 = vld [vmem:[#allocation5 + $0x20] sm:$0xff]
    %v149 = vld [vmem:[#allocation5 + $0x28] sm:$0xff]
    %v150 = vld [vmem:[#allocation5 + $0x30] sm:$0xff]
    %v151 = vld [vmem:[#allocation5 + $0x38] sm:$0xff]
    %v152 = vld [vmem:[#allocation5 + $0x40] sm:$0xff]
    %v153 = vld [vmem:[#allocation5 + $0x48] sm:$0xff]
    %v154 = vld [vmem:[#allocation5 + $0x50] sm:$0xff]
    %v155 = vld [vmem:[#allocation5 + $0x58] sm:$0xff]
    %v156 = vld [vmem:[#allocation5 + $0x60] sm:$0xff]
    %v157 = vld [vmem:[#allocation5 + $0x68] sm:$0xff]
    %v158 = vld [vmem:[#allocation5 + $0x70] sm:$0xff]
    %v159 = vld [vmem:[#allocation5 + $0x78] sm:$0xff]
    %v160 = vld [vmem:[#allocation5 + $0x80] sm:$0xff]
    %v161 = vld [vmem:[#allocation5 + $0x88] sm:$0xff]
    %v162 = vld [vmem:[#allocation5 + $0x90] sm:$0xff]
    %v163 = vld [vmem:[#allocation5 + $0x98] sm:$0xff]
    %v164 = vld [vmem:[#allocation5 + $0xa0] sm:$0xff]
    %v165 = vld [vmem:[#allocation5 + $0xa8] sm:$0xff]
    %v166 = vld [vmem:[#allocation5 + $0xb0] sm:$0xff]
    %v167 = vld [vmem:[#allocation5 + $0xb8] sm:$0xff]
    %v168 = vld [vmem:[#allocation5 + $0xc0] sm:$0xff]
    %v169 = vld [vmem:[#allocation5 + $0xc8] sm:$0xff]
    %v170 = vld [vmem:[#allocation5 + $0xd0] sm:$0xff]
    %v171 = vld [vmem:[#allocation5 + $0xd8] sm:$0xff]
    %v172 = vld [vmem:[#allocation5 + $0xe0] sm:$0xff]
    %v173 = vld [vmem:[#allocation5 + $0xe8] sm:$0xff]
    %v174 = vld [vmem:[#allocation5 + $0xf0] sm:$0xff]
    %v175 = vld [vmem:[#allocation5 + $0xf8] sm:$0xff]
    %v176 = vld [vmem:[#allocation5 + $0x100] sm:$0xff]
    %v177 = vld [vmem:[#allocation5 + $0x108] sm:$0xff]
    %v178 = vld [vmem:[#allocation5 + $0x110] sm:$0xff]
    %v179 = vld [vmem:[#allocation5 + $0x118] sm:$0xff]
    %v180 = vld [vmem:[#allocation5 + $0x120] sm:$0xff]
    %v181 = vld [vmem:[#allocation5 + $0x128] sm:$0xff]
    %v182 = vld [vmem:[#allocation5 + $0x130] sm:$0xff]
    %v183 = vld [vmem:[#allocation5 + $0x138] sm:$0xff]
    %v184 = vld [vmem:[#allocation5 + $0x140] sm:$0xff]
    %v185 = vld [vmem:[#allocation5 + $0x148] sm:$0xff]
    %v186 = vld [vmem:[#allocation5 + $0x150] sm:$0xff]
    %v187 = vld [vmem:[#allocation5 + $0x158] sm:$0xff]
    %v188 = vld [vmem:[#allocation5 + $0x160] sm:$0xff]
    %v189 = vld [vmem:[#allocation5 + $0x168] sm:$0xff]
    %v190 = vld [vmem:[#allocation5 + $0x170] sm:$0xff]
    %v191 = vld [vmem:[#allocation5 + $0x178] sm:$0xff]
    %v192 = vld [vmem:[#allocation5 + $0x180] sm:$0xff]
    %v193 = vld [vmem:[#allocation5 + $0x188] sm:$0xff]
    %v194 = vld [vmem:[#allocation5 + $0x190] sm:$0xff]
    %v195 = vld [vmem:[#allocation5 + $0x198] sm:$0xff]
    %v196 = vld [vmem:[#allocation5 + $0x1a0] sm:$0xff]
    %v197 = vld [vmem:[#allocation5 + $0x1a8] sm:$0xff]
    %v198 = vld [vmem:[#allocation5 + $0x1b0] sm:$0xff]
    %v199 = vld [vmem:[#allocation5 + $0x1b8] sm:$0xff]
    %v200 = vld [vmem:[#allocation5 + $0x1c0] sm:$0xff]
    %v201 = vld [vmem:[#allocation5 + $0x1c8] sm:$0xff]
    %v202 = vld [vmem:[#allocation5 + $0x1d0] sm:$0xff]
    %v203 = vld [vmem:[#allocation5 + $0x1d8] sm:$0xff]
    %v204 = vld [vmem:[#allocation5 + $0x1e0] sm:$0xff]
    %v205 = vld [vmem:[#allocation5 + $0x1e8] sm:$0xff]
    %v206 = vld [vmem:[#allocation5 + $0x1f0] sm:$0xff]
    %v207 = vld [vmem:[#allocation5 + $0x1f8] sm:$0xff]
    %v208 = vld [vmem:[#allocation5 + $0x200] sm:$0xff]
    %v209 = vld [vmem:[#allocation5 + $0x208] sm:$0xff]
    %v210 = vld [vmem:[#allocation5 + $0x210] sm:$0xff]
    %v211 = vld [vmem:[#allocation5 + $0x218] sm:$0xff]
    %v212 = vld [vmem:[#allocation5 + $0x220] sm:$0xff]
    %v213 = vld [vmem:[#allocation5 + $0x228] sm:$0xff]
    %v214 = vld [vmem:[#allocation5 + $0x230] sm:$0xff]
    %v215 = vld [vmem:[#allocation5 + $0x238] sm:$0xff]
    %v216 = vld [vmem:[#allocation5 + $0x240] sm:$0xff]
    %v217 = vld [vmem:[#allocation5 + $0x248] sm:$0xff]
    %v218 = vld [vmem:[#allocation5 + $0x250] sm:$0xff]
    %v219 = vld [vmem:[#allocation5 + $0x258] sm:$0xff]
    %v220 = vld [vmem:[#allocation5 + $0x260] sm:$0xff]
    %v221 = vld [vmem:[#allocation5 + $0x268] sm:$0xff]
    %v222 = vld [vmem:[#allocation5 + $0x270] sm:$0xff]
    %v223 = vld [vmem:[#allocation5 + $0x278] sm:$0xff]
    %v224 = vld [vmem:[#allocation5 + $0x280] sm:$0xff]
    %v225 = vld [vmem:[#allocation5 + $0x288] sm:$0xff]
    %v226 = vld [vmem:[#allocation5 + $0x290] sm:$0xff]
    %v227 = vld [vmem:[#allocation5 + $0x298] sm:$0xff]
    %v228 = vld [vmem:[#allocation5 + $0x2a0] sm:$0xff]
    %v229 = vld [vmem:[#allocation5 + $0x2a8] sm:$0xff]
    %v230 = vld [vmem:[#allocation5 + $0x2b0] sm:$0xff]
    %v231 = vld [vmem:[#allocation5 + $0x2b8] sm:$0xff]
    %v232 = vld [vmem:[#allocation5 + $0x2c0] sm:$0xff]
    %v233 = vld [vmem:[#allocation5 + $0x2c8] sm:$0xff]
    %v234 = vld [vmem:[#allocation5 + $0x2d0] sm:$0xff]
    %v235 = vld [vmem:[#allocation5 + $0x2d8] sm:$0xff]
    %v236 = vld [vmem:[#allocation5 + $0x2e0] sm:$0xff]
    %v237 = vld [vmem:[#allocation5 + $0x2e8] sm:$0xff]
    %v238 = vld [vmem:[#allocation5 + $0x2f0] sm:$0xff]
    %v239 = vld [vmem:[#allocation5 + $0x2f8] sm:$0xff]
    %v240 = vld [vmem:[#allocation5 + $0x300] sm:$0xff]
    %v241 = vld [vmem:[#allocation5 + $0x308] sm:$0xff]
    %v242 = vld [vmem:[#allocation5 + $0x310] sm:$0xff]
    %v243 = vld [vmem:[#allocation5 + $0x318] sm:$0xff]
    %v244 = vld [vmem:[#allocation5 + $0x320] sm:$0xff]
    %v245 = vld [vmem:[#allocation5 + $0x328] sm:$0xff]
    %v246 = vld [vmem:[#allocation5 + $0x330] sm:$0xff]
    %v247 = vld [vmem:[#allocation5 + $0x338] sm:$0xff]
    %v248 = vld [vmem:[#allocation5 + $0x340] sm:$0xff]
    %v249 = vld [vmem:[#allocation5 + $0x348] sm:$0xff]
    %v250 = vld [vmem:[#allocation5 + $0x350] sm:$0xff]
    %v251 = vld [vmem:[#allocation5 + $0x358] sm:$0xff]
    %v252 = vld [vmem:[#allocation5 + $0x360] sm:$0xff]
    %v253 = vld [vmem:[#allocation5 + $0x368] sm:$0xff]
    %v254 = vld [vmem:[#allocation5 + $0x370] sm:$0xff]
    %v255 = vld [vmem:[#allocation5 + $0x378] sm:$0xff]
    %v256 = vld [vmem:[#allocation5 + $0x380] sm:$0xff]
    %v257 = vld [vmem:[#allocation5 + $0x388] sm:$0xff]
    %v258 = vld [vmem:[#allocation5 + $0x390] sm:$0xff]
    %v259 = vld [vmem:[#allocation5 + $0x398] sm:$0xff]
    %v260 = vld [vmem:[#allocation5 + $0x3a0] sm:$0xff]
    %v261 = vld [vmem:[#allocation5 + $0x3a8] sm:$0xff]
    %v262 = vld [vmem:[#allocation5 + $0x3b0] sm:$0xff]
    %v263 = vld [vmem:[#allocation5 + $0x3b8] sm:$0xff]
    %v264 = vld [vmem:[#allocation5 + $0x3c0] sm:$0xff]
    %v265 = vld [vmem:[#allocation5 + $0x3c8] sm:$0xff]
    %v266 = vld [vmem:[#allocation5 + $0x3d0] sm:$0xff]
    %v267 = vld [vmem:[#allocation5 + $0x3d8] sm:$0xff]
    %v268 = vld [vmem:[#allocation5 + $0x3e0] sm:$0xff]
    %v269 = vld [vmem:[#allocation5 + $0x3e8] sm:$0xff]
    %v270 = vld [vmem:[#allocation5 + $0x3f0] sm:$0xff]
    %v271 = vld [vmem:[#allocation5 + $0x3f8] sm:$0xff]
    %v272 = vld [vmem:[#allocation5 + $0x400] sm:$0xff]
    %v273 = vld [vmem:[#allocation5 + $0x408] sm:$0xff]
    %v274 = vld [vmem:[#allocation5 + $0x410] sm:$0xff]
    %v275 = vld [vmem:[#allocation5 + $0x418] sm:$0xff]
    %v276 = vld [vmem:[#allocation5 + $0x420] sm:$0xff]
    %v277 = vld [vmem:[#allocation5 + $0x428] sm:$0xff]
    %v278 = vld [vmem:[#allocation5 + $0x430] sm:$0xff]
    %v279 = vld [vmem:[#allocation5 + $0x438] sm:$0xff]
    %v280 = vld [vmem:[#allocation5 + $0x440] sm:$0xff]
    %v281 = vld [vmem:[#allocation5 + $0x448] sm:$0xff]
    %v282 = vld [vmem:[#allocation5 + $0x450] sm:$0xff]
    %v283 = vld [vmem:[#allocation5 + $0x458] sm:$0xff]
    %v284 = vld [vmem:[#allocation5 + $0x460] sm:$0xff]
    %v285 = vld [vmem:[#allocation5 + $0x468] sm:$0xff]
    %v286 = vld [vmem:[#allocation5 + $0x470] sm:$0xff]
    %v287 = vld [vmem:[#allocation5 + $0x478] sm:$0xff]
    %v288 = vld [vmem:[#allocation5 + $0x480] sm:$0xff]
    %v289 = vld [vmem:[#allocation5 + $0x488] sm:$0xff]
    %v290 = vld [vmem:[#allocation5 + $0x490] sm:$0xff]
    %v291 = vld [vmem:[#allocation5 + $0x498] sm:$0xff]
    %v292 = vld [vmem:[#allocation5 + $0x4a0] sm:$0xff]
    %v293 = vld [vmem:[#allocation5 + $0x4a8] sm:$0xff]
    %v294 = vld [vmem:[#allocation5 + $0x4b0] sm:$0xff]
    %v295 = vld [vmem:[#allocation5 + $0x4b8] sm:$0xff]
    %v296 = vld [vmem:[#allocation5 + $0x4c0] sm:$0xff]
    %v297 = vld [vmem:[#allocation5 + $0x4c8] sm:$0xff]
    %v298 = vld [vmem:[#allocation5 + $0x4d0] sm:$0xff]
    %v299 = vld [vmem:[#allocation5 + $0x4d8] sm:$0xff]
    %v300 = vld [vmem:[#allocation5 + $0x4e0] sm:$0xff]
    %v301 = vld [vmem:[#allocation5 + $0x4e8] sm:$0xff]
    %v302 = vld [vmem:[#allocation5 + $0x4f0] sm:$0xff]
    %v303 = vld [vmem:[#allocation5 + $0x4f8] sm:$0xff]
    %v304 = vld [vmem:[#allocation5 + $0x500] sm:$0xff]
    %v305 = vld [vmem:[#allocation5 + $0x508] sm:$0xff]
    %v306 = vld [vmem:[#allocation5 + $0x510] sm:$0xff]
    %v307 = vld [vmem:[#allocation5 + $0x518] sm:$0xff]
    %v308 = vld [vmem:[#allocation5 + $0x520] sm:$0xff]
    %v309 = vld [vmem:[#allocation5 + $0x528] sm:$0xff]
    %v310 = vld [vmem:[#allocation5 + $0x530] sm:$0xff]
    %v311 = vld [vmem:[#allocation5 + $0x538] sm:$0xff]
    %v312 = vld [vmem:[#allocation5 + $0x540] sm:$0xff]
    %v313 = vld [vmem:[#allocation5 + $0x548] sm:$0xff]
    %v314 = vld [vmem:[#allocation5 + $0x550] sm:$0xff]
    %v315 = vld [vmem:[#allocation5 + $0x558] sm:$0xff]
    %v316 = vld [vmem:[#allocation5 + $0x560] sm:$0xff]
    %v317 = vld [vmem:[#allocation5 + $0x568] sm:$0xff]
    %v318 = vld [vmem:[#allocation5 + $0x570] sm:$0xff]
    %v319 = vld [vmem:[#allocation5 + $0x578] sm:$0xff]
    %v320 = vld [vmem:[#allocation5 + $0x580] sm:$0xff]
    %v321 = vld [vmem:[#allocation5 + $0x588] sm:$0xff]
    %v322 = vld [vmem:[#allocation5 + $0x590] sm:$0xff]
    %v323 = vld [vmem:[#allocation5 + $0x598] sm:$0xff]
    %v324 = vld [vmem:[#allocation5 + $0x5a0] sm:$0xff]
    %v325 = vld [vmem:[#allocation5 + $0x5a8] sm:$0xff]
    %v326 = vld [vmem:[#allocation5 + $0x5b0] sm:$0xff]
    %v327 = vld [vmem:[#allocation5 + $0x5b8] sm:$0xff]
    %v328 = vld [vmem:[#allocation5 + $0x5c0] sm:$0xff]
    %v329 = vld [vmem:[#allocation5 + $0x5c8] sm:$0xff]
    %v330 = vld [vmem:[#allocation5 + $0x5d0] sm:$0xff]
    %v331 = vld [vmem:[#allocation5 + $0x5d8] sm:$0xff]
    %v332 = vld [vmem:[#allocation5 + $0x5e0] sm:$0xff]
    %v333 = vld [vmem:[#allocation5 + $0x5e8] sm:$0xff]
    %v334 = vld [vmem:[#allocation5 + $0x5f0] sm:$0xff]
    %v335 = vld [vmem:[#allocation5 + $0x5f8] sm:$0xff]
    %v336 = vld [vmem:[#allocation5 + $0x600] sm:$0xff]
    %v337 = vld [vmem:[#allocation5 + $0x608] sm:$0xff]
    %v338 = vld [vmem:[#allocation5 + $0x610] sm:$0xff]
    %v339 = vld [vmem:[#allocation5 + $0x618] sm:$0xff]
    %v340 = vld [vmem:[#allocation5 + $0x620] sm:$0xff]
    %v341 = vld [vmem:[#allocation5 + $0x628] sm:$0xff]
    %v342 = vld [vmem:[#allocation5 + $0x630] sm:$0xff]
    %v343 = vld [vmem:[#allocation5 + $0x638] sm:$0xff]
    %v344 = vld [vmem:[#allocation5 + $0x640] sm:$0xff]
    %v345 = vld [vmem:[#allocation5 + $0x648] sm:$0xff]
    %v346 = vld [vmem:[#allocation5 + $0x650] sm:$0xff]
    %v347 = vld [vmem:[#allocation5 + $0x658] sm:$0xff]
    %v348 = vld [vmem:[#allocation5 + $0x660] sm:$0xff]
    %v349 = vld [vmem:[#allocation5 + $0x668] sm:$0xff]
    %v350 = vld [vmem:[#allocation5 + $0x670] sm:$0xff]
    %v351 = vld [vmem:[#allocation5 + $0x678] sm:$0xff]
    %v352 = vld [vmem:[#allocation5 + $0x680] sm:$0xff]
    %v353 = vld [vmem:[#allocation5 + $0x688] sm:$0xff]
    %v354 = vld [vmem:[#allocation5 + $0x690] sm:$0xff]
    %v355 = vld [vmem:[#allocation5 + $0x698] sm:$0xff]
    %v356 = vld [vmem:[#allocation5 + $0x6a0] sm:$0xff]
    %v357 = vld [vmem:[#allocation5 + $0x6a8] sm:$0xff]
    %v358 = vld [vmem:[#allocation5 + $0x6b0] sm:$0xff]
    %v359 = vld [vmem:[#allocation5 + $0x6b8] sm:$0xff]
    %v360 = vld [vmem:[#allocation5 + $0x6c0] sm:$0xff]
    %v361 = vld [vmem:[#allocation5 + $0x6c8] sm:$0xff]
    %v362 = vld [vmem:[#allocation5 + $0x6d0] sm:$0xff]
    %v363 = vld [vmem:[#allocation5 + $0x6d8] sm:$0xff]
    %v364 = vld [vmem:[#allocation5 + $0x6e0] sm:$0xff]
    %v365 = vld [vmem:[#allocation5 + $0x6e8] sm:$0xff]
    %v366 = vld [vmem:[#allocation5 + $0x6f0] sm:$0xff]
    %v367 = vld [vmem:[#allocation5 + $0x6f8] sm:$0xff]
    %v368 = vld [vmem:[#allocation5 + $0x700] sm:$0xff]
    %v369 = vld [vmem:[#allocation5 + $0x708] sm:$0xff]
    %v370 = vld [vmem:[#allocation5 + $0x710] sm:$0xff]
    %v371 = vld [vmem:[#allocation5 + $0x718] sm:$0xff]
    %v372 = vld [vmem:[#allocation5 + $0x720] sm:$0xff]
    %v373 = vld [vmem:[#allocation5 + $0x728] sm:$0xff]
    %v374 = vld [vmem:[#allocation5 + $0x730] sm:$0xff]
    %v375 = vld [vmem:[#allocation5 + $0x738] sm:$0xff]
    %v376 = vld [vmem:[#allocation5 + $0x740] sm:$0xff]
    %v377 = vld [vmem:[#allocation5 + $0x748] sm:$0xff]
    %v378 = vld [vmem:[#allocation5 + $0x750] sm:$0xff]
    %v379 = vld [vmem:[#allocation5 + $0x758] sm:$0xff]
    %v380 = vld [vmem:[#allocation5 + $0x760] sm:$0xff]
    %v381 = vld [vmem:[#allocation5 + $0x768] sm:$0xff]
    %v382 = vld [vmem:[#allocation5 + $0x770] sm:$0xff]
    %v383 = vld [vmem:[#allocation5 + $0x778] sm:$0xff]
    %v384 = vld [vmem:[#allocation5 + $0x780] sm:$0xff]
    %v385 = vld [vmem:[#allocation5 + $0x788] sm:$0xff]
    %v386 = vld [vmem:[#allocation5 + $0x790] sm:$0xff]
    %v387 = vld [vmem:[#allocation5 + $0x798] sm:$0xff]
    %v388 = vld [vmem:[#allocation5 + $0x7a0] sm:$0xff]
    %v389 = vld [vmem:[#allocation5 + $0x7a8] sm:$0xff]
    %v390 = vld [vmem:[#allocation5 + $0x7b0] sm:$0xff]
    %v391 = vld [vmem:[#allocation5 + $0x7b8] sm:$0xff]
    %v392 = vld [vmem:[#allocation5 + $0x7c0] sm:$0xff]
    %v393 = vld [vmem:[#allocation5 + $0x7c8] sm:$0xff]
    %v394 = vld [vmem:[#allocation5 + $0x7d0] sm:$0xff]
    %v395 = vld [vmem:[#allocation5 + $0x7d8] sm:$0xff]
    %v396 = vld [vmem:[#allocation5 + $0x7e0] sm:$0xff]
    %v397 = vld [vmem:[#allocation5 + $0x7e8] sm:$0xff]
    %v398 = vld [vmem:[#allocation5 + $0x7f0] sm:$0xff]
    %v399 = vld [vmem:[#allocation5 + $0x7f8] sm:$0xff]
    %v400 = vld [vmem:[#allocation5 + $0x800] sm:$0xff]
    %v401 = vld [vmem:[#allocation5 + $0x808] sm:$0xff]
    %v402 = vld [vmem:[#allocation5 + $0x810] sm:$0xff]
    %v403 = vld [vmem:[#allocation5 + $0x818] sm:$0xff]
    %v404 = vld [vmem:[#allocation5 + $0x820] sm:$0xff]
    %v405 = vld [vmem:[#allocation5 + $0x828] sm:$0xff]
    %v406 = vld [vmem:[#allocation5 + $0x830] sm:$0xff]
    %v407 = vld [vmem:[#allocation5 + $0x838] sm:$0xff]
    %v408 = vld [vmem:[#allocation5 + $0x840] sm:$0xff]
    %v409 = vld [vmem:[#allocation5 + $0x848] sm:$0xff]
    %v410 = vld [vmem:[#allocation5 + $0x850] sm:$0xff]
    %v411 = vld [vmem:[#allocation5 + $0x858] sm:$0xff]
    %v412 = vld [vmem:[#allocation5 + $0x860] sm:$0xff]
    %v413 = vld [vmem:[#allocation5 + $0x868] sm:$0xff]
    %v414 = vld [vmem:[#allocation5 + $0x870] sm:$0xff]
    %v415 = vld [vmem:[#allocation5 + $0x878] sm:$0xff]
    %v416 = vld [vmem:[#allocation5 + $0x880] sm:$0xff]
    %v417 = vld [vmem:[#allocation5 + $0x888] sm:$0xff]
    %v418 = vld [vmem:[#allocation5 + $0x890] sm:$0xff]
    %v419 = vld [vmem:[#allocation5 + $0x898] sm:$0xff]
    %v420 = vld [vmem:[#allocation5 + $0x8a0] sm:$0xff]
    %v421 = vld [vmem:[#allocation5 + $0x8a8] sm:$0xff]
    %v422 = vld [vmem:[#allocation5 + $0x8b0] sm:$0xff]
    %v423 = vld [vmem:[#allocation5 + $0x8b8] sm:$0xff]
    %v424 = vld [vmem:[#allocation5 + $0x8c0] sm:$0xff]
    %v425 = vld [vmem:[#allocation5 + $0x8c8] sm:$0xff]
    %v426 = vld [vmem:[#allocation5 + $0x8d0] sm:$0xff]
    %v427 = vld [vmem:[#allocation5 + $0x8d8] sm:$0xff]
    %v428 = vld [vmem:[#allocation5 + $0x8e0] sm:$0xff]
    %v429 = vld [vmem:[#allocation5 + $0x8e8] sm:$0xff]
    %v430 = vld [vmem:[#allocation5 + $0x8f0] sm:$0xff]
    %v431 = vld [vmem:[#allocation5 + $0x8f8] sm:$0xff]
    %v432 = vld [vmem:[#allocation5 + $0x900] sm:$0xff]
    %v433 = vld [vmem:[#allocation5 + $0x908] sm:$0xff]
    %v434 = vld [vmem:[#allocation5 + $0x910] sm:$0xff]
    %v435 = vld [vmem:[#allocation5 + $0x918] sm:$0xff]
    %v436 = vld [vmem:[#allocation5 + $0x920] sm:$0xff]
    %v437 = vld [vmem:[#allocation5 + $0x928] sm:$0xff]
    %v438 = vld [vmem:[#allocation5 + $0x930] sm:$0xff]
    %v439 = vld [vmem:[#allocation5 + $0x938] sm:$0xff]
    %v440 = vld [vmem:[#allocation5 + $0x940] sm:$0xff]
    %v441 = vld [vmem:[#allocation5 + $0x948] sm:$0xff]
    %v442 = vld [vmem:[#allocation5 + $0x950] sm:$0xff]
    %v443 = vld [vmem:[#allocation5 + $0x958] sm:$0xff]
    %v444 = vld [vmem:[#allocation5 + $0x960] sm:$0xff]
    %v445 = vld [vmem:[#allocation5 + $0x968] sm:$0xff]
    %v446 = vld [vmem:[#allocation5 + $0x970] sm:$0xff]
    %v447 = vld [vmem:[#allocation5 + $0x978] sm:$0xff]
    %v448 = vld [vmem:[#allocation5 + $0x980] sm:$0xff]
    %v449 = vld [vmem:[#allocation5 + $0x988] sm:$0xff]
    %v450 = vld [vmem:[#allocation5 + $0x990] sm:$0xff]
    %v451 = vld [vmem:[#allocation5 + $0x998] sm:$0xff]
    %v452 = vld [vmem:[#allocation5 + $0x9a0] sm:$0xff]
    %v453 = vld [vmem:[#allocation5 + $0x9a8] sm:$0xff]
    %v454 = vld [vmem:[#allocation5 + $0x9b0] sm:$0xff]
    %v455 = vld [vmem:[#allocation5 + $0x9b8] sm:$0xff]
    %v456 = vld [vmem:[#allocation5 + $0x9c0] sm:$0xff]
    %v457 = vld [vmem:[#allocation5 + $0x9c8] sm:$0xff]
    %v458 = vld [vmem:[#allocation5 + $0x9d0] sm:$0xff]
    %v459 = vld [vmem:[#allocation5 + $0x9d8] sm:$0xff]
    %v460 = vld [vmem:[#allocation5 + $0x9e0] sm:$0xff]
    %v461 = vld [vmem:[#allocation5 + $0x9e8] sm:$0xff]
    %v462 = vld [vmem:[#allocation5 + $0x9f0] sm:$0xff]
    %v463 = vld [vmem:[#allocation5 + $0x9f8] sm:$0xff]
    %v464 = vld [vmem:[#allocation5 + $0xa00] sm:$0xff]
    %v465 = vld [vmem:[#allocation5 + $0xa08] sm:$0xff]
    %v466 = vld [vmem:[#allocation5 + $0xa10] sm:$0xff]
    %v467 = vld [vmem:[#allocation5 + $0xa18] sm:$0xff]
    %v468 = vld [vmem:[#allocation5 + $0xa20] sm:$0xff]
    %v469 = vld [vmem:[#allocation5 + $0xa28] sm:$0xff]
    %v470 = vld [vmem:[#allocation5 + $0xa30] sm:$0xff]
    %v471 = vld [vmem:[#allocation5 + $0xa38] sm:$0xff]
    %v472 = vld [vmem:[#allocation5 + $0xa40] sm:$0xff]
    %v473 = vld [vmem:[#allocation5 + $0xa48] sm:$0xff]
    %v474 = vld [vmem:[#allocation5 + $0xa50] sm:$0xff]
    %v475 = vld [vmem:[#allocation5 + $0xa58] sm:$0xff]
    %v476 = vld [vmem:[#allocation5 + $0xa60] sm:$0xff]
    %v477 = vld [vmem:[#allocation5 + $0xa68] sm:$0xff]
    %v478 = vld [vmem:[#allocation5 + $0xa70] sm:$0xff]
    %v479 = vld [vmem:[#allocation5 + $0xa78] sm:$0xff]
    %v480 = vld [vmem:[#allocation5 + $0xa80] sm:$0xff]
    %v481 = vld [vmem:[#allocation5 + $0xa88] sm:$0xff]
    %v482 = vld [vmem:[#allocation5 + $0xa90] sm:$0xff]
    %v483 = vld [vmem:[#allocation5 + $0xa98] sm:$0xff]
    %v484 = vld [vmem:[#allocation5 + $0xaa0] sm:$0xff]
    %v485 = vld [vmem:[#allocation5 + $0xaa8] sm:$0xff]
    %v486 = vld [vmem:[#allocation5 + $0xab0] sm:$0xff]
    %v487 = vld [vmem:[#allocation5 + $0xab8] sm:$0xff]
    %v488 = vld [vmem:[#allocation5 + $0xac0] sm:$0xff]
    %v489 = vld [vmem:[#allocation5 + $0xac8] sm:$0xff]
    %v490 = vld [vmem:[#allocation5 + $0xad0] sm:$0xff]
    %v491 = vld [vmem:[#allocation5 + $0xad8] sm:$0xff]
    %v492 = vld [vmem:[#allocation5 + $0xae0] sm:$0xff]
    %v493 = vld [vmem:[#allocation5 + $0xae8] sm:$0xff]
    %v494 = vld [vmem:[#allocation5 + $0xaf0] sm:$0xff]
    %v495 = vld [vmem:[#allocation5 + $0xaf8] sm:$0xff]
    %v496 = vld [vmem:[#allocation5 + $0xb00] sm:$0xff]
    %v497 = vld [vmem:[#allocation5 + $0xb08] sm:$0xff]
    %v498 = vld [vmem:[#allocation5 + $0xb10] sm:$0xff]
    %v499 = vld [vmem:[#allocation5 + $0xb18] sm:$0xff]
    %v500 = vld [vmem:[#allocation5 + $0xb20] sm:$0xff]
    %v501 = vld [vmem:[#allocation5 + $0xb28] sm:$0xff]
    %v502 = vld [vmem:[#allocation5 + $0xb30] sm:$0xff]
    %v503 = vld [vmem:[#allocation5 + $0xb38] sm:$0xff]
    %v504 = vld [vmem:[#allocation5 + $0xb40] sm:$0xff]
    %v505 = vld [vmem:[#allocation5 + $0xb48] sm:$0xff]
    %v506 = vld [vmem:[#allocation5 + $0xb50] sm:$0xff]
    %v507 = vld [vmem:[#allocation5 + $0xb58] sm:$0xff]
    %v508 = vld [vmem:[#allocation5 + $0xb60] sm:$0xff]
    %v509 = vld [vmem:[#allocation5 + $0xb68] sm:$0xff]
    %v510 = vld [vmem:[#allocation5 + $0xb70] sm:$0xff]
    %v511 = vld [vmem:[#allocation5 + $0xb78] sm:$0xff]
    %v512 = vld [vmem:[#allocation5 + $0xb80] sm:$0xff]
    %v513 = vld [vmem:[#allocation5 + $0xb88] sm:$0xff]
    %v514 = vld [vmem:[#allocation5 + $0xb90] sm:$0xff]
    %v515 = vld [vmem:[#allocation5 + $0xb98] sm:$0xff]
    %v516 = vld [vmem:[#allocation5 + $0xba0] sm:$0xff]
    %v517 = vld [vmem:[#allocation5 + $0xba8] sm:$0xff]
    %v518 = vld [vmem:[#allocation5 + $0xbb0] sm:$0xff]
    %v519 = vld [vmem:[#allocation5 + $0xbb8] sm:$0xff]
    %v520 = vld [vmem:[#allocation5 + $0xbc0] sm:$0xff]
    %v521 = vld [vmem:[#allocation5 + $0xbc8] sm:$0xff]
    %v522 = vld [vmem:[#allocation5 + $0xbd0] sm:$0xff]
    %v523 = vld [vmem:[#allocation5 + $0xbd8] sm:$0xff]
    %v524 = vld [vmem:[#allocation5 + $0xbe0] sm:$0xff]
    %v525 = vld [vmem:[#allocation5 + $0xbe8] sm:$0xff]
    %v526 = vld [vmem:[#allocation5 + $0xbf0] sm:$0xff]
    %v527 = vld [vmem:[#allocation5 + $0xbf8] sm:$0xff]
    %v528 = vld [vmem:[#allocation5 + $0xc00] sm:$0xff]
    %v529 = vld [vmem:[#allocation5 + $0xc08] sm:$0xff]
    %v530 = vld [vmem:[#allocation5 + $0xc10] sm:$0xff]
    %v531 = vld [vmem:[#allocation5 + $0xc18] sm:$0xff]
    %v532 = vld [vmem:[#allocation5 + $0xc20] sm:$0xff]
    %v533 = vld [vmem:[#allocation5 + $0xc28] sm:$0xff]
    %v534 = vld [vmem:[#allocation5 + $0xc30] sm:$0xff]
    %v535 = vld [vmem:[#allocation5 + $0xc38] sm:$0xff]
    %v536 = vld [vmem:[#allocation7] sm:$0xff]
    %v538 = vlaneseq
    %v539 = vshrl.u32 %v538, 7
    %v540 = vsub.s32 0, %v539
    %v541 = vrot.slane %v536, %v540
    %v542 = vlaneseq
    %v543 = vshrl.u32 %v542, 7
    %v544 = vsub.s32 1, %v543
    %v545 = vrot.slane %v536, %v544
    %v546 = vlaneseq
    %v547 = vshrl.u32 %v546, 7
    %v548 = vsub.s32 2, %v547
    %v549 = vrot.slane %v536, %v548
    %v550 = vlaneseq
    %v551 = vshrl.u32 %v550, 7
    %v552 = vsub.s32 3, %v551
    %v553 = vrot.slane %v536, %v552
    %v554 = vlaneseq
    %v555 = vshrl.u32 %v554, 7
    %v556 = vsub.s32 4, %v555
    %v557 = vrot.slane %v536, %v556
    %v558 = vlaneseq
    %v559 = vshrl.u32 %v558, 7
    %v560 = vsub.s32 5, %v559
    %v561 = vrot.slane %v536, %v560
    %v562 = vlaneseq
    %v563 = vshrl.u32 %v562, 7
    %v564 = vsub.s32 6, %v563
    %v565 = vrot.slane %v536, %v564
    %v566 = vlaneseq
    %v567 = vshrl.u32 %v566, 7
    %v568 = vsub.s32 7, %v567
    %v569 = vrot.slane %v536, %v568
    %v586 = vunpack.c.l.b16 %v136
    %v587 = vunpack.c.h.b16 %v136
    %v588 = vunpack.c.l.b16 %v137
    %v589 = vunpack.c.h.b16 %v137
    %v590 = vunpack.c.l.b16 %v138
    %v591 = vunpack.c.h.b16 %v138
    %v592 = vunpack.c.l.b16 %v139
    %v593 = vunpack.c.l.b16 %v140
    %v594 = vunpack.c.h.b16 %v140
    %v595 = vunpack.c.l.b16 %v141
    %v596 = vunpack.c.h.b16 %v141
    %v597 = vunpack.c.l.b16 %v142
    %v598 = vunpack.c.h.b16 %v142
    %v599 = vunpack.c.l.b16 %v143
    %v600 = vpack.c.b16 %v593, %v586
    %v601 = vpack.c.b16 %v594, %v587
    %v602 = vpack.c.b16 %v595, %v588
    %v603 = vpack.c.b16 %v596, %v589
    %v604 = vpack.c.b16 %v597, %v590
    %v605 = vpack.c.b16 %v598, %v591
    %v606 = vpack.c.b16 %v599, %v592
    %v1005 = vunpack.c.l.b16 %v144
    %v1006 = vunpack.c.h.b16 %v144
    %v1007 = vunpack.c.l.b16 %v145
    %v1008 = vunpack.c.h.b16 %v145
    %v1009 = vunpack.c.l.b16 %v146
    %v1010 = vunpack.c.h.b16 %v146
    %v1011 = vunpack.c.l.b16 %v147
    %v1012 = vunpack.c.h.b16 %v147
    %v1013 = vunpack.c.l.b16 %v148
    %v1014 = vunpack.c.h.b16 %v148
    %v1015 = vunpack.c.l.b16 %v149
    %v1016 = vunpack.c.h.b16 %v149
    %v1017 = vunpack.c.l.b16 %v150
    %v1018 = vunpack.c.h.b16 %v150
    %v1019 = vunpack.c.l.b16 %v151
    %v1020 = vunpack.c.h.b16 %v151
    %v1021 = vunpack.c.l.b16 %v152
    %v1022 = vunpack.c.h.b16 %v152
    %v1023 = vunpack.c.l.b16 %v153
    %v1024 = vunpack.c.h.b16 %v153
    %v1025 = vunpack.c.l.b16 %v154
    %v1026 = vunpack.c.h.b16 %v154
    %v1027 = vunpack.c.l.b16 %v155
    %v1028 = vunpack.c.h.b16 %v155
    %v1029 = vunpack.c.l.b16 %v156
    %v1030 = vunpack.c.h.b16 %v156
    %v1031 = vunpack.c.l.b16 %v157
    %v1032 = vunpack.c.h.b16 %v157
    %v1033 = vunpack.c.l.b16 %v158
    %v1034 = vunpack.c.h.b16 %v158
    %v1035 = vunpack.c.l.b16 %v159
    %v1036 = vunpack.c.h.b16 %v159
    %v1037 = vunpack.c.l.b16 %v160
    %v1038 = vunpack.c.h.b16 %v160
    %v1039 = vunpack.c.l.b16 %v161
    %v1040 = vunpack.c.h.b16 %v161
    %v1041 = vunpack.c.l.b16 %v162
    %v1042 = vunpack.c.h.b16 %v162
    %v1043 = vunpack.c.l.b16 %v163
    %v1044 = vunpack.c.h.b16 %v163
    %v1045 = vunpack.c.l.b16 %v164
    %v1046 = vunpack.c.h.b16 %v164
    %v1047 = vunpack.c.l.b16 %v165
    %v1048 = vunpack.c.h.b16 %v165
    %v1049 = vunpack.c.l.b16 %v166
    %v1050 = vunpack.c.h.b16 %v166
    %v1051 = vunpack.c.l.b16 %v167
    %v1052 = vunpack.c.h.b16 %v167
    %v1053 = vunpack.c.l.b16 %v168
    %v1054 = vunpack.c.h.b16 %v168
    %v1055 = vunpack.c.l.b16 %v169
    %v1056 = vunpack.c.h.b16 %v169
    %v1057 = vunpack.c.l.b16 %v170
    %v1058 = vunpack.c.h.b16 %v170
    %v1059 = vunpack.c.l.b16 %v171
    %v1060 = vunpack.c.h.b16 %v171
    %v1061 = vunpack.c.l.b16 %v172
    %v1062 = vunpack.c.h.b16 %v172
    %v1063 = vunpack.c.l.b16 %v173
    %v1064 = vunpack.c.h.b16 %v173
    %v1065 = vunpack.c.l.b16 %v174
    %v1066 = vunpack.c.h.b16 %v174
    %v1067 = vunpack.c.l.b16 %v175
    %v1068 = vunpack.c.h.b16 %v175
    %v1069 = vunpack.c.l.b16 %v176
    %v1070 = vunpack.c.h.b16 %v176
    %v1071 = vunpack.c.l.b16 %v177
    %v1072 = vunpack.c.h.b16 %v177
    %v1073 = vunpack.c.l.b16 %v178
    %v1074 = vunpack.c.h.b16 %v178
    %v1075 = vunpack.c.l.b16 %v179
    %v1076 = vunpack.c.h.b16 %v179
    %v1077 = vunpack.c.l.b16 %v180
    %v1078 = vunpack.c.h.b16 %v180
    %v1079 = vunpack.c.l.b16 %v181
    %v1080 = vunpack.c.h.b16 %v181
    %v1081 = vunpack.c.l.b16 %v182
    %v1082 = vunpack.c.h.b16 %v182
    %v1083 = vunpack.c.l.b16 %v183
    %v1084 = vunpack.c.h.b16 %v183
    %v1085 = vunpack.c.l.b16 %v184
    %v1086 = vunpack.c.h.b16 %v184
    %v1087 = vunpack.c.l.b16 %v185
    %v1088 = vunpack.c.h.b16 %v185
    %v1089 = vunpack.c.l.b16 %v186
    %v1090 = vunpack.c.h.b16 %v186
    %v1091 = vunpack.c.l.b16 %v187
    %v1092 = vunpack.c.h.b16 %v187
    %v1093 = vunpack.c.l.b16 %v188
    %v1094 = vunpack.c.h.b16 %v188
    %v1095 = vunpack.c.l.b16 %v189
    %v1096 = vunpack.c.h.b16 %v189
    %v1097 = vunpack.c.l.b16 %v190
    %v1098 = vunpack.c.h.b16 %v190
    %v1099 = vunpack.c.l.b16 %v191
    %v1100 = vunpack.c.h.b16 %v191
    %v1101 = vunpack.c.l.b16 %v192
    %v1102 = vunpack.c.h.b16 %v192
    %v1103 = vunpack.c.l.b16 %v193
    %v1104 = vunpack.c.h.b16 %v193
    %v1105 = vunpack.c.l.b16 %v194
    %v1106 = vunpack.c.h.b16 %v194
    %v1107 = vunpack.c.l.b16 %v195
    %v1108 = vunpack.c.h.b16 %v195
    %v1109 = vunpack.c.l.b16 %v196
    %v1110 = vunpack.c.h.b16 %v196
    %v1111 = vunpack.c.l.b16 %v197
    %v1112 = vunpack.c.h.b16 %v197
    %v1113 = vunpack.c.l.b16 %v198
    %v1114 = vunpack.c.h.b16 %v198
    %v1115 = vunpack.c.l.b16 %v199
    %v1116 = vunpack.c.h.b16 %v199
    %v1117 = vunpack.c.l.b16 %v200
    %v1118 = vunpack.c.h.b16 %v200
    %v1119 = vunpack.c.l.b16 %v201
    %v1120 = vunpack.c.h.b16 %v201
    %v1121 = vunpack.c.l.b16 %v202
    %v1122 = vunpack.c.h.b16 %v202
    %v1123 = vunpack.c.l.b16 %v203
    %v1124 = vunpack.c.h.b16 %v203
    %v1125 = vunpack.c.l.b16 %v204
    %v1126 = vunpack.c.h.b16 %v204
    %v1127 = vunpack.c.l.b16 %v205
    %v1128 = vunpack.c.h.b16 %v205
    %v1129 = vunpack.c.l.b16 %v206
    %v1130 = vunpack.c.h.b16 %v206
    %v1131 = vunpack.c.l.b16 %v207
    %v1132 = vunpack.c.h.b16 %v207
    %v1133 = vunpack.c.l.b16 %v208
    %v1134 = vunpack.c.h.b16 %v208
    %v1135 = vunpack.c.l.b16 %v209
    %v1136 = vunpack.c.h.b16 %v209
    %v1137 = vunpack.c.l.b16 %v210
    %v1138 = vunpack.c.h.b16 %v210
    %v1139 = vunpack.c.l.b16 %v211
    %v1140 = vunpack.c.h.b16 %v211
    %v1141 = vunpack.c.l.b16 %v212
    %v1142 = vunpack.c.h.b16 %v212
    %v1143 = vunpack.c.l.b16 %v213
    %v1144 = vunpack.c.h.b16 %v213
    %v1145 = vunpack.c.l.b16 %v214
    %v1146 = vunpack.c.h.b16 %v214
    %v1147 = vunpack.c.l.b16 %v215
    %v1148 = vunpack.c.h.b16 %v215
    %v1149 = vunpack.c.l.b16 %v216
    %v1150 = vunpack.c.h.b16 %v216
    %v1151 = vunpack.c.l.b16 %v217
    %v1152 = vunpack.c.h.b16 %v217
    %v1153 = vunpack.c.l.b16 %v218
    %v1154 = vunpack.c.h.b16 %v218
    %v1155 = vunpack.c.l.b16 %v219
    %v1156 = vunpack.c.h.b16 %v219
    %v1157 = vunpack.c.l.b16 %v220
    %v1158 = vunpack.c.h.b16 %v220
    %v1159 = vunpack.c.l.b16 %v221
    %v1160 = vunpack.c.h.b16 %v221
    %v1161 = vunpack.c.l.b16 %v222
    %v1162 = vunpack.c.h.b16 %v222
    %v1163 = vunpack.c.l.b16 %v223
    %v1164 = vunpack.c.h.b16 %v223
    %v1165 = vunpack.c.l.b16 %v224
    %v1166 = vunpack.c.h.b16 %v224
    %v1167 = vunpack.c.l.b16 %v225
    %v1168 = vunpack.c.h.b16 %v225
    %v1169 = vunpack.c.l.b16 %v226
    %v1170 = vunpack.c.h.b16 %v226
    %v1171 = vunpack.c.l.b16 %v227
    %v1172 = vunpack.c.h.b16 %v227
    %v1173 = vunpack.c.l.b16 %v228
    %v1174 = vunpack.c.h.b16 %v228
    %v1175 = vunpack.c.l.b16 %v229
    %v1176 = vunpack.c.h.b16 %v229
    %v1177 = vunpack.c.l.b16 %v230
    %v1178 = vunpack.c.h.b16 %v230
    %v1179 = vunpack.c.l.b16 %v231
    %v1180 = vunpack.c.h.b16 %v231
    %v1181 = vunpack.c.l.b16 %v232
    %v1182 = vunpack.c.h.b16 %v232
    %v1183 = vunpack.c.l.b16 %v233
    %v1184 = vunpack.c.h.b16 %v233
    %v1185 = vunpack.c.l.b16 %v234
    %v1186 = vunpack.c.h.b16 %v234
    %v1187 = vunpack.c.l.b16 %v235
    %v1188 = vunpack.c.h.b16 %v235
    %v1189 = vunpack.c.l.b16 %v236
    %v1190 = vunpack.c.h.b16 %v236
    %v1191 = vunpack.c.l.b16 %v237
    %v1192 = vunpack.c.h.b16 %v237
    %v1193 = vunpack.c.l.b16 %v238
    %v1194 = vunpack.c.h.b16 %v238
    %v1195 = vunpack.c.l.b16 %v239
    %v1196 = vunpack.c.h.b16 %v239
    %v1197 = vunpack.c.l.b16 %v240
    %v1198 = vunpack.c.h.b16 %v240
    %v1199 = vunpack.c.l.b16 %v241
    %v1200 = vunpack.c.h.b16 %v241
    %v1201 = vunpack.c.l.b16 %v242
    %v1202 = vunpack.c.h.b16 %v242
    %v1203 = vunpack.c.l.b16 %v243
    %v1204 = vunpack.c.h.b16 %v243
    %v1205 = vunpack.c.l.b16 %v244
    %v1206 = vunpack.c.h.b16 %v244
    %v1207 = vunpack.c.l.b16 %v245
    %v1208 = vunpack.c.h.b16 %v245
    %v1209 = vunpack.c.l.b16 %v246
    %v1210 = vunpack.c.h.b16 %v246
    %v1211 = vunpack.c.l.b16 %v247
    %v1212 = vunpack.c.h.b16 %v247
    %v1213 = vunpack.c.l.b16 %v248
    %v1214 = vunpack.c.h.b16 %v248
    %v1215 = vunpack.c.l.b16 %v249
    %v1216 = vunpack.c.h.b16 %v249
    %v1217 = vunpack.c.l.b16 %v250
    %v1218 = vunpack.c.h.b16 %v250
    %v1219 = vunpack.c.l.b16 %v251
    %v1220 = vunpack.c.h.b16 %v251
    %v1221 = vunpack.c.l.b16 %v252
    %v1222 = vunpack.c.h.b16 %v252
    %v1223 = vunpack.c.l.b16 %v253
    %v1224 = vunpack.c.h.b16 %v253
    %v1225 = vunpack.c.l.b16 %v254
    %v1226 = vunpack.c.h.b16 %v254
    %v1227 = vunpack.c.l.b16 %v255
    %v1228 = vunpack.c.h.b16 %v255
    %v1229 = vunpack.c.l.b16 %v256
    %v1230 = vunpack.c.h.b16 %v256
    %v1231 = vunpack.c.l.b16 %v257
    %v1232 = vunpack.c.h.b16 %v257
    %v1233 = vunpack.c.l.b16 %v258
    %v1234 = vunpack.c.h.b16 %v258
    %v1235 = vunpack.c.l.b16 %v259
    %v1236 = vunpack.c.h.b16 %v259
    %v1237 = vunpack.c.l.b16 %v260
    %v1238 = vunpack.c.h.b16 %v260
    %v1239 = vunpack.c.l.b16 %v261
    %v1240 = vunpack.c.h.b16 %v261
    %v1241 = vunpack.c.l.b16 %v262
    %v1242 = vunpack.c.h.b16 %v262
    %v1243 = vunpack.c.l.b16 %v263
    %v1244 = vunpack.c.h.b16 %v263
    %v1245 = vunpack.c.l.b16 %v264
    %v1246 = vunpack.c.h.b16 %v264
    %v1247 = vunpack.c.l.b16 %v265
    %v1248 = vunpack.c.h.b16 %v265
    %v1249 = vunpack.c.l.b16 %v266
    %v1250 = vunpack.c.h.b16 %v266
    %v1251 = vunpack.c.l.b16 %v267
    %v1252 = vunpack.c.h.b16 %v267
    %v1253 = vunpack.c.l.b16 %v268
    %v1254 = vunpack.c.h.b16 %v268
    %v1255 = vunpack.c.l.b16 %v269
    %v1256 = vunpack.c.h.b16 %v269
    %v1257 = vunpack.c.l.b16 %v270
    %v1258 = vunpack.c.h.b16 %v270
    %v1259 = vunpack.c.l.b16 %v271
    %v1260 = vunpack.c.h.b16 %v271
    %v1261 = vunpack.c.l.b16 %v272
    %v1262 = vunpack.c.h.b16 %v272
    %v1263 = vunpack.c.l.b16 %v273
    %v1264 = vunpack.c.h.b16 %v273
    %v1265 = vunpack.c.l.b16 %v274
    %v1266 = vunpack.c.h.b16 %v274
    %v1267 = vunpack.c.l.b16 %v275
    %v1268 = vunpack.c.h.b16 %v275
    %v1269 = vunpack.c.l.b16 %v276
    %v1270 = vunpack.c.h.b16 %v276
    %v1271 = vunpack.c.l.b16 %v277
    %v1272 = vunpack.c.h.b16 %v277
    %v1273 = vunpack.c.l.b16 %v278
    %v1274 = vunpack.c.h.b16 %v278
    %v1275 = vunpack.c.l.b16 %v279
    %v1276 = vunpack.c.h.b16 %v279
    %v1277 = vunpack.c.l.b16 %v280
    %v1278 = vunpack.c.h.b16 %v280
    %v1279 = vunpack.c.l.b16 %v281
    %v1280 = vunpack.c.h.b16 %v281
    %v1281 = vunpack.c.l.b16 %v282
    %v1282 = vunpack.c.h.b16 %v282
    %v1283 = vunpack.c.l.b16 %v283
    %v1284 = vunpack.c.h.b16 %v283
    %v1285 = vunpack.c.l.b16 %v284
    %v1286 = vunpack.c.h.b16 %v284
    %v1287 = vunpack.c.l.b16 %v285
    %v1288 = vunpack.c.h.b16 %v285
    %v1289 = vunpack.c.l.b16 %v286
    %v1290 = vunpack.c.h.b16 %v286
    %v1291 = vunpack.c.l.b16 %v287
    %v1292 = vunpack.c.h.b16 %v287
    %v1293 = vunpack.c.l.b16 %v288
    %v1294 = vunpack.c.h.b16 %v288
    %v1295 = vunpack.c.l.b16 %v289
    %v1296 = vunpack.c.h.b16 %v289
    %v1297 = vunpack.c.l.b16 %v290
    %v1298 = vunpack.c.h.b16 %v290
    %v1299 = vunpack.c.l.b16 %v291
    %v1300 = vunpack.c.h.b16 %v291
    %v1301 = vunpack.c.l.b16 %v292
    %v1302 = vunpack.c.h.b16 %v292
    %v1303 = vunpack.c.l.b16 %v293
    %v1304 = vunpack.c.h.b16 %v293
    %v1305 = vunpack.c.l.b16 %v294
    %v1306 = vunpack.c.h.b16 %v294
    %v1307 = vunpack.c.l.b16 %v295
    %v1308 = vunpack.c.h.b16 %v295
    %v1309 = vunpack.c.l.b16 %v296
    %v1310 = vunpack.c.h.b16 %v296
    %v1311 = vunpack.c.l.b16 %v297
    %v1312 = vunpack.c.h.b16 %v297
    %v1313 = vunpack.c.l.b16 %v298
    %v1314 = vunpack.c.h.b16 %v298
    %v1315 = vunpack.c.l.b16 %v299
    %v1316 = vunpack.c.h.b16 %v299
    %v1317 = vunpack.c.l.b16 %v300
    %v1318 = vunpack.c.h.b16 %v300
    %v1319 = vunpack.c.l.b16 %v301
    %v1320 = vunpack.c.h.b16 %v301
    %v1321 = vunpack.c.l.b16 %v302
    %v1322 = vunpack.c.h.b16 %v302
    %v1323 = vunpack.c.l.b16 %v303
    %v1324 = vunpack.c.h.b16 %v303
    %v1325 = vunpack.c.l.b16 %v304
    %v1326 = vunpack.c.h.b16 %v304
    %v1327 = vunpack.c.l.b16 %v305
    %v1328 = vunpack.c.h.b16 %v305
    %v1329 = vunpack.c.l.b16 %v306
    %v1330 = vunpack.c.h.b16 %v306
    %v1331 = vunpack.c.l.b16 %v307
    %v1332 = vunpack.c.h.b16 %v307
    %v1333 = vunpack.c.l.b16 %v308
    %v1334 = vunpack.c.h.b16 %v308
    %v1335 = vunpack.c.l.b16 %v309
    %v1336 = vunpack.c.h.b16 %v309
    %v1337 = vunpack.c.l.b16 %v310
    %v1338 = vunpack.c.h.b16 %v310
    %v1339 = vunpack.c.l.b16 %v311
    %v1340 = vunpack.c.h.b16 %v311
    %v1341 = vunpack.c.l.b16 %v312
    %v1342 = vunpack.c.h.b16 %v312
    %v1343 = vunpack.c.l.b16 %v313
    %v1344 = vunpack.c.h.b16 %v313
    %v1345 = vunpack.c.l.b16 %v314
    %v1346 = vunpack.c.h.b16 %v314
    %v1347 = vunpack.c.l.b16 %v315
    %v1348 = vunpack.c.h.b16 %v315
    %v1349 = vunpack.c.l.b16 %v316
    %v1350 = vunpack.c.h.b16 %v316
    %v1351 = vunpack.c.l.b16 %v317
    %v1352 = vunpack.c.h.b16 %v317
    %v1353 = vunpack.c.l.b16 %v318
    %v1354 = vunpack.c.h.b16 %v318
    %v1355 = vunpack.c.l.b16 %v319
    %v1356 = vunpack.c.h.b16 %v319
    %v1357 = vunpack.c.l.b16 %v320
    %v1358 = vunpack.c.h.b16 %v320
    %v1359 = vunpack.c.l.b16 %v321
    %v1360 = vunpack.c.h.b16 %v321
    %v1361 = vunpack.c.l.b16 %v322
    %v1362 = vunpack.c.h.b16 %v322
    %v1363 = vunpack.c.l.b16 %v323
    %v1364 = vunpack.c.h.b16 %v323
    %v1365 = vunpack.c.l.b16 %v324
    %v1366 = vunpack.c.h.b16 %v324
    %v1367 = vunpack.c.l.b16 %v325
    %v1368 = vunpack.c.h.b16 %v325
    %v1369 = vunpack.c.l.b16 %v326
    %v1370 = vunpack.c.h.b16 %v326
    %v1371 = vunpack.c.l.b16 %v327
    %v1372 = vunpack.c.h.b16 %v327
    %v1373 = vunpack.c.l.b16 %v328
    %v1374 = vunpack.c.h.b16 %v328
    %v1375 = vunpack.c.l.b16 %v329
    %v1376 = vunpack.c.h.b16 %v329
    %v1377 = vunpack.c.l.b16 %v330
    %v1378 = vunpack.c.h.b16 %v330
    %v1379 = vunpack.c.l.b16 %v331
    %v1380 = vunpack.c.h.b16 %v331
    %v1381 = vunpack.c.l.b16 %v332
    %v1382 = vunpack.c.h.b16 %v332
    %v1383 = vunpack.c.l.b16 %v333
    %v1384 = vunpack.c.h.b16 %v333
    %v1385 = vunpack.c.l.b16 %v334
    %v1386 = vunpack.c.h.b16 %v334
    %v1387 = vunpack.c.l.b16 %v335
    %v1388 = vunpack.c.h.b16 %v335
    %v1389 = vunpack.c.l.b16 %v336
    %v1390 = vunpack.c.h.b16 %v336
    %v1391 = vunpack.c.l.b16 %v337
    %v1392 = vunpack.c.h.b16 %v337
    %v1393 = vunpack.c.l.b16 %v338
    %v1394 = vunpack.c.h.b16 %v338
    %v1395 = vunpack.c.l.b16 %v339
    %v1396 = vunpack.c.h.b16 %v339
    %v1397 = vunpack.c.l.b16 %v340
    %v1398 = vunpack.c.h.b16 %v340
    %v1399 = vunpack.c.l.b16 %v341
    %v1400 = vunpack.c.h.b16 %v341
    %v1401 = vunpack.c.l.b16 %v342
    %v1402 = vunpack.c.h.b16 %v342
    %v1403 = vunpack.c.l.b16 %v343
    %v1404 = vunpack.c.h.b16 %v343
    %v1405 = vunpack.c.l.b16 %v344
    %v1406 = vunpack.c.h.b16 %v344
    %v1407 = vunpack.c.l.b16 %v345
    %v1408 = vunpack.c.h.b16 %v345
    %v1409 = vunpack.c.l.b16 %v346
    %v1410 = vunpack.c.h.b16 %v346
    %v1411 = vunpack.c.l.b16 %v347
    %v1412 = vunpack.c.h.b16 %v347
    %v1413 = vunpack.c.l.b16 %v348
    %v1414 = vunpack.c.h.b16 %v348
    %v1415 = vunpack.c.l.b16 %v349
    %v1416 = vunpack.c.h.b16 %v349
    %v1417 = vunpack.c.l.b16 %v350
    %v1418 = vunpack.c.h.b16 %v350
    %v1419 = vunpack.c.l.b16 %v351
    %v1420 = vunpack.c.h.b16 %v351
    %v1421 = vunpack.c.l.b16 %v352
    %v1422 = vunpack.c.h.b16 %v352
    %v1423 = vunpack.c.l.b16 %v353
    %v1424 = vunpack.c.h.b16 %v353
    %v1425 = vunpack.c.l.b16 %v354
    %v1426 = vunpack.c.h.b16 %v354
    %v1427 = vunpack.c.l.b16 %v355
    %v1428 = vunpack.c.h.b16 %v355
    %v1429 = vunpack.c.l.b16 %v356
    %v1430 = vunpack.c.h.b16 %v356
    %v1431 = vunpack.c.l.b16 %v357
    %v1432 = vunpack.c.h.b16 %v357
    %v1433 = vunpack.c.l.b16 %v358
    %v1434 = vunpack.c.h.b16 %v358
    %v1435 = vunpack.c.l.b16 %v359
    %v1436 = vunpack.c.h.b16 %v359
    %v1437 = vunpack.c.l.b16 %v360
    %v1438 = vunpack.c.h.b16 %v360
    %v1439 = vunpack.c.l.b16 %v361
    %v1440 = vunpack.c.h.b16 %v361
    %v1441 = vunpack.c.l.b16 %v362
    %v1442 = vunpack.c.h.b16 %v362
    %v1443 = vunpack.c.l.b16 %v363
    %v1444 = vunpack.c.h.b16 %v363
    %v1445 = vunpack.c.l.b16 %v364
    %v1446 = vunpack.c.h.b16 %v364
    %v1447 = vunpack.c.l.b16 %v365
    %v1448 = vunpack.c.h.b16 %v365
    %v1449 = vunpack.c.l.b16 %v366
    %v1450 = vunpack.c.h.b16 %v366
    %v1451 = vunpack.c.l.b16 %v367
    %v1452 = vunpack.c.h.b16 %v367
    %v1453 = vunpack.c.l.b16 %v368
    %v1454 = vunpack.c.h.b16 %v368
    %v1455 = vunpack.c.l.b16 %v369
    %v1456 = vunpack.c.h.b16 %v369
    %v1457 = vunpack.c.l.b16 %v370
    %v1458 = vunpack.c.h.b16 %v370
    %v1459 = vunpack.c.l.b16 %v371
    %v1460 = vunpack.c.h.b16 %v371
    %v1461 = vunpack.c.l.b16 %v372
    %v1462 = vunpack.c.h.b16 %v372
    %v1463 = vunpack.c.l.b16 %v373
    %v1464 = vunpack.c.h.b16 %v373
    %v1465 = vunpack.c.l.b16 %v374
    %v1466 = vunpack.c.h.b16 %v374
    %v1467 = vunpack.c.l.b16 %v375
    %v1468 = vunpack.c.h.b16 %v375
    %v1469 = vunpack.c.l.b16 %v376
    %v1470 = vunpack.c.h.b16 %v376
    %v1471 = vunpack.c.l.b16 %v377
    %v1472 = vunpack.c.h.b16 %v377
    %v1473 = vunpack.c.l.b16 %v378
    %v1474 = vunpack.c.h.b16 %v378
    %v1475 = vunpack.c.l.b16 %v379
    %v1476 = vunpack.c.h.b16 %v379
    %v1477 = vunpack.c.l.b16 %v380
    %v1478 = vunpack.c.h.b16 %v380
    %v1479 = vunpack.c.l.b16 %v381
    %v1480 = vunpack.c.h.b16 %v381
    %v1481 = vunpack.c.l.b16 %v382
    %v1482 = vunpack.c.h.b16 %v382
    %v1483 = vunpack.c.l.b16 %v383
    %v1484 = vunpack.c.h.b16 %v383
    %v1485 = vunpack.c.l.b16 %v384
    %v1486 = vunpack.c.h.b16 %v384
    %v1487 = vunpack.c.l.b16 %v385
    %v1488 = vunpack.c.h.b16 %v385
    %v1489 = vunpack.c.l.b16 %v386
    %v1490 = vunpack.c.h.b16 %v386
    %v1491 = vunpack.c.l.b16 %v387
    %v1492 = vunpack.c.h.b16 %v387
    %v1493 = vunpack.c.l.b16 %v388
    %v1494 = vunpack.c.h.b16 %v388
    %v1495 = vunpack.c.l.b16 %v389
    %v1496 = vunpack.c.h.b16 %v389
    %v1497 = vunpack.c.l.b16 %v390
    %v1498 = vunpack.c.h.b16 %v390
    %v1499 = vunpack.c.l.b16 %v391
    %v1500 = vunpack.c.h.b16 %v391
    %v1501 = vunpack.c.l.b16 %v392
    %v1502 = vunpack.c.h.b16 %v392
    %v1503 = vunpack.c.l.b16 %v393
    %v1504 = vunpack.c.h.b16 %v393
    %v1505 = vunpack.c.l.b16 %v394
    %v1506 = vunpack.c.h.b16 %v394
    %v1507 = vunpack.c.l.b16 %v395
    %v1508 = vunpack.c.h.b16 %v395
    %v1509 = vunpack.c.l.b16 %v396
    %v1510 = vunpack.c.h.b16 %v396
    %v1511 = vunpack.c.l.b16 %v397
    %v1512 = vunpack.c.h.b16 %v397
    %v1513 = vunpack.c.l.b16 %v398
    %v1514 = vunpack.c.h.b16 %v398
    %v1515 = vunpack.c.l.b16 %v399
    %v1516 = vunpack.c.h.b16 %v399
    %v1517 = vunpack.c.l.b16 %v400
    %v1518 = vunpack.c.h.b16 %v400
    %v1519 = vunpack.c.l.b16 %v401
    %v1520 = vunpack.c.h.b16 %v401
    %v1521 = vunpack.c.l.b16 %v402
    %v1522 = vunpack.c.h.b16 %v402
    %v1523 = vunpack.c.l.b16 %v403
    %v1524 = vunpack.c.h.b16 %v403
    %v1525 = vunpack.c.l.b16 %v404
    %v1526 = vunpack.c.h.b16 %v404
    %v1527 = vunpack.c.l.b16 %v405
    %v1528 = vunpack.c.h.b16 %v405
    %v1529 = vunpack.c.l.b16 %v406
    %v1530 = vunpack.c.h.b16 %v406
    %v1531 = vunpack.c.l.b16 %v407
    %v1532 = vunpack.c.h.b16 %v407
    %v1533 = vunpack.c.l.b16 %v408
    %v1534 = vunpack.c.h.b16 %v408
    %v1535 = vunpack.c.l.b16 %v409
    %v1536 = vunpack.c.h.b16 %v409
    %v1537 = vunpack.c.l.b16 %v410
    %v1538 = vunpack.c.h.b16 %v410
    %v1539 = vunpack.c.l.b16 %v411
    %v1540 = vunpack.c.h.b16 %v411
    %v1541 = vunpack.c.l.b16 %v412
    %v1542 = vunpack.c.h.b16 %v412
    %v1543 = vunpack.c.l.b16 %v413
    %v1544 = vunpack.c.h.b16 %v413
    %v1545 = vunpack.c.l.b16 %v414
    %v1546 = vunpack.c.h.b16 %v414
    %v1547 = vunpack.c.l.b16 %v415
    %v1548 = vunpack.c.h.b16 %v415
    %v1549 = vunpack.c.l.b16 %v416
    %v1550 = vunpack.c.h.b16 %v416
    %v1551 = vunpack.c.l.b16 %v417
    %v1552 = vunpack.c.h.b16 %v417
    %v1553 = vunpack.c.l.b16 %v418
    %v1554 = vunpack.c.h.b16 %v418
    %v1555 = vunpack.c.l.b16 %v419
    %v1556 = vunpack.c.h.b16 %v419
    %v1557 = vunpack.c.l.b16 %v420
    %v1558 = vunpack.c.h.b16 %v420
    %v1559 = vunpack.c.l.b16 %v421
    %v1560 = vunpack.c.h.b16 %v421
    %v1561 = vunpack.c.l.b16 %v422
    %v1562 = vunpack.c.h.b16 %v422
    %v1563 = vunpack.c.l.b16 %v423
    %v1564 = vunpack.c.h.b16 %v423
    %v1565 = vunpack.c.l.b16 %v424
    %v1566 = vunpack.c.h.b16 %v424
    %v1567 = vunpack.c.l.b16 %v425
    %v1568 = vunpack.c.h.b16 %v425
    %v1569 = vunpack.c.l.b16 %v426
    %v1570 = vunpack.c.h.b16 %v426
    %v1571 = vunpack.c.l.b16 %v427
    %v1572 = vunpack.c.h.b16 %v427
    %v1573 = vunpack.c.l.b16 %v428
    %v1574 = vunpack.c.h.b16 %v428
    %v1575 = vunpack.c.l.b16 %v429
    %v1576 = vunpack.c.h.b16 %v429
    %v1577 = vunpack.c.l.b16 %v430
    %v1578 = vunpack.c.h.b16 %v430
    %v1579 = vunpack.c.l.b16 %v431
    %v1580 = vunpack.c.h.b16 %v431
    %v1581 = vunpack.c.l.b16 %v432
    %v1582 = vunpack.c.h.b16 %v432
    %v1583 = vunpack.c.l.b16 %v433
    %v1584 = vunpack.c.h.b16 %v433
    %v1585 = vunpack.c.l.b16 %v434
    %v1586 = vunpack.c.h.b16 %v434
    %v1587 = vunpack.c.l.b16 %v435
    %v1588 = vunpack.c.h.b16 %v435
    %v1589 = vunpack.c.l.b16 %v436
    %v1590 = vunpack.c.h.b16 %v436
    %v1591 = vunpack.c.l.b16 %v437
    %v1592 = vunpack.c.h.b16 %v437
    %v1593 = vunpack.c.l.b16 %v438
    %v1594 = vunpack.c.h.b16 %v438
    %v1595 = vunpack.c.l.b16 %v439
    %v1596 = vunpack.c.h.b16 %v439
    %v1597 = vunpack.c.l.b16 %v440
    %v1598 = vunpack.c.h.b16 %v440
    %v1599 = vunpack.c.l.b16 %v441
    %v1600 = vunpack.c.h.b16 %v441
    %v1601 = vunpack.c.l.b16 %v442
    %v1602 = vunpack.c.h.b16 %v442
    %v1603 = vunpack.c.l.b16 %v443
    %v1604 = vunpack.c.h.b16 %v443
    %v1605 = vunpack.c.l.b16 %v444
    %v1606 = vunpack.c.h.b16 %v444
    %v1607 = vunpack.c.l.b16 %v445
    %v1608 = vunpack.c.h.b16 %v445
    %v1609 = vunpack.c.l.b16 %v446
    %v1610 = vunpack.c.h.b16 %v446
    %v1611 = vunpack.c.l.b16 %v447
    %v1612 = vunpack.c.h.b16 %v447
    %v1613 = vunpack.c.l.b16 %v448
    %v1614 = vunpack.c.h.b16 %v448
    %v1615 = vunpack.c.l.b16 %v449
    %v1616 = vunpack.c.h.b16 %v449
    %v1617 = vunpack.c.l.b16 %v450
    %v1618 = vunpack.c.h.b16 %v450
    %v1619 = vunpack.c.l.b16 %v451
    %v1620 = vunpack.c.h.b16 %v451
    %v1621 = vunpack.c.l.b16 %v452
    %v1622 = vunpack.c.h.b16 %v452
    %v1623 = vunpack.c.l.b16 %v453
    %v1624 = vunpack.c.h.b16 %v453
    %v1625 = vunpack.c.l.b16 %v454
    %v1626 = vunpack.c.h.b16 %v454
    %v1627 = vunpack.c.l.b16 %v455
    %v1628 = vunpack.c.h.b16 %v455
    %v1629 = vunpack.c.l.b16 %v456
    %v1630 = vunpack.c.h.b16 %v456
    %v1631 = vunpack.c.l.b16 %v457
    %v1632 = vunpack.c.h.b16 %v457
    %v1633 = vunpack.c.l.b16 %v458
    %v1634 = vunpack.c.h.b16 %v458
    %v1635 = vunpack.c.l.b16 %v459
    %v1636 = vunpack.c.h.b16 %v459
    %v1637 = vunpack.c.l.b16 %v460
    %v1638 = vunpack.c.h.b16 %v460
    %v1639 = vunpack.c.l.b16 %v461
    %v1640 = vunpack.c.h.b16 %v461
    %v1641 = vunpack.c.l.b16 %v462
    %v1642 = vunpack.c.h.b16 %v462
    %v1643 = vunpack.c.l.b16 %v463
    %v1644 = vunpack.c.h.b16 %v463
    %v1645 = vunpack.c.l.b16 %v464
    %v1646 = vunpack.c.h.b16 %v464
    %v1647 = vunpack.c.l.b16 %v465
    %v1648 = vunpack.c.h.b16 %v465
    %v1649 = vunpack.c.l.b16 %v466
    %v1650 = vunpack.c.h.b16 %v466
    %v1651 = vunpack.c.l.b16 %v467
    %v1652 = vunpack.c.h.b16 %v467
    %v1653 = vunpack.c.l.b16 %v468
    %v1654 = vunpack.c.h.b16 %v468
    %v1655 = vunpack.c.l.b16 %v469
    %v1656 = vunpack.c.h.b16 %v469
    %v1657 = vunpack.c.l.b16 %v470
    %v1658 = vunpack.c.h.b16 %v470
    %v1659 = vunpack.c.l.b16 %v471
    %v1660 = vunpack.c.h.b16 %v471
    %v1661 = vunpack.c.l.b16 %v472
    %v1662 = vunpack.c.h.b16 %v472
    %v1663 = vunpack.c.l.b16 %v473
    %v1664 = vunpack.c.h.b16 %v473
    %v1665 = vunpack.c.l.b16 %v474
    %v1666 = vunpack.c.h.b16 %v474
    %v1667 = vunpack.c.l.b16 %v475
    %v1668 = vunpack.c.h.b16 %v475
    %v1669 = vunpack.c.l.b16 %v476
    %v1670 = vunpack.c.h.b16 %v476
    %v1671 = vunpack.c.l.b16 %v477
    %v1672 = vunpack.c.h.b16 %v477
    %v1673 = vunpack.c.l.b16 %v478
    %v1674 = vunpack.c.h.b16 %v478
    %v1675 = vunpack.c.l.b16 %v479
    %v1676 = vunpack.c.h.b16 %v479
    %v1677 = vunpack.c.l.b16 %v480
    %v1678 = vunpack.c.h.b16 %v480
    %v1679 = vunpack.c.l.b16 %v481
    %v1680 = vunpack.c.h.b16 %v481
    %v1681 = vunpack.c.l.b16 %v482
    %v1682 = vunpack.c.h.b16 %v482
    %v1683 = vunpack.c.l.b16 %v483
    %v1684 = vunpack.c.h.b16 %v483
    %v1685 = vunpack.c.l.b16 %v484
    %v1686 = vunpack.c.h.b16 %v484
    %v1687 = vunpack.c.l.b16 %v485
    %v1688 = vunpack.c.h.b16 %v485
    %v1689 = vunpack.c.l.b16 %v486
    %v1690 = vunpack.c.h.b16 %v486
    %v1691 = vunpack.c.l.b16 %v487
    %v1692 = vunpack.c.h.b16 %v487
    %v1693 = vunpack.c.l.b16 %v488
    %v1694 = vunpack.c.h.b16 %v488
    %v1695 = vunpack.c.l.b16 %v489
    %v1696 = vunpack.c.h.b16 %v489
    %v1697 = vunpack.c.l.b16 %v490
    %v1698 = vunpack.c.h.b16 %v490
    %v1699 = vunpack.c.l.b16 %v491
    %v1700 = vunpack.c.h.b16 %v491
    %v1701 = vunpack.c.l.b16 %v492
    %v1702 = vunpack.c.h.b16 %v492
    %v1703 = vunpack.c.l.b16 %v493
    %v1704 = vunpack.c.h.b16 %v493
    %v1705 = vunpack.c.l.b16 %v494
    %v1706 = vunpack.c.h.b16 %v494
    %v1707 = vunpack.c.l.b16 %v495
    %v1708 = vunpack.c.h.b16 %v495
    %v1709 = vunpack.c.l.b16 %v496
    %v1710 = vunpack.c.h.b16 %v496
    %v1711 = vunpack.c.l.b16 %v497
    %v1712 = vunpack.c.h.b16 %v497
    %v1713 = vunpack.c.l.b16 %v498
    %v1714 = vunpack.c.h.b16 %v498
    %v1715 = vunpack.c.l.b16 %v499
    %v1716 = vunpack.c.h.b16 %v499
    %v1717 = vunpack.c.l.b16 %v500
    %v1718 = vunpack.c.h.b16 %v500
    %v1719 = vunpack.c.l.b16 %v501
    %v1720 = vunpack.c.h.b16 %v501
    %v1721 = vunpack.c.l.b16 %v502
    %v1722 = vunpack.c.h.b16 %v502
    %v1723 = vunpack.c.l.b16 %v503
    %v1724 = vunpack.c.h.b16 %v503
    %v1725 = vunpack.c.l.b16 %v504
    %v1726 = vunpack.c.h.b16 %v504
    %v1727 = vunpack.c.l.b16 %v505
    %v1728 = vunpack.c.h.b16 %v505
    %v1729 = vunpack.c.l.b16 %v506
    %v1730 = vunpack.c.h.b16 %v506
    %v1731 = vunpack.c.l.b16 %v507
    %v1732 = vunpack.c.h.b16 %v507
    %v1733 = vunpack.c.l.b16 %v508
    %v1734 = vunpack.c.h.b16 %v508
    %v1735 = vunpack.c.l.b16 %v509
    %v1736 = vunpack.c.h.b16 %v509
    %v1737 = vunpack.c.l.b16 %v510
    %v1738 = vunpack.c.h.b16 %v510
    %v1739 = vunpack.c.l.b16 %v511
    %v1740 = vunpack.c.h.b16 %v511
    %v1741 = vunpack.c.l.b16 %v512
    %v1742 = vunpack.c.h.b16 %v512
    %v1743 = vunpack.c.l.b16 %v513
    %v1744 = vunpack.c.h.b16 %v513
    %v1745 = vunpack.c.l.b16 %v514
    %v1746 = vunpack.c.h.b16 %v514
    %v1747 = vunpack.c.l.b16 %v515
    %v1748 = vunpack.c.h.b16 %v515
    %v1749 = vunpack.c.l.b16 %v516
    %v1750 = vunpack.c.h.b16 %v516
    %v1751 = vunpack.c.l.b16 %v517
    %v1752 = vunpack.c.h.b16 %v517
    %v1753 = vunpack.c.l.b16 %v518
    %v1754 = vunpack.c.h.b16 %v518
    %v1755 = vunpack.c.l.b16 %v519
    %v1756 = vunpack.c.h.b16 %v519
    %v1757 = vunpack.c.l.b16 %v520
    %v1758 = vunpack.c.h.b16 %v520
    %v1759 = vunpack.c.l.b16 %v521
    %v1760 = vunpack.c.h.b16 %v521
    %v1761 = vunpack.c.l.b16 %v522
    %v1762 = vunpack.c.h.b16 %v522
    %v1763 = vunpack.c.l.b16 %v523
    %v1764 = vunpack.c.h.b16 %v523
    %v1765 = vunpack.c.l.b16 %v524
    %v1766 = vunpack.c.h.b16 %v524
    %v1767 = vunpack.c.l.b16 %v525
    %v1768 = vunpack.c.h.b16 %v525
    %v1769 = vunpack.c.l.b16 %v526
    %v1770 = vunpack.c.h.b16 %v526
    %v1771 = vunpack.c.l.b16 %v527
    %v1772 = vunpack.c.h.b16 %v527
    %v1773 = vunpack.c.l.b16 %v528
    %v1774 = vunpack.c.h.b16 %v528
    %v1775 = vunpack.c.l.b16 %v529
    %v1776 = vunpack.c.h.b16 %v529
    %v1777 = vunpack.c.l.b16 %v530
    %v1778 = vunpack.c.h.b16 %v530
    %v1779 = vunpack.c.l.b16 %v531
    %v1780 = vunpack.c.h.b16 %v531
    %v1781 = vunpack.c.l.b16 %v532
    %v1782 = vunpack.c.h.b16 %v532
    %v1783 = vunpack.c.l.b16 %v533
    %v1784 = vunpack.c.h.b16 %v533
    %v1785 = vunpack.c.l.b16 %v534
    %v1786 = vunpack.c.h.b16 %v534
    %v1787 = vunpack.c.l.b16 %v535
    %v1788 = vunpack.c.h.b16 %v535
    %v1789 = vpack.c.b16 %v1013, %v1005
    %v1790 = vpack.c.b16 %v1014, %v1006
    %v1791 = vpack.c.b16 %v1015, %v1007
    %v1792 = vpack.c.b16 %v1016, %v1008
    %v1793 = vpack.c.b16 %v1017, %v1009
    %v1794 = vpack.c.b16 %v1018, %v1010
    %v1795 = vpack.c.b16 %v1019, %v1011
    %v1796 = vpack.c.b16 %v1020, %v1012
    %v1797 = vpack.c.b16 %v1029, %v1021
    %v1798 = vpack.c.b16 %v1030, %v1022
    %v1799 = vpack.c.b16 %v1031, %v1023
    %v1800 = vpack.c.b16 %v1032, %v1024
    %v1801 = vpack.c.b16 %v1033, %v1025
    %v1802 = vpack.c.b16 %v1034, %v1026
    %v1803 = vpack.c.b16 %v1035, %v1027
    %v1804 = vpack.c.b16 %v1036, %v1028
    %v1805 = vpack.c.b16 %v1045, %v1037
    %v1806 = vpack.c.b16 %v1046, %v1038
    %v1807 = vpack.c.b16 %v1047, %v1039
    %v1808 = vpack.c.b16 %v1048, %v1040
    %v1809 = vpack.c.b16 %v1049, %v1041
    %v1810 = vpack.c.b16 %v1050, %v1042
    %v1811 = vpack.c.b16 %v1051, %v1043
    %v1812 = vpack.c.b16 %v1052, %v1044
    %v1813 = vpack.c.b16 %v1061, %v1053
    %v1814 = vpack.c.b16 %v1062, %v1054
    %v1815 = vpack.c.b16 %v1063, %v1055
    %v1816 = vpack.c.b16 %v1064, %v1056
    %v1817 = vpack.c.b16 %v1065, %v1057
    %v1818 = vpack.c.b16 %v1066, %v1058
    %v1819 = vpack.c.b16 %v1067, %v1059
    %v1820 = vpack.c.b16 %v1068, %v1060
    %v1821 = vpack.c.b16 %v1077, %v1069
    %v1822 = vpack.c.b16 %v1078, %v1070
    %v1823 = vpack.c.b16 %v1079, %v1071
    %v1824 = vpack.c.b16 %v1080, %v1072
    %v1825 = vpack.c.b16 %v1081, %v1073
    %v1826 = vpack.c.b16 %v1082, %v1074
    %v1827 = vpack.c.b16 %v1083, %v1075
    %v1828 = vpack.c.b16 %v1084, %v1076
    %v1829 = vpack.c.b16 %v1093, %v1085
    %v1830 = vpack.c.b16 %v1094, %v1086
    %v1831 = vpack.c.b16 %v1095, %v1087
    %v1832 = vpack.c.b16 %v1096, %v1088
    %v1833 = vpack.c.b16 %v1097, %v1089
    %v1834 = vpack.c.b16 %v1098, %v1090
    %v1835 = vpack.c.b16 %v1099, %v1091
    %v1836 = vpack.c.b16 %v1100, %v1092
    %v1837 = vpack.c.b16 %v1109, %v1101
    %v1838 = vpack.c.b16 %v1110, %v1102
    %v1839 = vpack.c.b16 %v1111, %v1103
    %v1840 = vpack.c.b16 %v1112, %v1104
    %v1841 = vpack.c.b16 %v1113, %v1105
    %v1842 = vpack.c.b16 %v1114, %v1106
    %v1843 = vpack.c.b16 %v1115, %v1107
    %v1844 = vpack.c.b16 %v1116, %v1108
    %v1845 = vpack.c.b16 %v1125, %v1117
    %v1846 = vpack.c.b16 %v1126, %v1118
    %v1847 = vpack.c.b16 %v1127, %v1119
    %v1848 = vpack.c.b16 %v1128, %v1120
    %v1849 = vpack.c.b16 %v1129, %v1121
    %v1850 = vpack.c.b16 %v1130, %v1122
    %v1851 = vpack.c.b16 %v1131, %v1123
    %v1852 = vpack.c.b16 %v1132, %v1124
    %v1853 = vpack.c.b16 %v1141, %v1133
    %v1854 = vpack.c.b16 %v1142, %v1134
    %v1855 = vpack.c.b16 %v1143, %v1135
    %v1856 = vpack.c.b16 %v1144, %v1136
    %v1857 = vpack.c.b16 %v1145, %v1137
    %v1858 = vpack.c.b16 %v1146, %v1138
    %v1859 = vpack.c.b16 %v1147, %v1139
    %v1860 = vpack.c.b16 %v1148, %v1140
    %v1861 = vpack.c.b16 %v1157, %v1149
    %v1862 = vpack.c.b16 %v1158, %v1150
    %v1863 = vpack.c.b16 %v1159, %v1151
    %v1864 = vpack.c.b16 %v1160, %v1152
    %v1865 = vpack.c.b16 %v1161, %v1153
    %v1866 = vpack.c.b16 %v1162, %v1154
    %v1867 = vpack.c.b16 %v1163, %v1155
    %v1868 = vpack.c.b16 %v1164, %v1156
    %v1869 = vpack.c.b16 %v1173, %v1165
    %v1870 = vpack.c.b16 %v1174, %v1166
    %v1871 = vpack.c.b16 %v1175, %v1167
    %v1872 = vpack.c.b16 %v1176, %v1168
    %v1873 = vpack.c.b16 %v1177, %v1169
    %v1874 = vpack.c.b16 %v1178, %v1170
    %v1875 = vpack.c.b16 %v1179, %v1171
    %v1876 = vpack.c.b16 %v1180, %v1172
    %v1877 = vpack.c.b16 %v1189, %v1181
    %v1878 = vpack.c.b16 %v1190, %v1182
    %v1879 = vpack.c.b16 %v1191, %v1183
    %v1880 = vpack.c.b16 %v1192, %v1184
    %v1881 = vpack.c.b16 %v1193, %v1185
    %v1882 = vpack.c.b16 %v1194, %v1186
    %v1883 = vpack.c.b16 %v1195, %v1187
    %v1884 = vpack.c.b16 %v1196, %v1188
    %v1885 = vpack.c.b16 %v1205, %v1197
    %v1886 = vpack.c.b16 %v1206, %v1198
    %v1887 = vpack.c.b16 %v1207, %v1199
    %v1888 = vpack.c.b16 %v1208, %v1200
    %v1889 = vpack.c.b16 %v1209, %v1201
    %v1890 = vpack.c.b16 %v1210, %v1202
    %v1891 = vpack.c.b16 %v1211, %v1203
    %v1892 = vpack.c.b16 %v1212, %v1204
    %v1893 = vpack.c.b16 %v1221, %v1213
    %v1894 = vpack.c.b16 %v1222, %v1214
    %v1895 = vpack.c.b16 %v1223, %v1215
    %v1896 = vpack.c.b16 %v1224, %v1216
    %v1897 = vpack.c.b16 %v1225, %v1217
    %v1898 = vpack.c.b16 %v1226, %v1218
    %v1899 = vpack.c.b16 %v1227, %v1219
    %v1900 = vpack.c.b16 %v1228, %v1220
    %v1901 = vpack.c.b16 %v1237, %v1229
    %v1902 = vpack.c.b16 %v1238, %v1230
    %v1903 = vpack.c.b16 %v1239, %v1231
    %v1904 = vpack.c.b16 %v1240, %v1232
    %v1905 = vpack.c.b16 %v1241, %v1233
    %v1906 = vpack.c.b16 %v1242, %v1234
    %v1907 = vpack.c.b16 %v1243, %v1235
    %v1908 = vpack.c.b16 %v1244, %v1236
    %v1909 = vpack.c.b16 %v1253, %v1245
    %v1910 = vpack.c.b16 %v1254, %v1246
    %v1911 = vpack.c.b16 %v1255, %v1247
    %v1912 = vpack.c.b16 %v1256, %v1248
    %v1913 = vpack.c.b16 %v1257, %v1249
    %v1914 = vpack.c.b16 %v1258, %v1250
    %v1915 = vpack.c.b16 %v1259, %v1251
    %v1916 = vpack.c.b16 %v1260, %v1252
    %v1917 = vpack.c.b16 %v1269, %v1261
    %v1918 = vpack.c.b16 %v1270, %v1262
    %v1919 = vpack.c.b16 %v1271, %v1263
    %v1920 = vpack.c.b16 %v1272, %v1264
    %v1921 = vpack.c.b16 %v1273, %v1265
    %v1922 = vpack.c.b16 %v1274, %v1266
    %v1923 = vpack.c.b16 %v1275, %v1267
    %v1924 = vpack.c.b16 %v1276, %v1268
    %v1925 = vpack.c.b16 %v1285, %v1277
    %v1926 = vpack.c.b16 %v1286, %v1278
    %v1927 = vpack.c.b16 %v1287, %v1279
    %v1928 = vpack.c.b16 %v1288, %v1280
    %v1929 = vpack.c.b16 %v1289, %v1281
    %v1930 = vpack.c.b16 %v1290, %v1282
    %v1931 = vpack.c.b16 %v1291, %v1283
    %v1932 = vpack.c.b16 %v1292, %v1284
    %v1933 = vpack.c.b16 %v1301, %v1293
    %v1934 = vpack.c.b16 %v1302, %v1294
    %v1935 = vpack.c.b16 %v1303, %v1295
    %v1936 = vpack.c.b16 %v1304, %v1296
    %v1937 = vpack.c.b16 %v1305, %v1297
    %v1938 = vpack.c.b16 %v1306, %v1298
    %v1939 = vpack.c.b16 %v1307, %v1299
    %v1940 = vpack.c.b16 %v1308, %v1300
    %v1941 = vpack.c.b16 %v1317, %v1309
    %v1942 = vpack.c.b16 %v1318, %v1310
    %v1943 = vpack.c.b16 %v1319, %v1311
    %v1944 = vpack.c.b16 %v1320, %v1312
    %v1945 = vpack.c.b16 %v1321, %v1313
    %v1946 = vpack.c.b16 %v1322, %v1314
    %v1947 = vpack.c.b16 %v1323, %v1315
    %v1948 = vpack.c.b16 %v1324, %v1316
    %v1949 = vpack.c.b16 %v1333, %v1325
    %v1950 = vpack.c.b16 %v1334, %v1326
    %v1951 = vpack.c.b16 %v1335, %v1327
    %v1952 = vpack.c.b16 %v1336, %v1328
    %v1953 = vpack.c.b16 %v1337, %v1329
    %v1954 = vpack.c.b16 %v1338, %v1330
    %v1955 = vpack.c.b16 %v1339, %v1331
    %v1956 = vpack.c.b16 %v1340, %v1332
    %v1957 = vpack.c.b16 %v1349, %v1341
    %v1958 = vpack.c.b16 %v1350, %v1342
    %v1959 = vpack.c.b16 %v1351, %v1343
    %v1960 = vpack.c.b16 %v1352, %v1344
    %v1961 = vpack.c.b16 %v1353, %v1345
    %v1962 = vpack.c.b16 %v1354, %v1346
    %v1963 = vpack.c.b16 %v1355, %v1347
    %v1964 = vpack.c.b16 %v1356, %v1348
    %v1965 = vpack.c.b16 %v1365, %v1357
    %v1966 = vpack.c.b16 %v1366, %v1358
    %v1967 = vpack.c.b16 %v1367, %v1359
    %v1968 = vpack.c.b16 %v1368, %v1360
    %v1969 = vpack.c.b16 %v1369, %v1361
    %v1970 = vpack.c.b16 %v1370, %v1362
    %v1971 = vpack.c.b16 %v1371, %v1363
    %v1972 = vpack.c.b16 %v1372, %v1364
    %v1973 = vpack.c.b16 %v1381, %v1373
    %v1974 = vpack.c.b16 %v1382, %v1374
    %v1975 = vpack.c.b16 %v1383, %v1375
    %v1976 = vpack.c.b16 %v1384, %v1376
    %v1977 = vpack.c.b16 %v1385, %v1377
    %v1978 = vpack.c.b16 %v1386, %v1378
    %v1979 = vpack.c.b16 %v1387, %v1379
    %v1980 = vpack.c.b16 %v1388, %v1380
    %v1981 = vpack.c.b16 %v1397, %v1389
    %v1982 = vpack.c.b16 %v1398, %v1390
    %v1983 = vpack.c.b16 %v1399, %v1391
    %v1984 = vpack.c.b16 %v1400, %v1392
    %v1985 = vpack.c.b16 %v1401, %v1393
    %v1986 = vpack.c.b16 %v1402, %v1394
    %v1987 = vpack.c.b16 %v1403, %v1395
    %v1988 = vpack.c.b16 %v1404, %v1396
    %v1989 = vpack.c.b16 %v1413, %v1405
    %v1990 = vpack.c.b16 %v1414, %v1406
    %v1991 = vpack.c.b16 %v1415, %v1407
    %v1992 = vpack.c.b16 %v1416, %v1408
    %v1993 = vpack.c.b16 %v1417, %v1409
    %v1994 = vpack.c.b16 %v1418, %v1410
    %v1995 = vpack.c.b16 %v1419, %v1411
    %v1996 = vpack.c.b16 %v1420, %v1412
    %v1997 = vpack.c.b16 %v1429, %v1421
    %v1998 = vpack.c.b16 %v1430, %v1422
    %v1999 = vpack.c.b16 %v1431, %v1423
    %v2000 = vpack.c.b16 %v1432, %v1424
    %v2001 = vpack.c.b16 %v1433, %v1425
    %v2002 = vpack.c.b16 %v1434, %v1426
    %v2003 = vpack.c.b16 %v1435, %v1427
    %v2004 = vpack.c.b16 %v1436, %v1428
    %v2005 = vpack.c.b16 %v1445, %v1437
    %v2006 = vpack.c.b16 %v1446, %v1438
    %v2007 = vpack.c.b16 %v1447, %v1439
    %v2008 = vpack.c.b16 %v1448, %v1440
    %v2009 = vpack.c.b16 %v1449, %v1441
    %v2010 = vpack.c.b16 %v1450, %v1442
    %v2011 = vpack.c.b16 %v1451, %v1443
    %v2012 = vpack.c.b16 %v1452, %v1444
    %v2013 = vpack.c.b16 %v1461, %v1453
    %v2014 = vpack.c.b16 %v1462, %v1454
    %v2015 = vpack.c.b16 %v1463, %v1455
    %v2016 = vpack.c.b16 %v1464, %v1456
    %v2017 = vpack.c.b16 %v1465, %v1457
    %v2018 = vpack.c.b16 %v1466, %v1458
    %v2019 = vpack.c.b16 %v1467, %v1459
    %v2020 = vpack.c.b16 %v1468, %v1460
    %v2021 = vpack.c.b16 %v1477, %v1469
    %v2022 = vpack.c.b16 %v1478, %v1470
    %v2023 = vpack.c.b16 %v1479, %v1471
    %v2024 = vpack.c.b16 %v1480, %v1472
    %v2025 = vpack.c.b16 %v1481, %v1473
    %v2026 = vpack.c.b16 %v1482, %v1474
    %v2027 = vpack.c.b16 %v1483, %v1475
    %v2028 = vpack.c.b16 %v1484, %v1476
    %v2029 = vpack.c.b16 %v1493, %v1485
    %v2030 = vpack.c.b16 %v1494, %v1486
    %v2031 = vpack.c.b16 %v1495, %v1487
    %v2032 = vpack.c.b16 %v1496, %v1488
    %v2033 = vpack.c.b16 %v1497, %v1489
    %v2034 = vpack.c.b16 %v1498, %v1490
    %v2035 = vpack.c.b16 %v1499, %v1491
    %v2036 = vpack.c.b16 %v1500, %v1492
    %v2037 = vpack.c.b16 %v1509, %v1501
    %v2038 = vpack.c.b16 %v1510, %v1502
    %v2039 = vpack.c.b16 %v1511, %v1503
    %v2040 = vpack.c.b16 %v1512, %v1504
    %v2041 = vpack.c.b16 %v1513, %v1505
    %v2042 = vpack.c.b16 %v1514, %v1506
    %v2043 = vpack.c.b16 %v1515, %v1507
    %v2044 = vpack.c.b16 %v1516, %v1508
    %v2045 = vpack.c.b16 %v1525, %v1517
    %v2046 = vpack.c.b16 %v1526, %v1518
    %v2047 = vpack.c.b16 %v1527, %v1519
    %v2048 = vpack.c.b16 %v1528, %v1520
    %v2049 = vpack.c.b16 %v1529, %v1521
    %v2050 = vpack.c.b16 %v1530, %v1522
    %v2051 = vpack.c.b16 %v1531, %v1523
    %v2052 = vpack.c.b16 %v1532, %v1524
    %v2053 = vpack.c.b16 %v1541, %v1533
    %v2054 = vpack.c.b16 %v1542, %v1534
    %v2055 = vpack.c.b16 %v1543, %v1535
    %v2056 = vpack.c.b16 %v1544, %v1536
    %v2057 = vpack.c.b16 %v1545, %v1537
    %v2058 = vpack.c.b16 %v1546, %v1538
    %v2059 = vpack.c.b16 %v1547, %v1539
    %v2060 = vpack.c.b16 %v1548, %v1540
    %v2061 = vpack.c.b16 %v1557, %v1549
    %v2062 = vpack.c.b16 %v1558, %v1550
    %v2063 = vpack.c.b16 %v1559, %v1551
    %v2064 = vpack.c.b16 %v1560, %v1552
    %v2065 = vpack.c.b16 %v1561, %v1553
    %v2066 = vpack.c.b16 %v1562, %v1554
    %v2067 = vpack.c.b16 %v1563, %v1555
    %v2068 = vpack.c.b16 %v1564, %v1556
    %v2069 = vpack.c.b16 %v1573, %v1565
    %v2070 = vpack.c.b16 %v1574, %v1566
    %v2071 = vpack.c.b16 %v1575, %v1567
    %v2072 = vpack.c.b16 %v1576, %v1568
    %v2073 = vpack.c.b16 %v1577, %v1569
    %v2074 = vpack.c.b16 %v1578, %v1570
    %v2075 = vpack.c.b16 %v1579, %v1571
    %v2076 = vpack.c.b16 %v1580, %v1572
    %v2077 = vpack.c.b16 %v1589, %v1581
    %v2078 = vpack.c.b16 %v1590, %v1582
    %v2079 = vpack.c.b16 %v1591, %v1583
    %v2080 = vpack.c.b16 %v1592, %v1584
    %v2081 = vpack.c.b16 %v1593, %v1585
    %v2082 = vpack.c.b16 %v1594, %v1586
    %v2083 = vpack.c.b16 %v1595, %v1587
    %v2084 = vpack.c.b16 %v1596, %v1588
    %v2085 = vpack.c.b16 %v1605, %v1597
    %v2086 = vpack.c.b16 %v1606, %v1598
    %v2087 = vpack.c.b16 %v1607, %v1599
    %v2088 = vpack.c.b16 %v1608, %v1600
    %v2089 = vpack.c.b16 %v1609, %v1601
    %v2090 = vpack.c.b16 %v1610, %v1602
    %v2091 = vpack.c.b16 %v1611, %v1603
    %v2092 = vpack.c.b16 %v1612, %v1604
    %v2093 = vpack.c.b16 %v1621, %v1613
    %v2094 = vpack.c.b16 %v1622, %v1614
    %v2095 = vpack.c.b16 %v1623, %v1615
    %v2096 = vpack.c.b16 %v1624, %v1616
    %v2097 = vpack.c.b16 %v1625, %v1617
    %v2098 = vpack.c.b16 %v1626, %v1618
    %v2099 = vpack.c.b16 %v1627, %v1619
    %v2100 = vpack.c.b16 %v1628, %v1620
    %v2101 = vpack.c.b16 %v1637, %v1629
    %v2102 = vpack.c.b16 %v1638, %v1630
    %v2103 = vpack.c.b16 %v1639, %v1631
    %v2104 = vpack.c.b16 %v1640, %v1632
    %v2105 = vpack.c.b16 %v1641, %v1633
    %v2106 = vpack.c.b16 %v1642, %v1634
    %v2107 = vpack.c.b16 %v1643, %v1635
    %v2108 = vpack.c.b16 %v1644, %v1636
    %v2109 = vpack.c.b16 %v1653, %v1645
    %v2110 = vpack.c.b16 %v1654, %v1646
    %v2111 = vpack.c.b16 %v1655, %v1647
    %v2112 = vpack.c.b16 %v1656, %v1648
    %v2113 = vpack.c.b16 %v1657, %v1649
    %v2114 = vpack.c.b16 %v1658, %v1650
    %v2115 = vpack.c.b16 %v1659, %v1651
    %v2116 = vpack.c.b16 %v1660, %v1652
    %v2117 = vpack.c.b16 %v1669, %v1661
    %v2118 = vpack.c.b16 %v1670, %v1662
    %v2119 = vpack.c.b16 %v1671, %v1663
    %v2120 = vpack.c.b16 %v1672, %v1664
    %v2121 = vpack.c.b16 %v1673, %v1665
    %v2122 = vpack.c.b16 %v1674, %v1666
    %v2123 = vpack.c.b16 %v1675, %v1667
    %v2124 = vpack.c.b16 %v1676, %v1668
    %v2125 = vpack.c.b16 %v1685, %v1677
    %v2126 = vpack.c.b16 %v1686, %v1678
    %v2127 = vpack.c.b16 %v1687, %v1679
    %v2128 = vpack.c.b16 %v1688, %v1680
    %v2129 = vpack.c.b16 %v1689, %v1681
    %v2130 = vpack.c.b16 %v1690, %v1682
    %v2131 = vpack.c.b16 %v1691, %v1683
    %v2132 = vpack.c.b16 %v1692, %v1684
    %v2133 = vpack.c.b16 %v1701, %v1693
    %v2134 = vpack.c.b16 %v1702, %v1694
    %v2135 = vpack.c.b16 %v1703, %v1695
    %v2136 = vpack.c.b16 %v1704, %v1696
    %v2137 = vpack.c.b16 %v1705, %v1697
    %v2138 = vpack.c.b16 %v1706, %v1698
    %v2139 = vpack.c.b16 %v1707, %v1699
    %v2140 = vpack.c.b16 %v1708, %v1700
    %v2141 = vpack.c.b16 %v1717, %v1709
    %v2142 = vpack.c.b16 %v1718, %v1710
    %v2143 = vpack.c.b16 %v1719, %v1711
    %v2144 = vpack.c.b16 %v1720, %v1712
    %v2145 = vpack.c.b16 %v1721, %v1713
    %v2146 = vpack.c.b16 %v1722, %v1714
    %v2147 = vpack.c.b16 %v1723, %v1715
    %v2148 = vpack.c.b16 %v1724, %v1716
    %v2149 = vpack.c.b16 %v1733, %v1725
    %v2150 = vpack.c.b16 %v1734, %v1726
    %v2151 = vpack.c.b16 %v1735, %v1727
    %v2152 = vpack.c.b16 %v1736, %v1728
    %v2153 = vpack.c.b16 %v1737, %v1729
    %v2154 = vpack.c.b16 %v1738, %v1730
    %v2155 = vpack.c.b16 %v1739, %v1731
    %v2156 = vpack.c.b16 %v1740, %v1732
    %v2157 = vpack.c.b16 %v1749, %v1741
    %v2158 = vpack.c.b16 %v1750, %v1742
    %v2159 = vpack.c.b16 %v1751, %v1743
    %v2160 = vpack.c.b16 %v1752, %v1744
    %v2161 = vpack.c.b16 %v1753, %v1745
    %v2162 = vpack.c.b16 %v1754, %v1746
    %v2163 = vpack.c.b16 %v1755, %v1747
    %v2164 = vpack.c.b16 %v1756, %v1748
    %v2165 = vpack.c.b16 %v1765, %v1757
    %v2166 = vpack.c.b16 %v1766, %v1758
    %v2167 = vpack.c.b16 %v1767, %v1759
    %v2168 = vpack.c.b16 %v1768, %v1760
    %v2169 = vpack.c.b16 %v1769, %v1761
    %v2170 = vpack.c.b16 %v1770, %v1762
    %v2171 = vpack.c.b16 %v1771, %v1763
    %v2172 = vpack.c.b16 %v1772, %v1764
    %v2173 = vpack.c.b16 %v1781, %v1773
    %v2174 = vpack.c.b16 %v1782, %v1774
    %v2175 = vpack.c.b16 %v1783, %v1775
    %v2176 = vpack.c.b16 %v1784, %v1776
    %v2177 = vpack.c.b16 %v1785, %v1777
    %v2178 = vpack.c.b16 %v1786, %v1778
    %v2179 = vpack.c.b16 %v1787, %v1779
    %v2180 = vpack.c.b16 %v1788, %v1780
    %vm2573 = vcmask 130048
    %v2575 = vsel %vm2573, %v606, 0
    %2577 = vmatprep.subr.bf16.mxu0 %v1790
    %2578 = vmatpush1.bf16.msra.mxu0 %v1789
    %2579 = vmatprep.subr.bf16.mxu0 %v1798
    %2580 = vmatpush1.bf16.msra.mxu0 %v1797
    %2581 = vmatprep.subr.bf16.mxu0 %v1806
    %2582 = vmatpush1.bf16.msra.mxu0 %v1805
    %2583 = vmatprep.subr.bf16.mxu0 %v1814
    %2584 = vmatpush1.bf16.msra.mxu0 %v1813
    %2585 = vmatprep.subr.bf16.mxu0 %v1822
    %2586 = vmatpush1.bf16.msra.mxu0 %v1821
    %2587 = vmatprep.subr.bf16.mxu0 %v1830
    %2588 = vmatpush1.bf16.msra.mxu0 %v1829
    %2589 = vmatprep.subr.bf16.mxu0 %v1838
    %2590 = vmatpush1.bf16.msra.mxu0 %v1837
    %2591 = vmatprep.subr.bf16.mxu0 %v1846
    %2592 = vmatpush1.bf16.msra.mxu0 %v1845
    %2593 = vmatprep.subr.bf16.mxu0 %v1854
    %2594 = vmatpush1.bf16.msra.mxu0 %v1853
    %2595 = vmatprep.subr.bf16.mxu0 %v1862
    %2596 = vmatpush1.bf16.msra.mxu0 %v1861
    %2597 = vmatprep.subr.bf16.mxu0 %v1870
    %2598 = vmatpush1.bf16.msra.mxu0 %v1869
    %2599 = vmatprep.subr.bf16.mxu0 %v1878
    %2600 = vmatpush1.bf16.msra.mxu0 %v1877
    %2601 = vmatprep.subr.bf16.mxu0 %v1886
    %2602 = vmatpush1.bf16.msra.mxu0 %v1885
    %2603 = vmatprep.subr.bf16.mxu0 %v1894
    %2604 = vmatpush1.bf16.msra.mxu0 %v1893
    %2605 = vmatprep.subr.bf16.mxu0 %v1902
    %2606 = vmatpush1.bf16.msra.mxu0 %v1901
    %2607 = vmatprep.subr.bf16.mxu0 %v1910
    %2608 = vmatpush1.bf16.msra.mxu0 %v1909
    %2609 = vmatprep.mubr.bf16.mxu0 %v601
    %2610 = vmatmul.mubr.bf16.gmra.mrb[0].mxu0 %v600
    %v2611 = vpop.f32.mrb[0].mxu0
    %v2612 = vadd.f32 %v541, %v2611
    %v2613 = vpop.f32.mrb[0].mxu0
    %v2614 = vadd.f32 %v545, %v2613
    %v2615 = vpop.f32.mrb[0].mxu0
    %v2616 = vadd.f32 %v541, %v2615
    %v2617 = vpop.f32.mrb[0].mxu0
    %v2618 = vadd.f32 %v545, %v2617
    %2619 = vdwg.mxu0
    %2620 = vmatprep.subr.bf16.mxu0 %v1918
    %2621 = vmatpush1.bf16.msra.mxu0 %v1917
    %2622 = vmatprep.subr.bf16.mxu0 %v1926
    %2623 = vmatpush1.bf16.msra.mxu0 %v1925
    %2624 = vmatprep.subr.bf16.mxu0 %v1934
    %2625 = vmatpush1.bf16.msra.mxu0 %v1933
    %2626 = vmatprep.subr.bf16.mxu0 %v1942
    %2627 = vmatpush1.bf16.msra.mxu0 %v1941
    %2628 = vmatprep.subr.bf16.mxu0 %v1950
    %2629 = vmatpush1.bf16.msra.mxu0 %v1949
    %2630 = vmatprep.subr.bf16.mxu0 %v1958
    %2631 = vmatpush1.bf16.msra.mxu0 %v1957
    %2632 = vmatprep.subr.bf16.mxu0 %v1966
    %2633 = vmatpush1.bf16.msra.mxu0 %v1965
    %2634 = vmatprep.subr.bf16.mxu0 %v1974
    %2635 = vmatpush1.bf16.msra.mxu0 %v1973
    %2636 = vmatprep.subr.bf16.mxu0 %v1982
    %2637 = vmatpush1.bf16.msra.mxu0 %v1981
    %2638 = vmatprep.subr.bf16.mxu0 %v1990
    %2639 = vmatpush1.bf16.msra.mxu0 %v1989
    %2640 = vmatprep.subr.bf16.mxu0 %v1998
    %2641 = vmatpush1.bf16.msra.mxu0 %v1997
    %2642 = vmatprep.subr.bf16.mxu0 %v2006
    %2643 = vmatpush1.bf16.msra.mxu0 %v2005
    %2644 = vmatprep.subr.bf16.mxu0 %v2014
    %2645 = vmatpush1.bf16.msra.mxu0 %v2013
    %2646 = vmatprep.subr.bf16.mxu0 %v2022
    %2647 = vmatpush1.bf16.msra.mxu0 %v2021
    %2648 = vmatprep.subr.bf16.mxu0 %v2030
    %2649 = vmatpush1.bf16.msra.mxu0 %v2029
    %2650 = vmatprep.subr.bf16.mxu0 %v2038
    %2651 = vmatpush1.bf16.msra.mxu0 %v2037
    %2652 = vmatprep.mubr.bf16.mxu0 %v603
    %2653 = vmatmul.mubr.bf16.gmra.mrb[0].mxu0 %v602
    %v2654 = vpop.f32.mrb[0].mxu0
    %v2655 = vadd.f32 %v2612, %v2654
    %v2656 = vpop.f32.mrb[0].mxu0
    %v2657 = vadd.f32 %v2614, %v2656
    %v2658 = vpop.f32.mrb[0].mxu0
    %v2659 = vadd.f32 %v2616, %v2658
    %v2660 = vpop.f32.mrb[0].mxu0
    %v2661 = vadd.f32 %v2618, %v2660
    %2662 = vdwg.mxu0
    %2663 = vmatprep.subr.bf16.mxu0 %v2046
    %2664 = vmatpush1.bf16.msra.mxu0 %v2045
    %2665 = vmatprep.subr.bf16.mxu0 %v2054
    %2666 = vmatpush1.bf16.msra.mxu0 %v2053
    %2667 = vmatprep.subr.bf16.mxu0 %v2062
    %2668 = vmatpush1.bf16.msra.mxu0 %v2061
    %2669 = vmatprep.subr.bf16.mxu0 %v2070
    %2670 = vmatpush1.bf16.msra.mxu0 %v2069
    %2671 = vmatprep.subr.bf16.mxu0 %v2078
    %2672 = vmatpush1.bf16.msra.mxu0 %v2077
    %2673 = vmatprep.subr.bf16.mxu0 %v2086
    %2674 = vmatpush1.bf16.msra.mxu0 %v2085
    %2675 = vmatprep.subr.bf16.mxu0 %v2094
    %2676 = vmatpush1.bf16.msra.mxu0 %v2093
    %2677 = vmatprep.subr.bf16.mxu0 %v2102
    %2678 = vmatpush1.bf16.msra.mxu0 %v2101
    %2679 = vmatprep.subr.bf16.mxu0 %v2110
    %2680 = vmatpush1.bf16.msra.mxu0 %v2109
    %2681 = vmatprep.subr.bf16.mxu0 %v2118
    %2682 = vmatpush1.bf16.msra.mxu0 %v2117
    %2683 = vmatprep.subr.bf16.mxu0 %v2126
    %2684 = vmatpush1.bf16.msra.mxu0 %v2125
    %2685 = vmatprep.subr.bf16.mxu0 %v2134
    %2686 = vmatpush1.bf16.msra.mxu0 %v2133
    %2687 = vmatprep.subr.bf16.mxu0 %v2142
    %2688 = vmatpush1.bf16.msra.mxu0 %v2141
    %2689 = vmatprep.subr.bf16.mxu0 %v2150
    %2690 = vmatpush1.bf16.msra.mxu0 %v2149
    %2691 = vmatprep.subr.bf16.mxu0 %v2158
    %2692 = vmatpush1.bf16.msra.mxu0 %v2157
    %2693 = vmatprep.subr.bf16.mxu0 %v2166
    %2694 = vmatpush1.bf16.msra.mxu0 %v2165
    %2695 = vmatprep.mubr.bf16.mxu0 %v605
    %2696 = vmatmul.mubr.bf16.gmra.mrb[0].mxu0 %v604
    %v2697 = vpop.f32.mrb[0].mxu0
    %v2698 = vadd.f32 %v2655, %v2697
    %v2699 = vpop.f32.mrb[0].mxu0
    %v2700 = vadd.f32 %v2657, %v2699
    %v2701 = vpop.f32.mrb[0].mxu0
    %v2702 = vadd.f32 %v2659, %v2701
    %v2703 = vpop.f32.mrb[0].mxu0
    %v2704 = vadd.f32 %v2661, %v2703
    %2705 = vdwg.mxu0
    %2706 = vmatprep.subr.bf16.mxu0 %v2174
    %2707 = vmatpush1.bf16.msra.mxu0 %v2173
    %2708 = vmatprep.subr.bf16.mxu0 0
    %2709 = vmatpush1.bf16.msra.mxu0 0
    %2710 = vmatprep.subr.bf16.mxu0 0
    %2711 = vmatpush1.bf16.msra.mxu0 0
    %2712 = vmatprep.subr.bf16.mxu0 0
    %2713 = vmatpush1.bf16.msra.mxu0 0
    %2714 = vmatprep.subr.bf16.mxu0 0
    %2715 = vmatpush1.bf16.msra.mxu0 0
    %2716 = vmatprep.subr.bf16.mxu0 0
    %2717 = vmatpush1.bf16.msra.mxu0 0
    %2718 = vmatprep.subr.bf16.mxu0 0
    %2719 = vmatpush1.bf16.msra.mxu0 0
    %2720 = vmatprep.subr.bf16.mxu0 0
    %2721 = vmatpush1.bf16.msra.mxu0 0
    %2722 = vmatprep.subr.bf16.mxu0 0
    %2723 = vmatpush1.bf16.msra.mxu0 0
    %2724 = vmatprep.subr.bf16.mxu0 0
    %2725 = vmatpush1.bf16.msra.mxu0 0
    %2726 = vmatprep.subr.bf16.mxu0 0
    %2727 = vmatpush1.bf16.msra.mxu0 0
    %2728 = vmatprep.subr.bf16.mxu0 0
    %2729 = vmatpush1.bf16.msra.mxu0 0
    %2730 = vmatprep.subr.bf16.mxu0 0
    %2731 = vmatpush1.bf16.msra.mxu0 0
    %2732 = vmatprep.subr.bf16.mxu0 0
    %2733 = vmatpush1.bf16.msra.mxu0 0
    %2734 = vmatprep.subr.bf16.mxu0 0
    %2735 = vmatpush1.bf16.msra.mxu0 0
    %2736 = vmatprep.subr.bf16.mxu0 0
    %2737 = vmatpush1.bf16.msra.mxu0 0
    %2738 = vmatprep.mubr.bf16.mxu0 0
    %2739 = vmatmul.mubr.bf16.gmra.mrb[0].mxu0 %v2575
    %v2740 = vpop.f32.mrb[0].mxu0
    %v2741 = vadd.f32 %v2698, %v2740
    %v2742 = vpop.f32.mrb[0].mxu0
    %v2743 = vadd.f32 %v2700, %v2742
    %v2744 = vpop.f32.mrb[0].mxu0
    %v2745 = vadd.f32 %v2702, %v2744
    %v2746 = vpop.f32.mrb[0].mxu0
    %v2747 = vadd.f32 %v2704, %v2746
    %2748 = vdwg.mxu0
    %2749 = vmatprep.subr.bf16.mxu0 %v1792
    %2750 = vmatpush1.bf16.msra.mxu0 %v1791
    %2751 = vmatprep.subr.bf16.mxu0 %v1800
    %2752 = vmatpush1.bf16.msra.mxu0 %v1799
    %2753 = vmatprep.subr.bf16.mxu0 %v1808
    %2754 = vmatpush1.bf16.msra.mxu0 %v1807
    %2755 = vmatprep.subr.bf16.mxu0 %v1816
    %2756 = vmatpush1.bf16.msra.mxu0 %v1815
    %2757 = vmatprep.subr.bf16.mxu0 %v1824
    %2758 = vmatpush1.bf16.msra.mxu0 %v1823
    %2759 = vmatprep.subr.bf16.mxu0 %v1832
    %2760 = vmatpush1.bf16.msra.mxu0 %v1831
    %2761 = vmatprep.subr.bf16.mxu0 %v1840
    %2762 = vmatpush1.bf16.msra.mxu0 %v1839
    %2763 = vmatprep.subr.bf16.mxu0 %v1848
    %2764 = vmatpush1.bf16.msra.mxu0 %v1847
    %2765 = vmatprep.subr.bf16.mxu0 %v1856
    %2766 = vmatpush1.bf16.msra.mxu0 %v1855
    %2767 = vmatprep.subr.bf16.mxu0 %v1864
    %2768 = vmatpush1.bf16.msra.mxu0 %v1863
    %2769 = vmatprep.subr.bf16.mxu0 %v1872
    %2770 = vmatpush1.bf16.msra.mxu0 %v1871
    %2771 = vmatprep.subr.bf16.mxu0 %v1880
    %2772 = vmatpush1.bf16.msra.mxu0 %v1879
    %2773 = vmatprep.subr.bf16.mxu0 %v1888
    %2774 = vmatpush1.bf16.msra.mxu0 %v1887
    %2775 = vmatprep.subr.bf16.mxu0 %v1896
    %2776 = vmatpush1.bf16.msra.mxu0 %v1895
    %2777 = vmatprep.subr.bf16.mxu0 %v1904
    %2778 = vmatpush1.bf16.msra.mxu0 %v1903
    %2779 = vmatprep.subr.bf16.mxu0 %v1912
    %2780 = vmatpush1.bf16.msra.mxu0 %v1911
    %2781 = vmatprep.mubr.bf16.mxu0 %v601
    %2782 = vmatmul.mubr.bf16.gmra.mrb[0].mxu0 %v600
    %v2783 = vpop.f32.mrb[0].mxu0
    %v2784 = vadd.f32 %v549, %v2783
    %v2785 = vpop.f32.mrb[0].mxu0
    %v2786 = vadd.f32 %v553, %v2785
    %v2787 = vpop.f32.mrb[0].mxu0
    %v2788 = vadd.f32 %v549, %v2787
    %v2789 = vpop.f32.mrb[0].mxu0
    %v2790 = vadd.f32 %v553, %v2789
    %2791 = vdwg.mxu0
    %2792 = vmatprep.subr.bf16.mxu0 %v1920
    %2793 = vmatpush1.bf16.msra.mxu0 %v1919
    %2794 = vmatprep.subr.bf16.mxu0 %v1928
    %2795 = vmatpush1.bf16.msra.mxu0 %v1927
    %2796 = vmatprep.subr.bf16.mxu0 %v1936
    %2797 = vmatpush1.bf16.msra.mxu0 %v1935
    %2798 = vmatprep.subr.bf16.mxu0 %v1944
    %2799 = vmatpush1.bf16.msra.mxu0 %v1943
    %2800 = vmatprep.subr.bf16.mxu0 %v1952
    %2801 = vmatpush1.bf16.msra.mxu0 %v1951
    %2802 = vmatprep.subr.bf16.mxu0 %v1960
    %2803 = vmatpush1.bf16.msra.mxu0 %v1959
    %2804 = vmatprep.subr.bf16.mxu0 %v1968
    %2805 = vmatpush1.bf16.msra.mxu0 %v1967
    %2806 = vmatprep.subr.bf16.mxu0 %v1976
    %2807 = vmatpush1.bf16.msra.mxu0 %v1975
    %2808 = vmatprep.subr.bf16.mxu0 %v1984
    %2809 = vmatpush1.bf16.msra.mxu0 %v1983
    %2810 = vmatprep.subr.bf16.mxu0 %v1992
    %2811 = vmatpush1.bf16.msra.mxu0 %v1991
    %2812 = vmatprep.subr.bf16.mxu0 %v2000
    %2813 = vmatpush1.bf16.msra.mxu0 %v1999
    %2814 = vmatprep.subr.bf16.mxu0 %v2008
    %2815 = vmatpush1.bf16.msra.mxu0 %v2007
    %2816 = vmatprep.subr.bf16.mxu0 %v2016
    %2817 = vmatpush1.bf16.msra.mxu0 %v2015
    %2818 = vmatprep.subr.bf16.mxu0 %v2024
    %2819 = vmatpush1.bf16.msra.mxu0 %v2023
    %2820 = vmatprep.subr.bf16.mxu0 %v2032
    %2821 = vmatpush1.bf16.msra.mxu0 %v2031
    %2822 = vmatprep.subr.bf16.mxu0 %v2040
    %2823 = vmatpush1.bf16.msra.mxu0 %v2039
    %2824 = vmatprep.mubr.bf16.mxu0 %v603
    %2825 = vmatmul.mubr.bf16.gmra.mrb[0].mxu0 %v602
    %v2826 = vpop.f32.mrb[0].mxu0
    %v2827 = vadd.f32 %v2784, %v2826
    %v2828 = vpop.f32.mrb[0].mxu0
    %v2829 = vadd.f32 %v2786, %v2828
    %v2830 = vpop.f32.mrb[0].mxu0
    %v2831 = vadd.f32 %v2788, %v2830
    %v2832 = vpop.f32.mrb[0].mxu0
    %v2833 = vadd.f32 %v2790, %v2832
    %2834 = vdwg.mxu0
    %2835 = vmatprep.subr.bf16.mxu0 %v2048
    %2836 = vmatpush1.bf16.msra.mxu0 %v2047
    %2837 = vmatprep.subr.bf16.mxu0 %v2056
    %2838 = vmatpush1.bf16.msra.mxu0 %v2055
    %2839 = vmatprep.subr.bf16.mxu0 %v2064
    %2840 = vmatpush1.bf16.msra.mxu0 %v2063
    %2841 = vmatprep.subr.bf16.mxu0 %v2072
    %2842 = vmatpush1.bf16.msra.mxu0 %v2071
    %2843 = vmatprep.subr.bf16.mxu0 %v2080
    %2844 = vmatpush1.bf16.msra.mxu0 %v2079
    %2845 = vmatprep.subr.bf16.mxu0 %v2088
    %2846 = vmatpush1.bf16.msra.mxu0 %v2087
    %2847 = vmatprep.subr.bf16.mxu0 %v2096
    %2848 = vmatpush1.bf16.msra.mxu0 %v2095
    %2849 = vmatprep.subr.bf16.mxu0 %v2104
    %2850 = vmatpush1.bf16.msra.mxu0 %v2103
    %2851 = vmatprep.subr.bf16.mxu0 %v2112
    %2852 = vmatpush1.bf16.msra.mxu0 %v2111
    %2853 = vmatprep.subr.bf16.mxu0 %v2120
    %2854 = vmatpush1.bf16.msra.mxu0 %v2119
    %2855 = vmatprep.subr.bf16.mxu0 %v2128
    %2856 = vmatpush1.bf16.msra.mxu0 %v2127
    %2857 = vmatprep.subr.bf16.mxu0 %v2136
    %2858 = vmatpush1.bf16.msra.mxu0 %v2135
    %2859 = vmatprep.subr.bf16.mxu0 %v2144
    %2860 = vmatpush1.bf16.msra.mxu0 %v2143
    %2861 = vmatprep.subr.bf16.mxu0 %v2152
    %2862 = vmatpush1.bf16.msra.mxu0 %v2151
    %2863 = vmatprep.subr.bf16.mxu0 %v2160
    %2864 = vmatpush1.bf16.msra.mxu0 %v2159
    %2865 = vmatprep.subr.bf16.mxu0 %v2168
    %2866 = vmatpush1.bf16.msra.mxu0 %v2167
    %2867 = vmatprep.mubr.bf16.mxu0 %v605
    %2868 = vmatmul.mubr.bf16.gmra.mrb[0].mxu0 %v604
    %v2869 = vpop.f32.mrb[0].mxu0
    %v2870 = vadd.f32 %v2827, %v2869
    %v2871 = vpop.f32.mrb[0].mxu0
    %v2872 = vadd.f32 %v2829, %v2871
    %v2873 = vpop.f32.mrb[0].mxu0
    %v2874 = vadd.f32 %v2831, %v2873
    %v2875 = vpop.f32.mrb[0].mxu0
    %v2876 = vadd.f32 %v2833, %v2875
    %2877 = vdwg.mxu0
    %2878 = vmatprep.subr.bf16.mxu0 %v2176
    %2879 = vmatpush1.bf16.msra.mxu0 %v2175
    %2880 = vmatprep.subr.bf16.mxu0 0
    %2881 = vmatpush1.bf16.msra.mxu0 0
    %2882 = vmatprep.subr.bf16.mxu0 0
    %2883 = vmatpush1.bf16.msra.mxu0 0
    %2884 = vmatprep.subr.bf16.mxu0 0
    %2885 = vmatpush1.bf16.msra.mxu0 0
    %2886 = vmatprep.subr.bf16.mxu0 0
    %2887 = vmatpush1.bf16.msra.mxu0 0
    %2888 = vmatprep.subr.bf16.mxu0 0
    %2889 = vmatpush1.bf16.msra.mxu0 0
    %2890 = vmatprep.subr.bf16.mxu0 0
    %2891 = vmatpush1.bf16.msra.mxu0 0
    %2892 = vmatprep.subr.bf16.mxu0 0
    %2893 = vmatpush1.bf16.msra.mxu0 0
    %2894 = vmatprep.subr.bf16.mxu0 0
    %2895 = vmatpush1.bf16.msra.mxu0 0
    %2896 = vmatprep.subr.bf16.mxu0 0
    %2897 = vmatpush1.bf16.msra.mxu0 0
    %2898 = vmatprep.subr.bf16.mxu0 0
    %2899 = vmatpush1.bf16.msra.mxu0 0
    %2900 = vmatprep.subr.bf16.mxu0 0
    %2901 = vmatpush1.bf16.msra.mxu0 0
    %2902 = vmatprep.subr.bf16.mxu0 0
    %2903 = vmatpush1.bf16.msra.mxu0 0
    %2904 = vmatprep.subr.bf16.mxu0 0
    %2905 = vmatpush1.bf16.msra.mxu0 0
    %2906 = vmatprep.subr.bf16.mxu0 0
    %2907 = vmatpush1.bf16.msra.mxu0 0
    %2908 = vmatprep.subr.bf16.mxu0 0
    %2909 = vmatpush1.bf16.msra.mxu0 0
    %2910 = vmatprep.mubr.bf16.mxu0 0
    %2911 = vmatmul.mubr.bf16.gmra.mrb[0].mxu0 %v2575
    %v2912 = vpop.f32.mrb[0].mxu0
    %v2913 = vadd.f32 %v2870, %v2912
    %v2914 = vpop.f32.mrb[0].mxu0
    %v2915 = vadd.f32 %v2872, %v2914
    %v2916 = vpop.f32.mrb[0].mxu0
    %v2917 = vadd.f32 %v2874, %v2916
    %v2918 = vpop.f32.mrb[0].mxu0
    %v2919 = vadd.f32 %v2876, %v2918
    %2920 = vdwg.mxu0
    %2921 = vmatprep.subr.bf16.mxu0 %v1794
    %2922 = vmatpush1.bf16.msra.mxu0 %v1793
    %2923 = vmatprep.subr.bf16.mxu0 %v1802
    %2924 = vmatpush1.bf16.msra.mxu0 %v1801
    %2925 = vmatprep.subr.bf16.mxu0 %v1810
    %2926 = vmatpush1.bf16.msra.mxu0 %v1809
    %2927 = vmatprep.subr.bf16.mxu0 %v1818
    %2928 = vmatpush1.bf16.msra.mxu0 %v1817
    %2929 = vmatprep.subr.bf16.mxu0 %v1826
    %2930 = vmatpush1.bf16.msra.mxu0 %v1825
    %2931 = vmatprep.subr.bf16.mxu0 %v1834
    %2932 = vmatpush1.bf16.msra.mxu0 %v1833
    %2933 = vmatprep.subr.bf16.mxu0 %v1842
    %2934 = vmatpush1.bf16.msra.mxu0 %v1841
    %2935 = vmatprep.subr.bf16.mxu0 %v1850
    %2936 = vmatpush1.bf16.msra.mxu0 %v1849
    %2937 = vmatprep.subr.bf16.mxu0 %v1858
    %2938 = vmatpush1.bf16.msra.mxu0 %v1857
    %2939 = vmatprep.subr.bf16.mxu0 %v1866
    %2940 = vmatpush1.bf16.msra.mxu0 %v1865
    %2941 = vmatprep.subr.bf16.mxu0 %v1874
    %2942 = vmatpush1.bf16.msra.mxu0 %v1873
    %2943 = vmatprep.subr.bf16.mxu0 %v1882
    %2944 = vmatpush1.bf16.msra.mxu0 %v1881
    %2945 = vmatprep.subr.bf16.mxu0 %v1890
    %2946 = vmatpush1.bf16.msra.mxu0 %v1889
    %2947 = vmatprep.subr.bf16.mxu0 %v1898
    %2948 = vmatpush1.bf16.msra.mxu0 %v1897
    %2949 = vmatprep.subr.bf16.mxu0 %v1906
    %2950 = vmatpush1.bf16.msra.mxu0 %v1905
    %2951 = vmatprep.subr.bf16.mxu0 %v1914
    %2952 = vmatpush1.bf16.msra.mxu0 %v1913
    %2953 = vmatprep.mubr.bf16.mxu0 %v601
    %2954 = vmatmul.mubr.bf16.gmra.mrb[0].mxu0 %v600
    %v2955 = vpop.f32.mrb[0].mxu0
    %v2956 = vadd.f32 %v557, %v2955
    %v2957 = vpop.f32.mrb[0].mxu0
    %v2958 = vadd.f32 %v561, %v2957
    %v2959 = vpop.f32.mrb[0].mxu0
    %v2960 = vadd.f32 %v557, %v2959
    %v2961 = vpop.f32.mrb[0].mxu0
    %v2962 = vadd.f32 %v561, %v2961
    %2963 = vdwg.mxu0
    %2964 = vmatprep.subr.bf16.mxu0 %v1922
    %2965 = vmatpush1.bf16.msra.mxu0 %v1921
    %2966 = vmatprep.subr.bf16.mxu0 %v1930
    %2967 = vmatpush1.bf16.msra.mxu0 %v1929
    %2968 = vmatprep.subr.bf16.mxu0 %v1938
    %2969 = vmatpush1.bf16.msra.mxu0 %v1937
    %2970 = vmatprep.subr.bf16.mxu0 %v1946
    %2971 = vmatpush1.bf16.msra.mxu0 %v1945
    %2972 = vmatprep.subr.bf16.mxu0 %v1954
    %2973 = vmatpush1.bf16.msra.mxu0 %v1953
    %2974 = vmatprep.subr.bf16.mxu0 %v1962
    %2975 = vmatpush1.bf16.msra.mxu0 %v1961
    %2976 = vmatprep.subr.bf16.mxu0 %v1970
    %2977 = vmatpush1.bf16.msra.mxu0 %v1969
    %2978 = vmatprep.subr.bf16.mxu0 %v1978
    %2979 = vmatpush1.bf16.msra.mxu0 %v1977
    %2980 = vmatprep.subr.bf16.mxu0 %v1986
    %2981 = vmatpush1.bf16.msra.mxu0 %v1985
    %2982 = vmatprep.subr.bf16.mxu0 %v1994
    %2983 = vmatpush1.bf16.msra.mxu0 %v1993
    %2984 = vmatprep.subr.bf16.mxu0 %v2002
    %2985 = vmatpush1.bf16.msra.mxu0 %v2001
    %2986 = vmatprep.subr.bf16.mxu0 %v2010
    %2987 = vmatpush1.bf16.msra.mxu0 %v2009
    %2988 = vmatprep.subr.bf16.mxu0 %v2018
    %2989 = vmatpush1.bf16.msra.mxu0 %v2017
    %2990 = vmatprep.subr.bf16.mxu0 %v2026
    %2991 = vmatpush1.bf16.msra.mxu0 %v2025
    %2992 = vmatprep.subr.bf16.mxu0 %v2034
    %2993 = vmatpush1.bf16.msra.mxu0 %v2033
    %2994 = vmatprep.subr.bf16.mxu0 %v2042
    %2995 = vmatpush1.bf16.msra.mxu0 %v2041
    %2996 = vmatprep.mubr.bf16.mxu0 %v603
    %2997 = vmatmul.mubr.bf16.gmra.mrb[0].mxu0 %v602
    %v2998 = vpop.f32.mrb[0].mxu0
    %v2999 = vadd.f32 %v2956, %v2998
    %v3000 = vpop.f32.mrb[0].mxu0
    %v3001 = vadd.f32 %v2958, %v3000
    %v3002 = vpop.f32.mrb[0].mxu0
    %v3003 = vadd.f32 %v2960, %v3002
    %v3004 = vpop.f32.mrb[0].mxu0
    %v3005 = vadd.f32 %v2962, %v3004
    %3006 = vdwg.mxu0
    %3007 = vmatprep.subr.bf16.mxu0 %v2050
    %3008 = vmatpush1.bf16.msra.mxu0 %v2049
    %3009 = vmatprep.subr.bf16.mxu0 %v2058
    %3010 = vmatpush1.bf16.msra.mxu0 %v2057
    %3011 = vmatprep.subr.bf16.mxu0 %v2066
    %3012 = vmatpush1.bf16.msra.mxu0 %v2065
    %3013 = vmatprep.subr.bf16.mxu0 %v2074
    %3014 = vmatpush1.bf16.msra.mxu0 %v2073
    %3015 = vmatprep.subr.bf16.mxu0 %v2082
    %3016 = vmatpush1.bf16.msra.mxu0 %v2081
    %3017 = vmatprep.subr.bf16.mxu0 %v2090
    %3018 = vmatpush1.bf16.msra.mxu0 %v2089
    %3019 = vmatprep.subr.bf16.mxu0 %v2098
    %3020 = vmatpush1.bf16.msra.mxu0 %v2097
    %3021 = vmatprep.subr.bf16.mxu0 %v2106
    %3022 = vmatpush1.bf16.msra.mxu0 %v2105
    %3023 = vmatprep.subr.bf16.mxu0 %v2114
    %3024 = vmatpush1.bf16.msra.mxu0 %v2113
    %3025 = vmatprep.subr.bf16.mxu0 %v2122
    %3026 = vmatpush1.bf16.msra.mxu0 %v2121
    %3027 = vmatprep.subr.bf16.mxu0 %v2130
    %3028 = vmatpush1.bf16.msra.mxu0 %v2129
    %3029 = vmatprep.subr.bf16.mxu0 %v2138
    %3030 = vmatpush1.bf16.msra.mxu0 %v2137
    %3031 = vmatprep.subr.bf16.mxu0 %v2146
    %3032 = vmatpush1.bf16.msra.mxu0 %v2145
    %3033 = vmatprep.subr.bf16.mxu0 %v2154
    %3034 = vmatpush1.bf16.msra.mxu0 %v2153
    %3035 = vmatprep.subr.bf16.mxu0 %v2162
    %3036 = vmatpush1.bf16.msra.mxu0 %v2161
    %3037 = vmatprep.subr.bf16.mxu0 %v2170
    %3038 = vmatpush1.bf16.msra.mxu0 %v2169
    %3039 = vmatprep.mubr.bf16.mxu0 %v605
    %3040 = vmatmul.mubr.bf16.gmra.mrb[0].mxu0 %v604
    %v3041 = vpop.f32.mrb[0].mxu0
    %v3042 = vadd.f32 %v2999, %v3041
    %v3043 = vpop.f32.mrb[0].mxu0
    %v3044 = vadd.f32 %v3001, %v3043
    %v3045 = vpop.f32.mrb[0].mxu0
    %v3046 = vadd.f32 %v3003, %v3045
    %v3047 = vpop.f32.mrb[0].mxu0
    %v3048 = vadd.f32 %v3005, %v3047
    %3049 = vdwg.mxu0
    %3050 = vmatprep.subr.bf16.mxu0 %v2178
    %3051 = vmatpush1.bf16.msra.mxu0 %v2177
    %3052 = vmatprep.subr.bf16.mxu0 0
    %3053 = vmatpush1.bf16.msra.mxu0 0
    %3054 = vmatprep.subr.bf16.mxu0 0
    %3055 = vmatpush1.bf16.msra.mxu0 0
    %3056 = vmatprep.subr.bf16.mxu0 0
    %3057 = vmatpush1.bf16.msra.mxu0 0
    %3058 = vmatprep.subr.bf16.mxu0 0
    %3059 = vmatpush1.bf16.msra.mxu0 0
    %3060 = vmatprep.subr.bf16.mxu0 0
    %3061 = vmatpush1.bf16.msra.mxu0 0
    %3062 = vmatprep.subr.bf16.mxu0 0
    %3063 = vmatpush1.bf16.msra.mxu0 0
    %3064 = vmatprep.subr.bf16.mxu0 0
    %3065 = vmatpush1.bf16.msra.mxu0 0
    %3066 = vmatprep.subr.bf16.mxu0 0
    %3067 = vmatpush1.bf16.msra.mxu0 0
    %3068 = vmatprep.subr.bf16.mxu0 0
    %3069 = vmatpush1.bf16.msra.mxu0 0
    %3070 = vmatprep.subr.bf16.mxu0 0
    %3071 = vmatpush1.bf16.msra.mxu0 0
    %3072 = vmatprep.subr.bf16.mxu0 0
    %3073 = vmatpush1.bf16.msra.mxu0 0
    %3074 = vmatprep.subr.bf16.mxu0 0
    %3075 = vmatpush1.bf16.msra.mxu0 0
    %3076 = vmatprep.subr.bf16.mxu0 0
    %3077 = vmatpush1.bf16.msra.mxu0 0
    %3078 = vmatprep.subr.bf16.mxu0 0
    %3079 = vmatpush1.bf16.msra.mxu0 0
    %3080 = vmatprep.subr.bf16.mxu0 0
    %3081 = vmatpush1.bf16.msra.mxu0 0
    %3082 = vmatprep.mubr.bf16.mxu0 0
    %3083 = vmatmul.mubr.bf16.gmra.mrb[0].mxu0 %v2575
    %v3084 = vpop.f32.mrb[0].mxu0
    %v3085 = vadd.f32 %v3042, %v3084
    %v3086 = vpop.f32.mrb[0].mxu0
    %v3087 = vadd.f32 %v3044, %v3086
    %v3088 = vpop.f32.mrb[0].mxu0
    %v3089 = vadd.f32 %v3046, %v3088
    %v3090 = vpop.f32.mrb[0].mxu0
    %v3091 = vadd.f32 %v3048, %v3090
    %3092 = vdwg.mxu0
    %3093 = vmatprep.subr.bf16.mxu0 %v1796
    %3094 = vmatpush1.bf16.msra.mxu0 %v1795
    %3095 = vmatprep.subr.bf16.mxu0 %v1804
    %3096 = vmatpush1.bf16.msra.mxu0 %v1803
    %3097 = vmatprep.subr.bf16.mxu0 %v1812
    %3098 = vmatpush1.bf16.msra.mxu0 %v1811
    %3099 = vmatprep.subr.bf16.mxu0 %v1820
    %3100 = vmatpush1.bf16.msra.mxu0 %v1819
    %3101 = vmatprep.subr.bf16.mxu0 %v1828
    %3102 = vmatpush1.bf16.msra.mxu0 %v1827
    %3103 = vmatprep.subr.bf16.mxu0 %v1836
    %3104 = vmatpush1.bf16.msra.mxu0 %v1835
    %3105 = vmatprep.subr.bf16.mxu0 %v1844
    %3106 = vmatpush1.bf16.msra.mxu0 %v1843
    %3107 = vmatprep.subr.bf16.mxu0 %v1852
    %3108 = vmatpush1.bf16.msra.mxu0 %v1851
    %3109 = vmatprep.subr.bf16.mxu0 %v1860
    %3110 = vmatpush1.bf16.msra.mxu0 %v1859
    %3111 = vmatprep.subr.bf16.mxu0 %v1868
    %3112 = vmatpush1.bf16.msra.mxu0 %v1867
    %3113 = vmatprep.subr.bf16.mxu0 %v1876
    %3114 = vmatpush1.bf16.msra.mxu0 %v1875
    %3115 = vmatprep.subr.bf16.mxu0 %v1884
    %3116 = vmatpush1.bf16.msra.mxu0 %v1883
    %3117 = vmatprep.subr.bf16.mxu0 %v1892
    %3118 = vmatpush1.bf16.msra.mxu0 %v1891
    %3119 = vmatprep.subr.bf16.mxu0 %v1900
    %3120 = vmatpush1.bf16.msra.mxu0 %v1899
    %3121 = vmatprep.subr.bf16.mxu0 %v1908
    %3122 = vmatpush1.bf16.msra.mxu0 %v1907
    %3123 = vmatprep.subr.bf16.mxu0 %v1916
    %3124 = vmatpush1.bf16.msra.mxu0 %v1915
    %3125 = vmatprep.mubr.bf16.mxu0 %v601
    %3126 = vmatmul.mubr.bf16.gmra.mrb[0].mxu0 %v600
    %v3127 = vpop.f32.mrb[0].mxu0
    %v3128 = vadd.f32 %v565, %v3127
    %v3129 = vpop.f32.mrb[0].mxu0
    %v3130 = vadd.f32 %v569, %v3129
    %v3131 = vpop.f32.mrb[0].mxu0
    %v3132 = vadd.f32 %v565, %v3131
    %v3133 = vpop.f32.mrb[0].mxu0
    %v3134 = vadd.f32 %v569, %v3133
    %3135 = vdwg.mxu0
    %3136 = vmatprep.subr.bf16.mxu0 %v1924
    %3137 = vmatpush1.bf16.msra.mxu0 %v1923
    %3138 = vmatprep.subr.bf16.mxu0 %v1932
    %3139 = vmatpush1.bf16.msra.mxu0 %v1931
    %3140 = vmatprep.subr.bf16.mxu0 %v1940
    %3141 = vmatpush1.bf16.msra.mxu0 %v1939
    %3142 = vmatprep.subr.bf16.mxu0 %v1948
    %3143 = vmatpush1.bf16.msra.mxu0 %v1947
    %3144 = vmatprep.subr.bf16.mxu0 %v1956
    %3145 = vmatpush1.bf16.msra.mxu0 %v1955
    %3146 = vmatprep.subr.bf16.mxu0 %v1964
    %3147 = vmatpush1.bf16.msra.mxu0 %v1963
    %3148 = vmatprep.subr.bf16.mxu0 %v1972
    %3149 = vmatpush1.bf16.msra.mxu0 %v1971
    %3150 = vmatprep.subr.bf16.mxu0 %v1980
    %3151 = vmatpush1.bf16.msra.mxu0 %v1979
    %3152 = vmatprep.subr.bf16.mxu0 %v1988
    %3153 = vmatpush1.bf16.msra.mxu0 %v1987
    %3154 = vmatprep.subr.bf16.mxu0 %v1996
    %3155 = vmatpush1.bf16.msra.mxu0 %v1995
    %3156 = vmatprep.subr.bf16.mxu0 %v2004
    %3157 = vmatpush1.bf16.msra.mxu0 %v2003
    %3158 = vmatprep.subr.bf16.mxu0 %v2012
    %3159 = vmatpush1.bf16.msra.mxu0 %v2011
    %3160 = vmatprep.subr.bf16.mxu0 %v2020
    %3161 = vmatpush1.bf16.msra.mxu0 %v2019
    %3162 = vmatprep.subr.bf16.mxu0 %v2028
    %3163 = vmatpush1.bf16.msra.mxu0 %v2027
    %3164 = vmatprep.subr.bf16.mxu0 %v2036
    %3165 = vmatpush1.bf16.msra.mxu0 %v2035
    %3166 = vmatprep.subr.bf16.mxu0 %v2044
    %3167 = vmatpush1.bf16.msra.mxu0 %v2043
    %3168 = vmatprep.mubr.bf16.mxu0 %v603
    %3169 = vmatmul.mubr.bf16.gmra.mrb[0].mxu0 %v602
    %v3170 = vpop.f32.mrb[0].mxu0
    %v3171 = vadd.f32 %v3128, %v3170
    %v3172 = vpop.f32.mrb[0].mxu0
    %v3173 = vadd.f32 %v3130, %v3172
    %v3174 = vpop.f32.mrb[0].mxu0
    %v3175 = vadd.f32 %v3132, %v3174
    %v3176 = vpop.f32.mrb[0].mxu0
    %v3177 = vadd.f32 %v3134, %v3176
    %3178 = vdwg.mxu0
    %3179 = vmatprep.subr.bf16.mxu0 %v2052
    %3180 = vmatpush1.bf16.msra.mxu0 %v2051
    %3181 = vmatprep.subr.bf16.mxu0 %v2060
    %3182 = vmatpush1.bf16.msra.mxu0 %v2059
    %3183 = vmatprep.subr.bf16.mxu0 %v2068
    %3184 = vmatpush1.bf16.msra.mxu0 %v2067
    %3185 = vmatprep.subr.bf16.mxu0 %v2076
    %3186 = vmatpush1.bf16.msra.mxu0 %v2075
    %3187 = vmatprep.subr.bf16.mxu0 %v2084
    %3188 = vmatpush1.bf16.msra.mxu0 %v2083
    %3189 = vmatprep.subr.bf16.mxu0 %v2092
    %3190 = vmatpush1.bf16.msra.mxu0 %v2091
    %3191 = vmatprep.subr.bf16.mxu0 %v2100
    %3192 = vmatpush1.bf16.msra.mxu0 %v2099
    %3193 = vmatprep.subr.bf16.mxu0 %v2108
    %3194 = vmatpush1.bf16.msra.mxu0 %v2107
    %3195 = vmatprep.subr.bf16.mxu0 %v2116
    %3196 = vmatpush1.bf16.msra.mxu0 %v2115
    %3197 = vmatprep.subr.bf16.mxu0 %v2124
    %3198 = vmatpush1.bf16.msra.mxu0 %v2123
    %3199 = vmatprep.subr.bf16.mxu0 %v2132
    %3200 = vmatpush1.bf16.msra.mxu0 %v2131
    %3201 = vmatprep.subr.bf16.mxu0 %v2140
    %3202 = vmatpush1.bf16.msra.mxu0 %v2139
    %3203 = vmatprep.subr.bf16.mxu0 %v2148
    %3204 = vmatpush1.bf16.msra.mxu0 %v2147
    %3205 = vmatprep.subr.bf16.mxu0 %v2156
    %3206 = vmatpush1.bf16.msra.mxu0 %v2155
    %3207 = vmatprep.subr.bf16.mxu0 %v2164
    %3208 = vmatpush1.bf16.msra.mxu0 %v2163
    %3209 = vmatprep.subr.bf16.mxu0 %v2172
    %3210 = vmatpush1.bf16.msra.mxu0 %v2171
    %3211 = vmatprep.mubr.bf16.mxu0 %v605
    %3212 = vmatmul.mubr.bf16.gmra.mrb[0].mxu0 %v604
    %v3213 = vpop.f32.mrb[0].mxu0
    %v3214 = vadd.f32 %v3171, %v3213
    %v3215 = vpop.f32.mrb[0].mxu0
    %v3216 = vadd.f32 %v3173, %v3215
    %v3217 = vpop.f32.mrb[0].mxu0
    %v3218 = vadd.f32 %v3175, %v3217
    %v3219 = vpop.f32.mrb[0].mxu0
    %v3220 = vadd.f32 %v3177, %v3219
    %3221 = vdwg.mxu0
    %3222 = vmatprep.subr.bf16.mxu0 %v2180
    %3223 = vmatpush1.bf16.msra.mxu0 %v2179
    %3224 = vmatprep.subr.bf16.mxu0 0
    %3225 = vmatpush1.bf16.msra.mxu0 0
    %3226 = vmatprep.subr.bf16.mxu0 0
    %3227 = vmatpush1.bf16.msra.mxu0 0
    %3228 = vmatprep.subr.bf16.mxu0 0
    %3229 = vmatpush1.bf16.msra.mxu0 0
    %3230 = vmatprep.subr.bf16.mxu0 0
    %3231 = vmatpush1.bf16.msra.mxu0 0
    %3232 = vmatprep.subr.bf16.mxu0 0
    %3233 = vmatpush1.bf16.msra.mxu0 0
    %3234 = vmatprep.subr.bf16.mxu0 0
    %3235 = vmatpush1.bf16.msra.mxu0 0
    %3236 = vmatprep.subr.bf16.mxu0 0
    %3237 = vmatpush1.bf16.msra.mxu0 0
    %3238 = vmatprep.subr.bf16.mxu0 0
    %3239 = vmatpush1.bf16.msra.mxu0 0
    %3240 = vmatprep.subr.bf16.mxu0 0
    %3241 = vmatpush1.bf16.msra.mxu0 0
    %3242 = vmatprep.subr.bf16.mxu0 0
    %3243 = vmatpush1.bf16.msra.mxu0 0
    %3244 = vmatprep.subr.bf16.mxu0 0
    %3245 = vmatpush1.bf16.msra.mxu0 0
    %3246 = vmatprep.subr.bf16.mxu0 0
    %3247 = vmatpush1.bf16.msra.mxu0 0
    %3248 = vmatprep.subr.bf16.mxu0 0
    %3249 = vmatpush1.bf16.msra.mxu0 0
    %3250 = vmatprep.subr.bf16.mxu0 0
    %3251 = vmatpush1.bf16.msra.mxu0 0
    %3252 = vmatprep.subr.bf16.mxu0 0
    %3253 = vmatpush1.bf16.msra.mxu0 0
    %3254 = vmatprep.mubr.bf16.mxu0 0
    %3255 = vmatmul.mubr.bf16.gmra.mrb[0].mxu0 %v2575
    %v3256 = vpop.f32.mrb[0].mxu0
    %v3257 = vadd.f32 %v3214, %v3256
    %v3258 = vpop.f32.mrb[0].mxu0
    %v3259 = vadd.f32 %v3216, %v3258
    %v3260 = vpop.f32.mrb[0].mxu0
    %v3261 = vadd.f32 %v3218, %v3260
    %v3262 = vpop.f32.mrb[0].mxu0
    %v3263 = vadd.f32 %v3220, %v3262
    %3264 = vdwg.mxu0
    %vm3265 = vcmp.gt.f32.partialorder %v2741, 0.0
    %vm3266 = vcmp.gt.f32.partialorder %v2743, 0.0
    %vm3267 = vcmp.gt.f32.partialorder %v2913, 0.0
    %vm3268 = vcmp.gt.f32.partialorder %v2915, 0.0
    %vm3269 = vcmp.gt.f32.partialorder %v3085, 0.0
    %vm3270 = vcmp.gt.f32.partialorder %v3087, 0.0
    %vm3271 = vcmp.gt.f32.partialorder %v3257, 0.0
    %vm3272 = vcmp.gt.f32.partialorder %v3259, 0.0
    %vm3273 = vcmp.gt.f32.partialorder %v2745, 0.0
    %vm3274 = vcmp.gt.f32.partialorder %v2747, 0.0
    %vm3275 = vcmp.gt.f32.partialorder %v2917, 0.0
    %vm3276 = vcmp.gt.f32.partialorder %v2919, 0.0
    %vm3277 = vcmp.gt.f32.partialorder %v3089, 0.0
    %vm3278 = vcmp.gt.f32.partialorder %v3091, 0.0
    %vm3279 = vcmp.gt.f32.partialorder %v3261, 0.0
    %vm3280 = vcmp.gt.f32.partialorder %v3263, 0.0
    %v3281 = vmul.f32 %v2741, 0.2
    %v3282 = vmul.f32 %v2743, 0.2
    %v3283 = vmul.f32 %v2913, 0.2
    %v3284 = vmul.f32 %v2915, 0.2
    %v3285 = vmul.f32 %v3085, 0.2
    %v3286 = vmul.f32 %v3087, 0.2
    %v3287 = vmul.f32 %v3257, 0.2
    %v3288 = vmul.f32 %v3259, 0.2
    %v3289 = vmul.f32 %v2745, 0.2
    %v3290 = vmul.f32 %v2747, 0.2
    %v3291 = vmul.f32 %v2917, 0.2
    %v3292 = vmul.f32 %v2919, 0.2
    %v3293 = vmul.f32 %v3089, 0.2
    %v3294 = vmul.f32 %v3091, 0.2
    %v3295 = vmul.f32 %v3261, 0.2
    %v3296 = vmul.f32 %v3263, 0.2
    %v3297 = vsel %vm3265, %v2741, %v3281
    %v3298 = vsel %vm3266, %v2743, %v3282
    %v3299 = vsel %vm3267, %v2913, %v3283
    %v3300 = vsel %vm3268, %v2915, %v3284
    %v3301 = vsel %vm3269, %v3085, %v3285
    %v3302 = vsel %vm3270, %v3087, %v3286
    %v3303 = vsel %vm3271, %v3257, %v3287
    %v3304 = vsel %vm3272, %v3259, %v3288
    %v3305 = vsel %vm3273, %v2745, %v3289
    %v3306 = vsel %vm3274, %v2747, %v3290
    %v3307 = vsel %vm3275, %v2917, %v3291
    %v3308 = vsel %vm3276, %v2919, %v3292
    %v3309 = vsel %vm3277, %v3089, %v3293
    %v3310 = vsel %vm3278, %v3091, %v3294
    %v3311 = vsel %vm3279, %v3261, %v3295
    %v3312 = vsel %vm3280, %v3263, %v3296
    %v3313 = vpack.c.bf16 %v3305, %v3297
    %v3314 = vpack.c.bf16 %v3306, %v3298
    %v3315 = vpack.c.bf16 %v3307, %v3299
    %v3316 = vpack.c.bf16 %v3308, %v3300
    %v3317 = vpack.c.bf16 %v3309, %v3301
    %v3318 = vpack.c.bf16 %v3310, %v3302
    %v3319 = vpack.c.bf16 %v3311, %v3303
    %v3320 = vpack.c.bf16 %v3312, %v3304
    %v3321 = vld [vmem:[#allocation8] sm:$0xff]
    %v3322 = vld [vmem:[#allocation8 + $0x8] sm:$0xff]
    %v3323 = vld [vmem:[#allocation8 + $0x10] sm:$0xff]
    %v3324 = vld [vmem:[#allocation8 + $0x18] sm:$0xff]
    %v3325 = vld [vmem:[#allocation8 + $0x20] sm:$0xff]
    %v3326 = vld [vmem:[#allocation8 + $0x28] sm:$0xff]
    %v3327 = vld [vmem:[#allocation8 + $0x30] sm:$0xff]
    %v3328 = vld [vmem:[#allocation8 + $0x38] sm:$0xff]
    %v3329 = vld [vmem:[#allocation8 + $0x40] sm:$0xff]
    %v3330 = vld [vmem:[#allocation8 + $0x48] sm:$0xff]
    %v3331 = vld [vmem:[#allocation8 + $0x50] sm:$0xff]
    %v3332 = vld [vmem:[#allocation8 + $0x58] sm:$0xff]
    %v3333 = vld [vmem:[#allocation8 + $0x60] sm:$0xff]
    %v3334 = vld [vmem:[#allocation8 + $0x68] sm:$0xff]
    %v3335 = vld [vmem:[#allocation8 + $0x70] sm:$0xff]
    %v3336 = vld [vmem:[#allocation8 + $0x78] sm:$0xff]
    %v3337 = vld [vmem:[#allocation8 + $0x80] sm:$0xff]
    %v3338 = vld [vmem:[#allocation8 + $0x88] sm:$0xff]
    %v3339 = vld [vmem:[#allocation8 + $0x90] sm:$0xff]
    %v3340 = vld [vmem:[#allocation8 + $0x98] sm:$0xff]
    %v3341 = vld [vmem:[#allocation8 + $0xa0] sm:$0xff]
    %v3342 = vld [vmem:[#allocation8 + $0xa8] sm:$0xff]
    %v3343 = vld [vmem:[#allocation8 + $0xb0] sm:$0xff]
    %v3344 = vld [vmem:[#allocation8 + $0xb8] sm:$0xff]
    %v3345 = vld [vmem:[#allocation8 + $0xc0] sm:$0xff]
    %v3346 = vld [vmem:[#allocation8 + $0xc8] sm:$0xff]
    %v3347 = vld [vmem:[#allocation8 + $0xd0] sm:$0xff]
    %v3348 = vld [vmem:[#allocation8 + $0xd8] sm:$0xff]
    %v3349 = vld [vmem:[#allocation8 + $0xe0] sm:$0xff]
    %v3350 = vld [vmem:[#allocation8 + $0xe8] sm:$0xff]
    %v3351 = vld [vmem:[#allocation8 + $0xf0] sm:$0xff]
    %v3352 = vld [vmem:[#allocation8 + $0xf8] sm:$0xff]
    %v3353 = vld [vmem:[#allocation8 + $0x100] sm:$0xff]
    %v3354 = vld [vmem:[#allocation8 + $0x108] sm:$0xff]
    %v3355 = vld [vmem:[#allocation8 + $0x110] sm:$0xff]
    %v3356 = vld [vmem:[#allocation8 + $0x118] sm:$0xff]
    %v3357 = vld [vmem:[#allocation8 + $0x120] sm:$0xff]
    %v3358 = vld [vmem:[#allocation8 + $0x128] sm:$0xff]
    %v3359 = vld [vmem:[#allocation8 + $0x130] sm:$0xff]
    %v3360 = vld [vmem:[#allocation8 + $0x138] sm:$0xff]
    %v3361 = vld [vmem:[#allocation8 + $0x140] sm:$0xff]
    %v3362 = vld [vmem:[#allocation8 + $0x148] sm:$0xff]
    %v3363 = vld [vmem:[#allocation8 + $0x150] sm:$0xff]
    %v3364 = vld [vmem:[#allocation8 + $0x158] sm:$0xff]
    %v3365 = vld [vmem:[#allocation8 + $0x160] sm:$0xff]
    %v3366 = vld [vmem:[#allocation8 + $0x168] sm:$0xff]
    %v3367 = vld [vmem:[#allocation8 + $0x170] sm:$0xff]
    %v3368 = vld [vmem:[#allocation8 + $0x178] sm:$0xff]
    %v3369 = vld [vmem:[#allocation8 + $0x180] sm:$0xff]
    %v3370 = vld [vmem:[#allocation8 + $0x188] sm:$0xff]
    %v3371 = vld [vmem:[#allocation8 + $0x190] sm:$0xff]
    %v3372 = vld [vmem:[#allocation8 + $0x198] sm:$0xff]
    %v3373 = vld [vmem:[#allocation8 + $0x1a0] sm:$0xff]
    %v3374 = vld [vmem:[#allocation8 + $0x1a8] sm:$0xff]
    %v3375 = vld [vmem:[#allocation8 + $0x1b0] sm:$0xff]
    %v3376 = vld [vmem:[#allocation8 + $0x1b8] sm:$0xff]
    %v3377 = vld [vmem:[#allocation8 + $0x1c0] sm:$0xff]
    %v3378 = vld [vmem:[#allocation8 + $0x1c8] sm:$0xff]
    %v3379 = vld [vmem:[#allocation8 + $0x1d0] sm:$0xff]
    %v3380 = vld [vmem:[#allocation8 + $0x1d8] sm:$0xff]
    %v3381 = vld [vmem:[#allocation8 + $0x1e0] sm:$0xff]
    %v3382 = vld [vmem:[#allocation8 + $0x1e8] sm:$0xff]
    %v3383 = vld [vmem:[#allocation8 + $0x1f0] sm:$0xff]
    %v3384 = vld [vmem:[#allocation8 + $0x1f8] sm:$0xff]
    %v3385 = vld [vmem:[#allocation8 + $0x200] sm:$0xff]
    %v3386 = vld [vmem:[#allocation8 + $0x208] sm:$0xff]
    %v3387 = vld [vmem:[#allocation8 + $0x210] sm:$0xff]
    %v3388 = vld [vmem:[#allocation8 + $0x218] sm:$0xff]
    %v3389 = vld [vmem:[#allocation8 + $0x220] sm:$0xff]
    %v3390 = vld [vmem:[#allocation8 + $0x228] sm:$0xff]
    %v3391 = vld [vmem:[#allocation8 + $0x230] sm:$0xff]
    %v3392 = vld [vmem:[#allocation8 + $0x238] sm:$0xff]
    %v3393 = vld [vmem:[#allocation8 + $0x240] sm:$0xff]
    %v3394 = vld [vmem:[#allocation8 + $0x248] sm:$0xff]
    %v3395 = vld [vmem:[#allocation8 + $0x250] sm:$0xff]
    %v3396 = vld [vmem:[#allocation8 + $0x258] sm:$0xff]
    %v3397 = vld [vmem:[#allocation8 + $0x260] sm:$0xff]
    %v3398 = vld [vmem:[#allocation8 + $0x268] sm:$0xff]
    %v3399 = vld [vmem:[#allocation8 + $0x270] sm:$0xff]
    %v3400 = vld [vmem:[#allocation8 + $0x278] sm:$0xff]
    %v3401 = vld [vmem:[#allocation8 + $0x280] sm:$0xff]
    %v3402 = vld [vmem:[#allocation8 + $0x288] sm:$0xff]
    %v3403 = vld [vmem:[#allocation8 + $0x290] sm:$0xff]
    %v3404 = vld [vmem:[#allocation8 + $0x298] sm:$0xff]
    %v3405 = vld [vmem:[#allocation8 + $0x2a0] sm:$0xff]
    %v3406 = vld [vmem:[#allocation8 + $0x2a8] sm:$0xff]
    %v3407 = vld [vmem:[#allocation8 + $0x2b0] sm:$0xff]
    %v3408 = vld [vmem:[#allocation8 + $0x2b8] sm:$0xff]
    %v3409 = vld [vmem:[#allocation8 + $0x2c0] sm:$0xff]
    %v3410 = vld [vmem:[#allocation8 + $0x2c8] sm:$0xff]
    %v3411 = vld [vmem:[#allocation8 + $0x2d0] sm:$0xff]
    %v3412 = vld [vmem:[#allocation8 + $0x2d8] sm:$0xff]
    %v3413 = vld [vmem:[#allocation8 + $0x2e0] sm:$0xff]
    %v3414 = vld [vmem:[#allocation8 + $0x2e8] sm:$0xff]
    %v3415 = vld [vmem:[#allocation8 + $0x2f0] sm:$0xff]
    %v3416 = vld [vmem:[#allocation8 + $0x2f8] sm:$0xff]
    %v3417 = vld [vmem:[#allocation8 + $0x300] sm:$0xff]
    %v3418 = vld [vmem:[#allocation8 + $0x308] sm:$0xff]
    %v3419 = vld [vmem:[#allocation8 + $0x310] sm:$0xff]
    %v3420 = vld [vmem:[#allocation8 + $0x318] sm:$0xff]
    %v3421 = vld [vmem:[#allocation8 + $0x320] sm:$0xff]
    %v3422 = vld [vmem:[#allocation8 + $0x328] sm:$0xff]
    %v3423 = vld [vmem:[#allocation8 + $0x330] sm:$0xff]
    %v3424 = vld [vmem:[#allocation8 + $0x338] sm:$0xff]
    %v3425 = vld [vmem:[#allocation8 + $0x340] sm:$0xff]
    %v3426 = vld [vmem:[#allocation8 + $0x348] sm:$0xff]
    %v3427 = vld [vmem:[#allocation8 + $0x350] sm:$0xff]
    %v3428 = vld [vmem:[#allocation8 + $0x358] sm:$0xff]
    %v3429 = vld [vmem:[#allocation8 + $0x360] sm:$0xff]
    %v3430 = vld [vmem:[#allocation8 + $0x368] sm:$0xff]
    %v3431 = vld [vmem:[#allocation8 + $0x370] sm:$0xff]
    %v3432 = vld [vmem:[#allocation8 + $0x378] sm:$0xff]
    %v3433 = vld [vmem:[#allocation8 + $0x380] sm:$0xff]
    %v3434 = vld [vmem:[#allocation8 + $0x388] sm:$0xff]
    %v3435 = vld [vmem:[#allocation8 + $0x390] sm:$0xff]
    %v3436 = vld [vmem:[#allocation8 + $0x398] sm:$0xff]
    %v3437 = vld [vmem:[#allocation8 + $0x3a0] sm:$0xff]
    %v3438 = vld [vmem:[#allocation8 + $0x3a8] sm:$0xff]
    %v3439 = vld [vmem:[#allocation8 + $0x3b0] sm:$0xff]
    %v3440 = vld [vmem:[#allocation8 + $0x3b8] sm:$0xff]
    %v3441 = vld [vmem:[#allocation8 + $0x3c0] sm:$0xff]
    %v3442 = vld [vmem:[#allocation8 + $0x3c8] sm:$0xff]
    %v3443 = vld [vmem:[#allocation8 + $0x3d0] sm:$0xff]
    %v3444 = vld [vmem:[#allocation8 + $0x3d8] sm:$0xff]
    %v3445 = vld [vmem:[#allocation8 + $0x3e0] sm:$0xff]
    %v3446 = vld [vmem:[#allocation8 + $0x3e8] sm:$0xff]
    %v3447 = vld [vmem:[#allocation8 + $0x3f0] sm:$0xff]
    %v3448 = vld [vmem:[#allocation8 + $0x3f8] sm:$0xff]
    %v3449 = vld [vmem:[#allocation8 + $0x400] sm:$0xff]
    %v3450 = vld [vmem:[#allocation8 + $0x408] sm:$0xff]
    %v3451 = vld [vmem:[#allocation8 + $0x410] sm:$0xff]
    %v3452 = vld [vmem:[#allocation8 + $0x418] sm:$0xff]
    %v3453 = vld [vmem:[#allocation8 + $0x420] sm:$0xff]
    %v3454 = vld [vmem:[#allocation8 + $0x428] sm:$0xff]
    %v3455 = vld [vmem:[#allocation8 + $0x430] sm:$0xff]
    %v3456 = vld [vmem:[#allocation8 + $0x438] sm:$0xff]
    %v3457 = vld [vmem:[#allocation8 + $0x440] sm:$0xff]
    %v3458 = vld [vmem:[#allocation8 + $0x448] sm:$0xff]
    %v3459 = vld [vmem:[#allocation8 + $0x450] sm:$0xff]
    %v3460 = vld [vmem:[#allocation8 + $0x458] sm:$0xff]
    %v3461 = vld [vmem:[#allocation8 + $0x460] sm:$0xff]
    %v3462 = vld [vmem:[#allocation8 + $0x468] sm:$0xff]
    %v3463 = vld [vmem:[#allocation8 + $0x470] sm:$0xff]
    %v3464 = vld [vmem:[#allocation8 + $0x478] sm:$0xff]
    %v3465 = vld [vmem:[#allocation8 + $0x480] sm:$0xff]
    %v3466 = vld [vmem:[#allocation8 + $0x488] sm:$0xff]
    %v3467 = vld [vmem:[#allocation8 + $0x490] sm:$0xff]
    %v3468 = vld [vmem:[#allocation8 + $0x498] sm:$0xff]
    %v3469 = vld [vmem:[#allocation8 + $0x4a0] sm:$0xff]
    %v3470 = vld [vmem:[#allocation8 + $0x4a8] sm:$0xff]
    %v3471 = vld [vmem:[#allocation8 + $0x4b0] sm:$0xff]
    %v3472 = vld [vmem:[#allocation8 + $0x4b8] sm:$0xff]
    %v3473 = vld [vmem:[#allocation8 + $0x4c0] sm:$0xff]
    %v3474 = vld [vmem:[#allocation8 + $0x4c8] sm:$0xff]
    %v3475 = vld [vmem:[#allocation8 + $0x4d0] sm:$0xff]
    %v3476 = vld [vmem:[#allocation8 + $0x4d8] sm:$0xff]
    %v3477 = vld [vmem:[#allocation8 + $0x4e0] sm:$0xff]
    %v3478 = vld [vmem:[#allocation8 + $0x4e8] sm:$0xff]
    %v3479 = vld [vmem:[#allocation8 + $0x4f0] sm:$0xff]
    %v3480 = vld [vmem:[#allocation8 + $0x4f8] sm:$0xff]
    %v3481 = vld [vmem:[#allocation8 + $0x500] sm:$0xff]
    %v3482 = vld [vmem:[#allocation8 + $0x508] sm:$0xff]
    %v3483 = vld [vmem:[#allocation8 + $0x510] sm:$0xff]
    %v3484 = vld [vmem:[#allocation8 + $0x518] sm:$0xff]
    %v3485 = vld [vmem:[#allocation8 + $0x520] sm:$0xff]
    %v3486 = vld [vmem:[#allocation8 + $0x528] sm:$0xff]
    %v3487 = vld [vmem:[#allocation8 + $0x530] sm:$0xff]
    %v3488 = vld [vmem:[#allocation8 + $0x538] sm:$0xff]
    %v3489 = vld [vmem:[#allocation8 + $0x540] sm:$0xff]
    %v3490 = vld [vmem:[#allocation8 + $0x548] sm:$0xff]
    %v3491 = vld [vmem:[#allocation8 + $0x550] sm:$0xff]
    %v3492 = vld [vmem:[#allocation8 + $0x558] sm:$0xff]
    %v3493 = vld [vmem:[#allocation8 + $0x560] sm:$0xff]
    %v3494 = vld [vmem:[#allocation8 + $0x568] sm:$0xff]
    %v3495 = vld [vmem:[#allocation8 + $0x570] sm:$0xff]
    %v3496 = vld [vmem:[#allocation8 + $0x578] sm:$0xff]
    %v3497 = vld [vmem:[#allocation8 + $0x580] sm:$0xff]
    %v3498 = vld [vmem:[#allocation8 + $0x588] sm:$0xff]
    %v3499 = vld [vmem:[#allocation8 + $0x590] sm:$0xff]
    %v3500 = vld [vmem:[#allocation8 + $0x598] sm:$0xff]
    %v3501 = vld [vmem:[#allocation8 + $0x5a0] sm:$0xff]
    %v3502 = vld [vmem:[#allocation8 + $0x5a8] sm:$0xff]
    %v3503 = vld [vmem:[#allocation8 + $0x5b0] sm:$0xff]
    %v3504 = vld [vmem:[#allocation8 + $0x5b8] sm:$0xff]
    %v3505 = vld [vmem:[#allocation8 + $0x5c0] sm:$0xff]
    %v3506 = vld [vmem:[#allocation8 + $0x5c8] sm:$0xff]
    %v3507 = vld [vmem:[#allocation8 + $0x5d0] sm:$0xff]
    %v3508 = vld [vmem:[#allocation8 + $0x5d8] sm:$0xff]
    %v3509 = vld [vmem:[#allocation8 + $0x5e0] sm:$0xff]
    %v3510 = vld [vmem:[#allocation8 + $0x5e8] sm:$0xff]
    %v3511 = vld [vmem:[#allocation8 + $0x5f0] sm:$0xff]
    %v3512 = vld [vmem:[#allocation8 + $0x5f8] sm:$0xff]
    %v3513 = vld [vmem:[#allocation8 + $0x600] sm:$0xff]
    %v3514 = vld [vmem:[#allocation8 + $0x608] sm:$0xff]
    %v3515 = vld [vmem:[#allocation8 + $0x610] sm:$0xff]
    %v3516 = vld [vmem:[#allocation8 + $0x618] sm:$0xff]
    %v3517 = vld [vmem:[#allocation8 + $0x620] sm:$0xff]
    %v3518 = vld [vmem:[#allocation8 + $0x628] sm:$0xff]
    %v3519 = vld [vmem:[#allocation8 + $0x630] sm:$0xff]
    %v3520 = vld [vmem:[#allocation8 + $0x638] sm:$0xff]
    %v3521 = vld [vmem:[#allocation8 + $0x640] sm:$0xff]
    %v3522 = vld [vmem:[#allocation8 + $0x648] sm:$0xff]
    %v3523 = vld [vmem:[#allocation8 + $0x650] sm:$0xff]
    %v3524 = vld [vmem:[#allocation8 + $0x658] sm:$0xff]
    %v3525 = vld [vmem:[#allocation8 + $0x660] sm:$0xff]
    %v3526 = vld [vmem:[#allocation8 + $0x668] sm:$0xff]
    %v3527 = vld [vmem:[#allocation8 + $0x670] sm:$0xff]
    %v3528 = vld [vmem:[#allocation8 + $0x678] sm:$0xff]
    %v3529 = vld [vmem:[#allocation8 + $0x680] sm:$0xff]
    %v3530 = vld [vmem:[#allocation8 + $0x688] sm:$0xff]
    %v3531 = vld [vmem:[#allocation8 + $0x690] sm:$0xff]
    %v3532 = vld [vmem:[#allocation8 + $0x698] sm:$0xff]
    %v3533 = vld [vmem:[#allocation8 + $0x6a0] sm:$0xff]
    %v3534 = vld [vmem:[#allocation8 + $0x6a8] sm:$0xff]
    %v3535 = vld [vmem:[#allocation8 + $0x6b0] sm:$0xff]
    %v3536 = vld [vmem:[#allocation8 + $0x6b8] sm:$0xff]
    %v3537 = vld [vmem:[#allocation8 + $0x6c0] sm:$0xff]
    %v3538 = vld [vmem:[#allocation8 + $0x6c8] sm:$0xff]
    %v3539 = vld [vmem:[#allocation8 + $0x6d0] sm:$0xff]
    %v3540 = vld [vmem:[#allocation8 + $0x6d8] sm:$0xff]
    %v3541 = vld [vmem:[#allocation8 + $0x6e0] sm:$0xff]
    %v3542 = vld [vmem:[#allocation8 + $0x6e8] sm:$0xff]
    %v3543 = vld [vmem:[#allocation8 + $0x6f0] sm:$0xff]
    %v3544 = vld [vmem:[#allocation8 + $0x6f8] sm:$0xff]
    %v3545 = vld [vmem:[#allocation8 + $0x700] sm:$0xff]
    %v3546 = vld [vmem:[#allocation8 + $0x708] sm:$0xff]
    %v3547 = vld [vmem:[#allocation8 + $0x710] sm:$0xff]
    %v3548 = vld [vmem:[#allocation8 + $0x718] sm:$0xff]
    %v3549 = vld [vmem:[#allocation8 + $0x720] sm:$0xff]
    %v3550 = vld [vmem:[#allocation8 + $0x728] sm:$0xff]
    %v3551 = vld [vmem:[#allocation8 + $0x730] sm:$0xff]
    %v3552 = vld [vmem:[#allocation8 + $0x738] sm:$0xff]
    %v3553 = vld [vmem:[#allocation8 + $0x740] sm:$0xff]
    %v3554 = vld [vmem:[#allocation8 + $0x748] sm:$0xff]
    %v3555 = vld [vmem:[#allocation8 + $0x750] sm:$0xff]
    %v3556 = vld [vmem:[#allocation8 + $0x758] sm:$0xff]
    %v3557 = vld [vmem:[#allocation8 + $0x760] sm:$0xff]
    %v3558 = vld [vmem:[#allocation8 + $0x768] sm:$0xff]
    %v3559 = vld [vmem:[#allocation8 + $0x770] sm:$0xff]
    %v3560 = vld [vmem:[#allocation8 + $0x778] sm:$0xff]
    %v3561 = vld [vmem:[#allocation8 + $0x780] sm:$0xff]
    %v3562 = vld [vmem:[#allocation8 + $0x788] sm:$0xff]
    %v3563 = vld [vmem:[#allocation8 + $0x790] sm:$0xff]
    %v3564 = vld [vmem:[#allocation8 + $0x798] sm:$0xff]
    %v3565 = vld [vmem:[#allocation8 + $0x7a0] sm:$0xff]
    %v3566 = vld [vmem:[#allocation8 + $0x7a8] sm:$0xff]
    %v3567 = vld [vmem:[#allocation8 + $0x7b0] sm:$0xff]
    %v3568 = vld [vmem:[#allocation8 + $0x7b8] sm:$0xff]
    %v3569 = vld [vmem:[#allocation8 + $0x7c0] sm:$0xff]
    %v3570 = vld [vmem:[#allocation8 + $0x7c8] sm:$0xff]
    %v3571 = vld [vmem:[#allocation8 + $0x7d0] sm:$0xff]
    %v3572 = vld [vmem:[#allocation8 + $0x7d8] sm:$0xff]
    %v3573 = vld [vmem:[#allocation8 + $0x7e0] sm:$0xff]
    %v3574 = vld [vmem:[#allocation8 + $0x7e8] sm:$0xff]
    %v3575 = vld [vmem:[#allocation8 + $0x7f0] sm:$0xff]
    %v3576 = vld [vmem:[#allocation8 + $0x7f8] sm:$0xff]
    %v3577 = vld [vmem:[#allocation10] sm:$0xf]
    %v3579 = vlaneseq
    %v3580 = vshrl.u32 %v3579, 7
    %v3581 = vsub.s32 0, %v3580
    %v3582 = vrot.slane %v3577, %v3581
    %v3583 = vlaneseq
    %v3584 = vshrl.u32 %v3583, 7
    %v3585 = vsub.s32 1, %v3584
    %v3586 = vrot.slane %v3577, %v3585
    %v3587 = vlaneseq
    %v3588 = vshrl.u32 %v3587, 7
    %v3589 = vsub.s32 2, %v3588
    %v3590 = vrot.slane %v3577, %v3589
    %v3591 = vlaneseq
    %v3592 = vshrl.u32 %v3591, 7
    %v3593 = vsub.s32 3, %v3592
    %v3594 = vrot.slane %v3577, %v3593
    %v3855 = vunpack.c.l.b16 %v3321
    %v3856 = vunpack.c.h.b16 %v3321
    %v3857 = vunpack.c.l.b16 %v3322
    %v3858 = vunpack.c.h.b16 %v3322
    %v3859 = vunpack.c.l.b16 %v3323
    %v3860 = vunpack.c.h.b16 %v3323
    %v3861 = vunpack.c.l.b16 %v3324
    %v3862 = vunpack.c.h.b16 %v3324
    %v3863 = vunpack.c.l.b16 %v3325
    %v3864 = vunpack.c.h.b16 %v3325
    %v3865 = vunpack.c.l.b16 %v3326
    %v3866 = vunpack.c.h.b16 %v3326
    %v3867 = vunpack.c.l.b16 %v3327
    %v3868 = vunpack.c.h.b16 %v3327
    %v3869 = vunpack.c.l.b16 %v3328
    %v3870 = vunpack.c.h.b16 %v3328
    %v3871 = vunpack.c.l.b16 %v3329
    %v3872 = vunpack.c.h.b16 %v3329
    %v3873 = vunpack.c.l.b16 %v3330
    %v3874 = vunpack.c.h.b16 %v3330
    %v3875 = vunpack.c.l.b16 %v3331
    %v3876 = vunpack.c.h.b16 %v3331
    %v3877 = vunpack.c.l.b16 %v3332
    %v3878 = vunpack.c.h.b16 %v3332
    %v3879 = vunpack.c.l.b16 %v3333
    %v3880 = vunpack.c.h.b16 %v3333
    %v3881 = vunpack.c.l.b16 %v3334
    %v3882 = vunpack.c.h.b16 %v3334
    %v3883 = vunpack.c.l.b16 %v3335
    %v3884 = vunpack.c.h.b16 %v3335
    %v3885 = vunpack.c.l.b16 %v3336
    %v3886 = vunpack.c.h.b16 %v3336
    %v3887 = vunpack.c.l.b16 %v3337
    %v3888 = vunpack.c.h.b16 %v3337
    %v3889 = vunpack.c.l.b16 %v3338
    %v3890 = vunpack.c.h.b16 %v3338
    %v3891 = vunpack.c.l.b16 %v3339
    %v3892 = vunpack.c.h.b16 %v3339
    %v3893 = vunpack.c.l.b16 %v3340
    %v3894 = vunpack.c.h.b16 %v3340
    %v3895 = vunpack.c.l.b16 %v3341
    %v3896 = vunpack.c.h.b16 %v3341
    %v3897 = vunpack.c.l.b16 %v3342
    %v3898 = vunpack.c.h.b16 %v3342
    %v3899 = vunpack.c.l.b16 %v3343
    %v3900 = vunpack.c.h.b16 %v3343
    %v3901 = vunpack.c.l.b16 %v3344
    %v3902 = vunpack.c.h.b16 %v3344
    %v3903 = vunpack.c.l.b16 %v3345
    %v3904 = vunpack.c.h.b16 %v3345
    %v3905 = vunpack.c.l.b16 %v3346
    %v3906 = vunpack.c.h.b16 %v3346
    %v3907 = vunpack.c.l.b16 %v3347
    %v3908 = vunpack.c.h.b16 %v3347
    %v3909 = vunpack.c.l.b16 %v3348
    %v3910 = vunpack.c.h.b16 %v3348
    %v3911 = vunpack.c.l.b16 %v3349
    %v3912 = vunpack.c.h.b16 %v3349
    %v3913 = vunpack.c.l.b16 %v3350
    %v3914 = vunpack.c.h.b16 %v3350
    %v3915 = vunpack.c.l.b16 %v3351
    %v3916 = vunpack.c.h.b16 %v3351
    %v3917 = vunpack.c.l.b16 %v3352
    %v3918 = vunpack.c.h.b16 %v3352
    %v3919 = vunpack.c.l.b16 %v3353
    %v3920 = vunpack.c.h.b16 %v3353
    %v3921 = vunpack.c.l.b16 %v3354
    %v3922 = vunpack.c.h.b16 %v3354
    %v3923 = vunpack.c.l.b16 %v3355
    %v3924 = vunpack.c.h.b16 %v3355
    %v3925 = vunpack.c.l.b16 %v3356
    %v3926 = vunpack.c.h.b16 %v3356
    %v3927 = vunpack.c.l.b16 %v3357
    %v3928 = vunpack.c.h.b16 %v3357
    %v3929 = vunpack.c.l.b16 %v3358
    %v3930 = vunpack.c.h.b16 %v3358
    %v3931 = vunpack.c.l.b16 %v3359
    %v3932 = vunpack.c.h.b16 %v3359
    %v3933 = vunpack.c.l.b16 %v3360
    %v3934 = vunpack.c.h.b16 %v3360
    %v3935 = vunpack.c.l.b16 %v3361
    %v3936 = vunpack.c.h.b16 %v3361
    %v3937 = vunpack.c.l.b16 %v3362
    %v3938 = vunpack.c.h.b16 %v3362
    %v3939 = vunpack.c.l.b16 %v3363
    %v3940 = vunpack.c.h.b16 %v3363
    %v3941 = vunpack.c.l.b16 %v3364
    %v3942 = vunpack.c.h.b16 %v3364
    %v3943 = vunpack.c.l.b16 %v3365
    %v3944 = vunpack.c.h.b16 %v3365
    %v3945 = vunpack.c.l.b16 %v3366
    %v3946 = vunpack.c.h.b16 %v3366
    %v3947 = vunpack.c.l.b16 %v3367
    %v3948 = vunpack.c.h.b16 %v3367
    %v3949 = vunpack.c.l.b16 %v3368
    %v3950 = vunpack.c.h.b16 %v3368
    %v3951 = vunpack.c.l.b16 %v3369
    %v3952 = vunpack.c.h.b16 %v3369
    %v3953 = vunpack.c.l.b16 %v3370
    %v3954 = vunpack.c.h.b16 %v3370
    %v3955 = vunpack.c.l.b16 %v3371
    %v3956 = vunpack.c.h.b16 %v3371
    %v3957 = vunpack.c.l.b16 %v3372
    %v3958 = vunpack.c.h.b16 %v3372
    %v3959 = vunpack.c.l.b16 %v3373
    %v3960 = vunpack.c.h.b16 %v3373
    %v3961 = vunpack.c.l.b16 %v3374
    %v3962 = vunpack.c.h.b16 %v3374
    %v3963 = vunpack.c.l.b16 %v3375
    %v3964 = vunpack.c.h.b16 %v3375
    %v3965 = vunpack.c.l.b16 %v3376
    %v3966 = vunpack.c.h.b16 %v3376
    %v3967 = vunpack.c.l.b16 %v3377
    %v3968 = vunpack.c.h.b16 %v3377
    %v3969 = vunpack.c.l.b16 %v3378
    %v3970 = vunpack.c.h.b16 %v3378
    %v3971 = vunpack.c.l.b16 %v3379
    %v3972 = vunpack.c.h.b16 %v3379
    %v3973 = vunpack.c.l.b16 %v3380
    %v3974 = vunpack.c.h.b16 %v3380
    %v3975 = vunpack.c.l.b16 %v3381
    %v3976 = vunpack.c.h.b16 %v3381
    %v3977 = vunpack.c.l.b16 %v3382
    %v3978 = vunpack.c.h.b16 %v3382
    %v3979 = vunpack.c.l.b16 %v3383
    %v3980 = vunpack.c.h.b16 %v3383
    %v3981 = vunpack.c.l.b16 %v3384
    %v3982 = vunpack.c.h.b16 %v3384
    %v3983 = vunpack.c.l.b16 %v3385
    %v3984 = vunpack.c.h.b16 %v3385
    %v3985 = vunpack.c.l.b16 %v3386
    %v3986 = vunpack.c.h.b16 %v3386
    %v3987 = vunpack.c.l.b16 %v3387
    %v3988 = vunpack.c.h.b16 %v3387
    %v3989 = vunpack.c.l.b16 %v3388
    %v3990 = vunpack.c.h.b16 %v3388
    %v3991 = vunpack.c.l.b16 %v3389
    %v3992 = vunpack.c.h.b16 %v3389
    %v3993 = vunpack.c.l.b16 %v3390
    %v3994 = vunpack.c.h.b16 %v3390
    %v3995 = vunpack.c.l.b16 %v3391
    %v3996 = vunpack.c.h.b16 %v3391
    %v3997 = vunpack.c.l.b16 %v3392
    %v3998 = vunpack.c.h.b16 %v3392
    %v3999 = vunpack.c.l.b16 %v3393
    %v4000 = vunpack.c.h.b16 %v3393
    %v4001 = vunpack.c.l.b16 %v3394
    %v4002 = vunpack.c.h.b16 %v3394
    %v4003 = vunpack.c.l.b16 %v3395
    %v4004 = vunpack.c.h.b16 %v3395
    %v4005 = vunpack.c.l.b16 %v3396
    %v4006 = vunpack.c.h.b16 %v3396
    %v4007 = vunpack.c.l.b16 %v3397
    %v4008 = vunpack.c.h.b16 %v3397
    %v4009 = vunpack.c.l.b16 %v3398
    %v4010 = vunpack.c.h.b16 %v3398
    %v4011 = vunpack.c.l.b16 %v3399
    %v4012 = vunpack.c.h.b16 %v3399
    %v4013 = vunpack.c.l.b16 %v3400
    %v4014 = vunpack.c.h.b16 %v3400
    %v4015 = vunpack.c.l.b16 %v3401
    %v4016 = vunpack.c.h.b16 %v3401
    %v4017 = vunpack.c.l.b16 %v3402
    %v4018 = vunpack.c.h.b16 %v3402
    %v4019 = vunpack.c.l.b16 %v3403
    %v4020 = vunpack.c.h.b16 %v3403
    %v4021 = vunpack.c.l.b16 %v3404
    %v4022 = vunpack.c.h.b16 %v3404
    %v4023 = vunpack.c.l.b16 %v3405
    %v4024 = vunpack.c.h.b16 %v3405
    %v4025 = vunpack.c.l.b16 %v3406
    %v4026 = vunpack.c.h.b16 %v3406
    %v4027 = vunpack.c.l.b16 %v3407
    %v4028 = vunpack.c.h.b16 %v3407
    %v4029 = vunpack.c.l.b16 %v3408
    %v4030 = vunpack.c.h.b16 %v3408
    %v4031 = vunpack.c.l.b16 %v3409
    %v4032 = vunpack.c.h.b16 %v3409
    %v4033 = vunpack.c.l.b16 %v3410
    %v4034 = vunpack.c.h.b16 %v3410
    %v4035 = vunpack.c.l.b16 %v3411
    %v4036 = vunpack.c.h.b16 %v3411
    %v4037 = vunpack.c.l.b16 %v3412
    %v4038 = vunpack.c.h.b16 %v3412
    %v4039 = vunpack.c.l.b16 %v3413
    %v4040 = vunpack.c.h.b16 %v3413
    %v4041 = vunpack.c.l.b16 %v3414
    %v4042 = vunpack.c.h.b16 %v3414
    %v4043 = vunpack.c.l.b16 %v3415
    %v4044 = vunpack.c.h.b16 %v3415
    %v4045 = vunpack.c.l.b16 %v3416
    %v4046 = vunpack.c.h.b16 %v3416
    %v4047 = vunpack.c.l.b16 %v3417
    %v4048 = vunpack.c.h.b16 %v3417
    %v4049 = vunpack.c.l.b16 %v3418
    %v4050 = vunpack.c.h.b16 %v3418
    %v4051 = vunpack.c.l.b16 %v3419
    %v4052 = vunpack.c.h.b16 %v3419
    %v4053 = vunpack.c.l.b16 %v3420
    %v4054 = vunpack.c.h.b16 %v3420
    %v4055 = vunpack.c.l.b16 %v3421
    %v4056 = vunpack.c.h.b16 %v3421
    %v4057 = vunpack.c.l.b16 %v3422
    %v4058 = vunpack.c.h.b16 %v3422
    %v4059 = vunpack.c.l.b16 %v3423
    %v4060 = vunpack.c.h.b16 %v3423
    %v4061 = vunpack.c.l.b16 %v3424
    %v4062 = vunpack.c.h.b16 %v3424
    %v4063 = vunpack.c.l.b16 %v3425
    %v4064 = vunpack.c.h.b16 %v3425
    %v4065 = vunpack.c.l.b16 %v3426
    %v4066 = vunpack.c.h.b16 %v3426
    %v4067 = vunpack.c.l.b16 %v3427
    %v4068 = vunpack.c.h.b16 %v3427
    %v4069 = vunpack.c.l.b16 %v3428
    %v4070 = vunpack.c.h.b16 %v3428
    %v4071 = vunpack.c.l.b16 %v3429
    %v4072 = vunpack.c.h.b16 %v3429
    %v4073 = vunpack.c.l.b16 %v3430
    %v4074 = vunpack.c.h.b16 %v3430
    %v4075 = vunpack.c.l.b16 %v3431
    %v4076 = vunpack.c.h.b16 %v3431
    %v4077 = vunpack.c.l.b16 %v3432
    %v4078 = vunpack.c.h.b16 %v3432
    %v4079 = vunpack.c.l.b16 %v3433
    %v4080 = vunpack.c.h.b16 %v3433
    %v4081 = vunpack.c.l.b16 %v3434
    %v4082 = vunpack.c.h.b16 %v3434
    %v4083 = vunpack.c.l.b16 %v3435
    %v4084 = vunpack.c.h.b16 %v3435
    %v4085 = vunpack.c.l.b16 %v3436
    %v4086 = vunpack.c.h.b16 %v3436
    %v4087 = vunpack.c.l.b16 %v3437
    %v4088 = vunpack.c.h.b16 %v3437
    %v4089 = vunpack.c.l.b16 %v3438
    %v4090 = vunpack.c.h.b16 %v3438
    %v4091 = vunpack.c.l.b16 %v3439
    %v4092 = vunpack.c.h.b16 %v3439
    %v4093 = vunpack.c.l.b16 %v3440
    %v4094 = vunpack.c.h.b16 %v3440
    %v4095 = vunpack.c.l.b16 %v3441
    %v4096 = vunpack.c.h.b16 %v3441
    %v4097 = vunpack.c.l.b16 %v3442
    %v4098 = vunpack.c.h.b16 %v3442
    %v4099 = vunpack.c.l.b16 %v3443
    %v4100 = vunpack.c.h.b16 %v3443
    %v4101 = vunpack.c.l.b16 %v3444
    %v4102 = vunpack.c.h.b16 %v3444
    %v4103 = vunpack.c.l.b16 %v3445
    %v4104 = vunpack.c.h.b16 %v3445
    %v4105 = vunpack.c.l.b16 %v3446
    %v4106 = vunpack.c.h.b16 %v3446
    %v4107 = vunpack.c.l.b16 %v3447
    %v4108 = vunpack.c.h.b16 %v3447
    %v4109 = vunpack.c.l.b16 %v3448
    %v4110 = vunpack.c.h.b16 %v3448
    %v4111 = vunpack.c.l.b16 %v3449
    %v4112 = vunpack.c.h.b16 %v3449
    %v4113 = vunpack.c.l.b16 %v3450
    %v4114 = vunpack.c.h.b16 %v3450
    %v4115 = vunpack.c.l.b16 %v3451
    %v4116 = vunpack.c.h.b16 %v3451
    %v4117 = vunpack.c.l.b16 %v3452
    %v4118 = vunpack.c.h.b16 %v3452
    %v4119 = vunpack.c.l.b16 %v3453
    %v4120 = vunpack.c.h.b16 %v3453
    %v4121 = vunpack.c.l.b16 %v3454
    %v4122 = vunpack.c.h.b16 %v3454
    %v4123 = vunpack.c.l.b16 %v3455
    %v4124 = vunpack.c.h.b16 %v3455
    %v4125 = vunpack.c.l.b16 %v3456
    %v4126 = vunpack.c.h.b16 %v3456
    %v4127 = vunpack.c.l.b16 %v3457
    %v4128 = vunpack.c.h.b16 %v3457
    %v4129 = vunpack.c.l.b16 %v3458
    %v4130 = vunpack.c.h.b16 %v3458
    %v4131 = vunpack.c.l.b16 %v3459
    %v4132 = vunpack.c.h.b16 %v3459
    %v4133 = vunpack.c.l.b16 %v3460
    %v4134 = vunpack.c.h.b16 %v3460
    %v4135 = vunpack.c.l.b16 %v3461
    %v4136 = vunpack.c.h.b16 %v3461
    %v4137 = vunpack.c.l.b16 %v3462
    %v4138 = vunpack.c.h.b16 %v3462
    %v4139 = vunpack.c.l.b16 %v3463
    %v4140 = vunpack.c.h.b16 %v3463
    %v4141 = vunpack.c.l.b16 %v3464
    %v4142 = vunpack.c.h.b16 %v3464
    %v4143 = vunpack.c.l.b16 %v3465
    %v4144 = vunpack.c.h.b16 %v3465
    %v4145 = vunpack.c.l.b16 %v3466
    %v4146 = vunpack.c.h.b16 %v3466
    %v4147 = vunpack.c.l.b16 %v3467
    %v4148 = vunpack.c.h.b16 %v3467
    %v4149 = vunpack.c.l.b16 %v3468
    %v4150 = vunpack.c.h.b16 %v3468
    %v4151 = vunpack.c.l.b16 %v3469
    %v4152 = vunpack.c.h.b16 %v3469
    %v4153 = vunpack.c.l.b16 %v3470
    %v4154 = vunpack.c.h.b16 %v3470
    %v4155 = vunpack.c.l.b16 %v3471
    %v4156 = vunpack.c.h.b16 %v3471
    %v4157 = vunpack.c.l.b16 %v3472
    %v4158 = vunpack.c.h.b16 %v3472
    %v4159 = vunpack.c.l.b16 %v3473
    %v4160 = vunpack.c.h.b16 %v3473
    %v4161 = vunpack.c.l.b16 %v3474
    %v4162 = vunpack.c.h.b16 %v3474
    %v4163 = vunpack.c.l.b16 %v3475
    %v4164 = vunpack.c.h.b16 %v3475
    %v4165 = vunpack.c.l.b16 %v3476
    %v4166 = vunpack.c.h.b16 %v3476
    %v4167 = vunpack.c.l.b16 %v3477
    %v4168 = vunpack.c.h.b16 %v3477
    %v4169 = vunpack.c.l.b16 %v3478
    %v4170 = vunpack.c.h.b16 %v3478
    %v4171 = vunpack.c.l.b16 %v3479
    %v4172 = vunpack.c.h.b16 %v3479
    %v4173 = vunpack.c.l.b16 %v3480
    %v4174 = vunpack.c.h.b16 %v3480
    %v4175 = vunpack.c.l.b16 %v3481
    %v4176 = vunpack.c.h.b16 %v3481
    %v4177 = vunpack.c.l.b16 %v3482
    %v4178 = vunpack.c.h.b16 %v3482
    %v4179 = vunpack.c.l.b16 %v3483
    %v4180 = vunpack.c.h.b16 %v3483
    %v4181 = vunpack.c.l.b16 %v3484
    %v4182 = vunpack.c.h.b16 %v3484
    %v4183 = vunpack.c.l.b16 %v3485
    %v4184 = vunpack.c.h.b16 %v3485
    %v4185 = vunpack.c.l.b16 %v3486
    %v4186 = vunpack.c.h.b16 %v3486
    %v4187 = vunpack.c.l.b16 %v3487
    %v4188 = vunpack.c.h.b16 %v3487
    %v4189 = vunpack.c.l.b16 %v3488
    %v4190 = vunpack.c.h.b16 %v3488
    %v4191 = vunpack.c.l.b16 %v3489
    %v4192 = vunpack.c.h.b16 %v3489
    %v4193 = vunpack.c.l.b16 %v3490
    %v4194 = vunpack.c.h.b16 %v3490
    %v4195 = vunpack.c.l.b16 %v3491
    %v4196 = vunpack.c.h.b16 %v3491
    %v4197 = vunpack.c.l.b16 %v3492
    %v4198 = vunpack.c.h.b16 %v3492
    %v4199 = vunpack.c.l.b16 %v3493
    %v4200 = vunpack.c.h.b16 %v3493
    %v4201 = vunpack.c.l.b16 %v3494
    %v4202 = vunpack.c.h.b16 %v3494
    %v4203 = vunpack.c.l.b16 %v3495
    %v4204 = vunpack.c.h.b16 %v3495
    %v4205 = vunpack.c.l.b16 %v3496
    %v4206 = vunpack.c.h.b16 %v3496
    %v4207 = vunpack.c.l.b16 %v3497
    %v4208 = vunpack.c.h.b16 %v3497
    %v4209 = vunpack.c.l.b16 %v3498
    %v4210 = vunpack.c.h.b16 %v3498
    %v4211 = vunpack.c.l.b16 %v3499
    %v4212 = vunpack.c.h.b16 %v3499
    %v4213 = vunpack.c.l.b16 %v3500
    %v4214 = vunpack.c.h.b16 %v3500
    %v4215 = vunpack.c.l.b16 %v3501
    %v4216 = vunpack.c.h.b16 %v3501
    %v4217 = vunpack.c.l.b16 %v3502
    %v4218 = vunpack.c.h.b16 %v3502
    %v4219 = vunpack.c.l.b16 %v3503
    %v4220 = vunpack.c.h.b16 %v3503
    %v4221 = vunpack.c.l.b16 %v3504
    %v4222 = vunpack.c.h.b16 %v3504
    %v4223 = vunpack.c.l.b16 %v3505
    %v4224 = vunpack.c.h.b16 %v3505
    %v4225 = vunpack.c.l.b16 %v3506
    %v4226 = vunpack.c.h.b16 %v3506
    %v4227 = vunpack.c.l.b16 %v3507
    %v4228 = vunpack.c.h.b16 %v3507
    %v4229 = vunpack.c.l.b16 %v3508
    %v4230 = vunpack.c.h.b16 %v3508
    %v4231 = vunpack.c.l.b16 %v3509
    %v4232 = vunpack.c.h.b16 %v3509
    %v4233 = vunpack.c.l.b16 %v3510
    %v4234 = vunpack.c.h.b16 %v3510
    %v4235 = vunpack.c.l.b16 %v3511
    %v4236 = vunpack.c.h.b16 %v3511
    %v4237 = vunpack.c.l.b16 %v3512
    %v4238 = vunpack.c.h.b16 %v3512
    %v4239 = vunpack.c.l.b16 %v3513
    %v4240 = vunpack.c.h.b16 %v3513
    %v4241 = vunpack.c.l.b16 %v3514
    %v4242 = vunpack.c.h.b16 %v3514
    %v4243 = vunpack.c.l.b16 %v3515
    %v4244 = vunpack.c.h.b16 %v3515
    %v4245 = vunpack.c.l.b16 %v3516
    %v4246 = vunpack.c.h.b16 %v3516
    %v4247 = vunpack.c.l.b16 %v3517
    %v4248 = vunpack.c.h.b16 %v3517
    %v4249 = vunpack.c.l.b16 %v3518
    %v4250 = vunpack.c.h.b16 %v3518
    %v4251 = vunpack.c.l.b16 %v3519
    %v4252 = vunpack.c.h.b16 %v3519
    %v4253 = vunpack.c.l.b16 %v3520
    %v4254 = vunpack.c.h.b16 %v3520
    %v4255 = vunpack.c.l.b16 %v3521
    %v4256 = vunpack.c.h.b16 %v3521
    %v4257 = vunpack.c.l.b16 %v3522
    %v4258 = vunpack.c.h.b16 %v3522
    %v4259 = vunpack.c.l.b16 %v3523
    %v4260 = vunpack.c.h.b16 %v3523
    %v4261 = vunpack.c.l.b16 %v3524
    %v4262 = vunpack.c.h.b16 %v3524
    %v4263 = vunpack.c.l.b16 %v3525
    %v4264 = vunpack.c.h.b16 %v3525
    %v4265 = vunpack.c.l.b16 %v3526
    %v4266 = vunpack.c.h.b16 %v3526
    %v4267 = vunpack.c.l.b16 %v3527
    %v4268 = vunpack.c.h.b16 %v3527
    %v4269 = vunpack.c.l.b16 %v3528
    %v4270 = vunpack.c.h.b16 %v3528
    %v4271 = vunpack.c.l.b16 %v3529
    %v4272 = vunpack.c.h.b16 %v3529
    %v4273 = vunpack.c.l.b16 %v3530
    %v4274 = vunpack.c.h.b16 %v3530
    %v4275 = vunpack.c.l.b16 %v3531
    %v4276 = vunpack.c.h.b16 %v3531
    %v4277 = vunpack.c.l.b16 %v3532
    %v4278 = vunpack.c.h.b16 %v3532
    %v4279 = vunpack.c.l.b16 %v3533
    %v4280 = vunpack.c.h.b16 %v3533
    %v4281 = vunpack.c.l.b16 %v3534
    %v4282 = vunpack.c.h.b16 %v3534
    %v4283 = vunpack.c.l.b16 %v3535
    %v4284 = vunpack.c.h.b16 %v3535
    %v4285 = vunpack.c.l.b16 %v3536
    %v4286 = vunpack.c.h.b16 %v3536
    %v4287 = vunpack.c.l.b16 %v3537
    %v4288 = vunpack.c.h.b16 %v3537
    %v4289 = vunpack.c.l.b16 %v3538
    %v4290 = vunpack.c.h.b16 %v3538
    %v4291 = vunpack.c.l.b16 %v3539
    %v4292 = vunpack.c.h.b16 %v3539
    %v4293 = vunpack.c.l.b16 %v3540
    %v4294 = vunpack.c.h.b16 %v3540
    %v4295 = vunpack.c.l.b16 %v3541
    %v4296 = vunpack.c.h.b16 %v3541
    %v4297 = vunpack.c.l.b16 %v3542
    %v4298 = vunpack.c.h.b16 %v3542
    %v4299 = vunpack.c.l.b16 %v3543
    %v4300 = vunpack.c.h.b16 %v3543
    %v4301 = vunpack.c.l.b16 %v3544
    %v4302 = vunpack.c.h.b16 %v3544
    %v4303 = vunpack.c.l.b16 %v3545
    %v4304 = vunpack.c.h.b16 %v3545
    %v4305 = vunpack.c.l.b16 %v3546
    %v4306 = vunpack.c.h.b16 %v3546
    %v4307 = vunpack.c.l.b16 %v3547
    %v4308 = vunpack.c.h.b16 %v3547
    %v4309 = vunpack.c.l.b16 %v3548
    %v4310 = vunpack.c.h.b16 %v3548
    %v4311 = vunpack.c.l.b16 %v3549
    %v4312 = vunpack.c.h.b16 %v3549
    %v4313 = vunpack.c.l.b16 %v3550
    %v4314 = vunpack.c.h.b16 %v3550
    %v4315 = vunpack.c.l.b16 %v3551
    %v4316 = vunpack.c.h.b16 %v3551
    %v4317 = vunpack.c.l.b16 %v3552
    %v4318 = vunpack.c.h.b16 %v3552
    %v4319 = vunpack.c.l.b16 %v3553
    %v4320 = vunpack.c.h.b16 %v3553
    %v4321 = vunpack.c.l.b16 %v3554
    %v4322 = vunpack.c.h.b16 %v3554
    %v4323 = vunpack.c.l.b16 %v3555
    %v4324 = vunpack.c.h.b16 %v3555
    %v4325 = vunpack.c.l.b16 %v3556
    %v4326 = vunpack.c.h.b16 %v3556
    %v4327 = vunpack.c.l.b16 %v3557
    %v4328 = vunpack.c.h.b16 %v3557
    %v4329 = vunpack.c.l.b16 %v3558
    %v4330 = vunpack.c.h.b16 %v3558
    %v4331 = vunpack.c.l.b16 %v3559
    %v4332 = vunpack.c.h.b16 %v3559
    %v4333 = vunpack.c.l.b16 %v3560
    %v4334 = vunpack.c.h.b16 %v3560
    %v4335 = vunpack.c.l.b16 %v3561
    %v4336 = vunpack.c.h.b16 %v3561
    %v4337 = vunpack.c.l.b16 %v3562
    %v4338 = vunpack.c.h.b16 %v3562
    %v4339 = vunpack.c.l.b16 %v3563
    %v4340 = vunpack.c.h.b16 %v3563
    %v4341 = vunpack.c.l.b16 %v3564
    %v4342 = vunpack.c.h.b16 %v3564
    %v4343 = vunpack.c.l.b16 %v3565
    %v4344 = vunpack.c.h.b16 %v3565
    %v4345 = vunpack.c.l.b16 %v3566
    %v4346 = vunpack.c.h.b16 %v3566
    %v4347 = vunpack.c.l.b16 %v3567
    %v4348 = vunpack.c.h.b16 %v3567
    %v4349 = vunpack.c.l.b16 %v3568
    %v4350 = vunpack.c.h.b16 %v3568
    %v4351 = vunpack.c.l.b16 %v3569
    %v4352 = vunpack.c.h.b16 %v3569
    %v4353 = vunpack.c.l.b16 %v3570
    %v4354 = vunpack.c.h.b16 %v3570
    %v4355 = vunpack.c.l.b16 %v3571
    %v4356 = vunpack.c.h.b16 %v3571
    %v4357 = vunpack.c.l.b16 %v3572
    %v4358 = vunpack.c.h.b16 %v3572
    %v4359 = vunpack.c.l.b16 %v3573
    %v4360 = vunpack.c.h.b16 %v3573
    %v4361 = vunpack.c.l.b16 %v3574
    %v4362 = vunpack.c.h.b16 %v3574
    %v4363 = vunpack.c.l.b16 %v3575
    %v4364 = vunpack.c.h.b16 %v3575
    %v4365 = vunpack.c.l.b16 %v3576
    %v4366 = vunpack.c.h.b16 %v3576
    %v4367 = vpack.c.b16 %v3859, %v3855
    %v4368 = vpack.c.b16 %v3860, %v3856
    %v4369 = vpack.c.b16 %v3861, %v3857
    %v4370 = vpack.c.b16 %v3862, %v3858
    %v4371 = vpack.c.b16 %v3867, %v3863
    %v4372 = vpack.c.b16 %v3868, %v3864
    %v4373 = vpack.c.b16 %v3869, %v3865
    %v4374 = vpack.c.b16 %v3870, %v3866
    %v4375 = vpack.c.b16 %v3875, %v3871
    %v4376 = vpack.c.b16 %v3876, %v3872
    %v4377 = vpack.c.b16 %v3877, %v3873
    %v4378 = vpack.c.b16 %v3878, %v3874
    %v4379 = vpack.c.b16 %v3883, %v3879
    %v4380 = vpack.c.b16 %v3884, %v3880
    %v4381 = vpack.c.b16 %v3885, %v3881
    %v4382 = vpack.c.b16 %v3886, %v3882
    %v4383 = vpack.c.b16 %v3891, %v3887
    %v4384 = vpack.c.b16 %v3892, %v3888
    %v4385 = vpack.c.b16 %v3893, %v3889
    %v4386 = vpack.c.b16 %v3894, %v3890
    %v4387 = vpack.c.b16 %v3899, %v3895
    %v4388 = vpack.c.b16 %v3900, %v3896
    %v4389 = vpack.c.b16 %v3901, %v3897
    %v4390 = vpack.c.b16 %v3902, %v3898
    %v4391 = vpack.c.b16 %v3907, %v3903
    %v4392 = vpack.c.b16 %v3908, %v3904
    %v4393 = vpack.c.b16 %v3909, %v3905
    %v4394 = vpack.c.b16 %v3910, %v3906
    %v4395 = vpack.c.b16 %v3915, %v3911
    %v4396 = vpack.c.b16 %v3916, %v3912
    %v4397 = vpack.c.b16 %v3917, %v3913
    %v4398 = vpack.c.b16 %v3918, %v3914
    %v4399 = vpack.c.b16 %v3923, %v3919
    %v4400 = vpack.c.b16 %v3924, %v3920
    %v4401 = vpack.c.b16 %v3925, %v3921
    %v4402 = vpack.c.b16 %v3926, %v3922
    %v4403 = vpack.c.b16 %v3931, %v3927
    %v4404 = vpack.c.b16 %v3932, %v3928
    %v4405 = vpack.c.b16 %v3933, %v3929
    %v4406 = vpack.c.b16 %v3934, %v3930
    %v4407 = vpack.c.b16 %v3939, %v3935
    %v4408 = vpack.c.b16 %v3940, %v3936
    %v4409 = vpack.c.b16 %v3941, %v3937
    %v4410 = vpack.c.b16 %v3942, %v3938
    %v4411 = vpack.c.b16 %v3947, %v3943
    %v4412 = vpack.c.b16 %v3948, %v3944
    %v4413 = vpack.c.b16 %v3949, %v3945
    %v4414 = vpack.c.b16 %v3950, %v3946
    %v4415 = vpack.c.b16 %v3955, %v3951
    %v4416 = vpack.c.b16 %v3956, %v3952
    %v4417 = vpack.c.b16 %v3957, %v3953
    %v4418 = vpack.c.b16 %v3958, %v3954
    %v4419 = vpack.c.b16 %v3963, %v3959
    %v4420 = vpack.c.b16 %v3964, %v3960
    %v4421 = vpack.c.b16 %v3965, %v3961
    %v4422 = vpack.c.b16 %v3966, %v3962
    %v4423 = vpack.c.b16 %v3971, %v3967
    %v4424 = vpack.c.b16 %v3972, %v3968
    %v4425 = vpack.c.b16 %v3973, %v3969
    %v4426 = vpack.c.b16 %v3974, %v3970
    %v4427 = vpack.c.b16 %v3979, %v3975
    %v4428 = vpack.c.b16 %v3980, %v3976
    %v4429 = vpack.c.b16 %v3981, %v3977
    %v4430 = vpack.c.b16 %v3982, %v3978
    %v4431 = vpack.c.b16 %v3987, %v3983
    %v4432 = vpack.c.b16 %v3988, %v3984
    %v4433 = vpack.c.b16 %v3989, %v3985
    %v4434 = vpack.c.b16 %v3990, %v3986
    %v4435 = vpack.c.b16 %v3995, %v3991
    %v4436 = vpack.c.b16 %v3996, %v3992
    %v4437 = vpack.c.b16 %v3997, %v3993
    %v4438 = vpack.c.b16 %v3998, %v3994
    %v4439 = vpack.c.b16 %v4003, %v3999
    %v4440 = vpack.c.b16 %v4004, %v4000
    %v4441 = vpack.c.b16 %v4005, %v4001
    %v4442 = vpack.c.b16 %v4006, %v4002
    %v4443 = vpack.c.b16 %v4011, %v4007
    %v4444 = vpack.c.b16 %v4012, %v4008
    %v4445 = vpack.c.b16 %v4013, %v4009
    %v4446 = vpack.c.b16 %v4014, %v4010
    %v4447 = vpack.c.b16 %v4019, %v4015
    %v4448 = vpack.c.b16 %v4020, %v4016
    %v4449 = vpack.c.b16 %v4021, %v4017
    %v4450 = vpack.c.b16 %v4022, %v4018
    %v4451 = vpack.c.b16 %v4027, %v4023
    %v4452 = vpack.c.b16 %v4028, %v4024
    %v4453 = vpack.c.b16 %v4029, %v4025
    %v4454 = vpack.c.b16 %v4030, %v4026
    %v4455 = vpack.c.b16 %v4035, %v4031
    %v4456 = vpack.c.b16 %v4036, %v4032
    %v4457 = vpack.c.b16 %v4037, %v4033
    %v4458 = vpack.c.b16 %v4038, %v4034
    %v4459 = vpack.c.b16 %v4043, %v4039
    %v4460 = vpack.c.b16 %v4044, %v4040
    %v4461 = vpack.c.b16 %v4045, %v4041
    %v4462 = vpack.c.b16 %v4046, %v4042
    %v4463 = vpack.c.b16 %v4051, %v4047
    %v4464 = vpack.c.b16 %v4052, %v4048
    %v4465 = vpack.c.b16 %v4053, %v4049
    %v4466 = vpack.c.b16 %v4054, %v4050
    %v4467 = vpack.c.b16 %v4059, %v4055
    %v4468 = vpack.c.b16 %v4060, %v4056
    %v4469 = vpack.c.b16 %v4061, %v4057
    %v4470 = vpack.c.b16 %v4062, %v4058
    %v4471 = vpack.c.b16 %v4067, %v4063
    %v4472 = vpack.c.b16 %v4068, %v4064
    %v4473 = vpack.c.b16 %v4069, %v4065
    %v4474 = vpack.c.b16 %v4070, %v4066
    %v4475 = vpack.c.b16 %v4075, %v4071
    %v4476 = vpack.c.b16 %v4076, %v4072
    %v4477 = vpack.c.b16 %v4077, %v4073
    %v4478 = vpack.c.b16 %v4078, %v4074
    %v4479 = vpack.c.b16 %v4083, %v4079
    %v4480 = vpack.c.b16 %v4084, %v4080
    %v4481 = vpack.c.b16 %v4085, %v4081
    %v4482 = vpack.c.b16 %v4086, %v4082
    %v4483 = vpack.c.b16 %v4091, %v4087
    %v4484 = vpack.c.b16 %v4092, %v4088
    %v4485 = vpack.c.b16 %v4093, %v4089
    %v4486 = vpack.c.b16 %v4094, %v4090
    %v4487 = vpack.c.b16 %v4099, %v4095
    %v4488 = vpack.c.b16 %v4100, %v4096
    %v4489 = vpack.c.b16 %v4101, %v4097
    %v4490 = vpack.c.b16 %v4102, %v4098
    %v4491 = vpack.c.b16 %v4107, %v4103
    %v4492 = vpack.c.b16 %v4108, %v4104
    %v4493 = vpack.c.b16 %v4109, %v4105
    %v4494 = vpack.c.b16 %v4110, %v4106
    %v4495 = vpack.c.b16 %v4115, %v4111
    %v4496 = vpack.c.b16 %v4116, %v4112
    %v4497 = vpack.c.b16 %v4117, %v4113
    %v4498 = vpack.c.b16 %v4118, %v4114
    %v4499 = vpack.c.b16 %v4123, %v4119
    %v4500 = vpack.c.b16 %v4124, %v4120
    %v4501 = vpack.c.b16 %v4125, %v4121
    %v4502 = vpack.c.b16 %v4126, %v4122
    %v4503 = vpack.c.b16 %v4131, %v4127
    %v4504 = vpack.c.b16 %v4132, %v4128
    %v4505 = vpack.c.b16 %v4133, %v4129
    %v4506 = vpack.c.b16 %v4134, %v4130
    %v4507 = vpack.c.b16 %v4139, %v4135
    %v4508 = vpack.c.b16 %v4140, %v4136
    %v4509 = vpack.c.b16 %v4141, %v4137
    %v4510 = vpack.c.b16 %v4142, %v4138
    %v4511 = vpack.c.b16 %v4147, %v4143
    %v4512 = vpack.c.b16 %v4148, %v4144
    %v4513 = vpack.c.b16 %v4149, %v4145
    %v4514 = vpack.c.b16 %v4150, %v4146
    %v4515 = vpack.c.b16 %v4155, %v4151
    %v4516 = vpack.c.b16 %v4156, %v4152
    %v4517 = vpack.c.b16 %v4157, %v4153
    %v4518 = vpack.c.b16 %v4158, %v4154
    %v4519 = vpack.c.b16 %v4163, %v4159
    %v4520 = vpack.c.b16 %v4164, %v4160
    %v4521 = vpack.c.b16 %v4165, %v4161
    %v4522 = vpack.c.b16 %v4166, %v4162
    %v4523 = vpack.c.b16 %v4171, %v4167
    %v4524 = vpack.c.b16 %v4172, %v4168
    %v4525 = vpack.c.b16 %v4173, %v4169
    %v4526 = vpack.c.b16 %v4174, %v4170
    %v4527 = vpack.c.b16 %v4179, %v4175
    %v4528 = vpack.c.b16 %v4180, %v4176
    %v4529 = vpack.c.b16 %v4181, %v4177
    %v4530 = vpack.c.b16 %v4182, %v4178
    %v4531 = vpack.c.b16 %v4187, %v4183
    %v4532 = vpack.c.b16 %v4188, %v4184
    %v4533 = vpack.c.b16 %v4189, %v4185
    %v4534 = vpack.c.b16 %v4190, %v4186
    %v4535 = vpack.c.b16 %v4195, %v4191
    %v4536 = vpack.c.b16 %v4196, %v4192
    %v4537 = vpack.c.b16 %v4197, %v4193
    %v4538 = vpack.c.b16 %v4198, %v4194
    %v4539 = vpack.c.b16 %v4203, %v4199
    %v4540 = vpack.c.b16 %v4204, %v4200
    %v4541 = vpack.c.b16 %v4205, %v4201
    %v4542 = vpack.c.b16 %v4206, %v4202
    %v4543 = vpack.c.b16 %v4211, %v4207
    %v4544 = vpack.c.b16 %v4212, %v4208
    %v4545 = vpack.c.b16 %v4213, %v4209
    %v4546 = vpack.c.b16 %v4214, %v4210
    %v4547 = vpack.c.b16 %v4219, %v4215
    %v4548 = vpack.c.b16 %v4220, %v4216
    %v4549 = vpack.c.b16 %v4221, %v4217
    %v4550 = vpack.c.b16 %v4222, %v4218
    %v4551 = vpack.c.b16 %v4227, %v4223
    %v4552 = vpack.c.b16 %v4228, %v4224
    %v4553 = vpack.c.b16 %v4229, %v4225
    %v4554 = vpack.c.b16 %v4230, %v4226
    %v4555 = vpack.c.b16 %v4235, %v4231
    %v4556 = vpack.c.b16 %v4236, %v4232
    %v4557 = vpack.c.b16 %v4237, %v4233
    %v4558 = vpack.c.b16 %v4238, %v4234
    %v4559 = vpack.c.b16 %v4243, %v4239
    %v4560 = vpack.c.b16 %v4244, %v4240
    %v4561 = vpack.c.b16 %v4245, %v4241
    %v4562 = vpack.c.b16 %v4246, %v4242
    %v4563 = vpack.c.b16 %v4251, %v4247
    %v4564 = vpack.c.b16 %v4252, %v4248
    %v4565 = vpack.c.b16 %v4253, %v4249
    %v4566 = vpack.c.b16 %v4254, %v4250
    %v4567 = vpack.c.b16 %v4259, %v4255
    %v4568 = vpack.c.b16 %v4260, %v4256
    %v4569 = vpack.c.b16 %v4261, %v4257
    %v4570 = vpack.c.b16 %v4262, %v4258
    %v4571 = vpack.c.b16 %v4267, %v4263
    %v4572 = vpack.c.b16 %v4268, %v4264
    %v4573 = vpack.c.b16 %v4269, %v4265
    %v4574 = vpack.c.b16 %v4270, %v4266
    %v4575 = vpack.c.b16 %v4275, %v4271
    %v4576 = vpack.c.b16 %v4276, %v4272
    %v4577 = vpack.c.b16 %v4277, %v4273
    %v4578 = vpack.c.b16 %v4278, %v4274
    %v4579 = vpack.c.b16 %v4283, %v4279
    %v4580 = vpack.c.b16 %v4284, %v4280
    %v4581 = vpack.c.b16 %v4285, %v4281
    %v4582 = vpack.c.b16 %v4286, %v4282
    %v4583 = vpack.c.b16 %v4291, %v4287
    %v4584 = vpack.c.b16 %v4292, %v4288
    %v4585 = vpack.c.b16 %v4293, %v4289
    %v4586 = vpack.c.b16 %v4294, %v4290
    %v4587 = vpack.c.b16 %v4299, %v4295
    %v4588 = vpack.c.b16 %v4300, %v4296
    %v4589 = vpack.c.b16 %v4301, %v4297
    %v4590 = vpack.c.b16 %v4302, %v4298
    %v4591 = vpack.c.b16 %v4307, %v4303
    %v4592 = vpack.c.b16 %v4308, %v4304
    %v4593 = vpack.c.b16 %v4309, %v4305
    %v4594 = vpack.c.b16 %v4310, %v4306
    %v4595 = vpack.c.b16 %v4315, %v4311
    %v4596 = vpack.c.b16 %v4316, %v4312
    %v4597 = vpack.c.b16 %v4317, %v4313
    %v4598 = vpack.c.b16 %v4318, %v4314
    %v4599 = vpack.c.b16 %v4323, %v4319
    %v4600 = vpack.c.b16 %v4324, %v4320
    %v4601 = vpack.c.b16 %v4325, %v4321
    %v4602 = vpack.c.b16 %v4326, %v4322
    %v4603 = vpack.c.b16 %v4331, %v4327
    %v4604 = vpack.c.b16 %v4332, %v4328
    %v4605 = vpack.c.b16 %v4333, %v4329
    %v4606 = vpack.c.b16 %v4334, %v4330
    %v4607 = vpack.c.b16 %v4339, %v4335
    %v4608 = vpack.c.b16 %v4340, %v4336
    %v4609 = vpack.c.b16 %v4341, %v4337
    %v4610 = vpack.c.b16 %v4342, %v4338
    %v4611 = vpack.c.b16 %v4347, %v4343
    %v4612 = vpack.c.b16 %v4348, %v4344
    %v4613 = vpack.c.b16 %v4349, %v4345
    %v4614 = vpack.c.b16 %v4350, %v4346
    %v4615 = vpack.c.b16 %v4355, %v4351
    %v4616 = vpack.c.b16 %v4356, %v4352
    %v4617 = vpack.c.b16 %v4357, %v4353
    %v4618 = vpack.c.b16 %v4358, %v4354
    %v4619 = vpack.c.b16 %v4363, %v4359
    %v4620 = vpack.c.b16 %v4364, %v4360
    %v4621 = vpack.c.b16 %v4365, %v4361
    %v4622 = vpack.c.b16 %v4366, %v4362
    %4879 = vmatprep.subr.bf16.mxu0 %v4368
    %4880 = vmatpush1.bf16.msra.mxu0 %v4367
    %4881 = vmatprep.subr.bf16.mxu0 %v4372
    %4882 = vmatpush1.bf16.msra.mxu0 %v4371
    %4883 = vmatprep.subr.bf16.mxu0 %v4376
    %4884 = vmatpush1.bf16.msra.mxu0 %v4375
    %4885 = vmatprep.subr.bf16.mxu0 %v4380
    %4886 = vmatpush1.bf16.msra.mxu0 %v4379
    %4887 = vmatprep.subr.bf16.mxu0 %v4384
    %4888 = vmatpush1.bf16.msra.mxu0 %v4383
    %4889 = vmatprep.subr.bf16.mxu0 %v4388
    %4890 = vmatpush1.bf16.msra.mxu0 %v4387
    %4891 = vmatprep.subr.bf16.mxu0 %v4392
    %4892 = vmatpush1.bf16.msra.mxu0 %v4391
    %4893 = vmatprep.subr.bf16.mxu0 %v4396
    %4894 = vmatpush1.bf16.msra.mxu0 %v4395
    %4895 = vmatprep.subr.bf16.mxu0 %v4400
    %4896 = vmatpush1.bf16.msra.mxu0 %v4399
    %4897 = vmatprep.subr.bf16.mxu0 %v4404
    %4898 = vmatpush1.bf16.msra.mxu0 %v4403
    %4899 = vmatprep.subr.bf16.mxu0 %v4408
    %4900 = vmatpush1.bf16.msra.mxu0 %v4407
    %4901 = vmatprep.subr.bf16.mxu0 %v4412
    %4902 = vmatpush1.bf16.msra.mxu0 %v4411
    %4903 = vmatprep.subr.bf16.mxu0 %v4416
    %4904 = vmatpush1.bf16.msra.mxu0 %v4415
    %4905 = vmatprep.subr.bf16.mxu0 %v4420
    %4906 = vmatpush1.bf16.msra.mxu0 %v4419
    %4907 = vmatprep.subr.bf16.mxu0 %v4424
    %4908 = vmatpush1.bf16.msra.mxu0 %v4423
    %4909 = vmatprep.subr.bf16.mxu0 %v4428
    %4910 = vmatpush1.bf16.msra.mxu0 %v4427
    %4911 = vmatprep.mubr.bf16.mxu0 %v3314
    %4912 = vmatmul.mubr.bf16.gmra.mrb[0].mxu0 %v3313
    %v4913 = vpop.f32.mrb[0].mxu0
    %v4914 = vadd.f32 %v3582, %v4913
    %v4915 = vpop.f32.mrb[0].mxu0
    %v4916 = vadd.f32 %v3586, %v4915
    %v4917 = vpop.f32.mrb[0].mxu0
    %v4918 = vadd.f32 %v3582, %v4917
    %v4919 = vpop.f32.mrb[0].mxu0
    %v4920 = vadd.f32 %v3586, %v4919
    %4921 = vdwg.mxu0
    %4922 = vmatprep.subr.bf16.mxu0 %v4432
    %4923 = vmatpush1.bf16.msra.mxu0 %v4431
    %4924 = vmatprep.subr.bf16.mxu0 %v4436
    %4925 = vmatpush1.bf16.msra.mxu0 %v4435
    %4926 = vmatprep.subr.bf16.mxu0 %v4440
    %4927 = vmatpush1.bf16.msra.mxu0 %v4439
    %4928 = vmatprep.subr.bf16.mxu0 %v4444
    %4929 = vmatpush1.bf16.msra.mxu0 %v4443
    %4930 = vmatprep.subr.bf16.mxu0 %v4448
    %4931 = vmatpush1.bf16.msra.mxu0 %v4447
    %4932 = vmatprep.subr.bf16.mxu0 %v4452
    %4933 = vmatpush1.bf16.msra.mxu0 %v4451
    %4934 = vmatprep.subr.bf16.mxu0 %v4456
    %4935 = vmatpush1.bf16.msra.mxu0 %v4455
    %4936 = vmatprep.subr.bf16.mxu0 %v4460
    %4937 = vmatpush1.bf16.msra.mxu0 %v4459
    %4938 = vmatprep.subr.bf16.mxu0 %v4464
    %4939 = vmatpush1.bf16.msra.mxu0 %v4463
    %4940 = vmatprep.subr.bf16.mxu0 %v4468
    %4941 = vmatpush1.bf16.msra.mxu0 %v4467
    %4942 = vmatprep.subr.bf16.mxu0 %v4472
    %4943 = vmatpush1.bf16.msra.mxu0 %v4471
    %4944 = vmatprep.subr.bf16.mxu0 %v4476
    %4945 = vmatpush1.bf16.msra.mxu0 %v4475
    %4946 = vmatprep.subr.bf16.mxu0 %v4480
    %4947 = vmatpush1.bf16.msra.mxu0 %v4479
    %4948 = vmatprep.subr.bf16.mxu0 %v4484
    %4949 = vmatpush1.bf16.msra.mxu0 %v4483
    %4950 = vmatprep.subr.bf16.mxu0 %v4488
    %4951 = vmatpush1.bf16.msra.mxu0 %v4487
    %4952 = vmatprep.subr.bf16.mxu0 %v4492
    %4953 = vmatpush1.bf16.msra.mxu0 %v4491
    %4954 = vmatprep.mubr.bf16.mxu0 %v3316
    %4955 = vmatmul.mubr.bf16.gmra.mrb[0].mxu0 %v3315
    %v4956 = vpop.f32.mrb[0].mxu0
    %v4957 = vadd.f32 %v4914, %v4956
    %v4958 = vpop.f32.mrb[0].mxu0
    %v4959 = vadd.f32 %v4916, %v4958
    %v4960 = vpop.f32.mrb[0].mxu0
    %v4961 = vadd.f32 %v4918, %v4960
    %v4962 = vpop.f32.mrb[0].mxu0
    %v4963 = vadd.f32 %v4920, %v4962
    %4964 = vdwg.mxu0
    %4965 = vmatprep.subr.bf16.mxu0 %v4496
    %4966 = vmatpush1.bf16.msra.mxu0 %v4495
    %4967 = vmatprep.subr.bf16.mxu0 %v4500
    %4968 = vmatpush1.bf16.msra.mxu0 %v4499
    %4969 = vmatprep.subr.bf16.mxu0 %v4504
    %4970 = vmatpush1.bf16.msra.mxu0 %v4503
    %4971 = vmatprep.subr.bf16.mxu0 %v4508
    %4972 = vmatpush1.bf16.msra.mxu0 %v4507
    %4973 = vmatprep.subr.bf16.mxu0 %v4512
    %4974 = vmatpush1.bf16.msra.mxu0 %v4511
    %4975 = vmatprep.subr.bf16.mxu0 %v4516
    %4976 = vmatpush1.bf16.msra.mxu0 %v4515
    %4977 = vmatprep.subr.bf16.mxu0 %v4520
    %4978 = vmatpush1.bf16.msra.mxu0 %v4519
    %4979 = vmatprep.subr.bf16.mxu0 %v4524
    %4980 = vmatpush1.bf16.msra.mxu0 %v4523
    %4981 = vmatprep.subr.bf16.mxu0 %v4528
    %4982 = vmatpush1.bf16.msra.mxu0 %v4527
    %4983 = vmatprep.subr.bf16.mxu0 %v4532
    %4984 = vmatpush1.bf16.msra.mxu0 %v4531
    %4985 = vmatprep.subr.bf16.mxu0 %v4536
    %4986 = vmatpush1.bf16.msra.mxu0 %v4535
    %4987 = vmatprep.subr.bf16.mxu0 %v4540
    %4988 = vmatpush1.bf16.msra.mxu0 %v4539
    %4989 = vmatprep.subr.bf16.mxu0 %v4544
    %4990 = vmatpush1.bf16.msra.mxu0 %v4543
    %4991 = vmatprep.subr.bf16.mxu0 %v4548
    %4992 = vmatpush1.bf16.msra.mxu0 %v4547
    %4993 = vmatprep.subr.bf16.mxu0 %v4552
    %4994 = vmatpush1.bf16.msra.mxu0 %v4551
    %4995 = vmatprep.subr.bf16.mxu0 %v4556
    %4996 = vmatpush1.bf16.msra.mxu0 %v4555
    %4997 = vmatprep.mubr.bf16.mxu0 %v3318
    %4998 = vmatmul.mubr.bf16.gmra.mrb[0].mxu0 %v3317
    %v4999 = vpop.f32.mrb[0].mxu0
    %v5000 = vadd.f32 %v4957, %v4999
    %v5001 = vpop.f32.mrb[0].mxu0
    %v5002 = vadd.f32 %v4959, %v5001
    %v5003 = vpop.f32.mrb[0].mxu0
    %v5004 = vadd.f32 %v4961, %v5003
    %v5005 = vpop.f32.mrb[0].mxu0
    %v5006 = vadd.f32 %v4963, %v5005
    %5007 = vdwg.mxu0
    %5008 = vmatprep.subr.bf16.mxu0 %v4560
    %5009 = vmatpush1.bf16.msra.mxu0 %v4559
    %5010 = vmatprep.subr.bf16.mxu0 %v4564
    %5011 = vmatpush1.bf16.msra.mxu0 %v4563
    %5012 = vmatprep.subr.bf16.mxu0 %v4568
    %5013 = vmatpush1.bf16.msra.mxu0 %v4567
    %5014 = vmatprep.subr.bf16.mxu0 %v4572
    %5015 = vmatpush1.bf16.msra.mxu0 %v4571
    %5016 = vmatprep.subr.bf16.mxu0 %v4576
    %5017 = vmatpush1.bf16.msra.mxu0 %v4575
    %5018 = vmatprep.subr.bf16.mxu0 %v4580
    %5019 = vmatpush1.bf16.msra.mxu0 %v4579
    %5020 = vmatprep.subr.bf16.mxu0 %v4584
    %5021 = vmatpush1.bf16.msra.mxu0 %v4583
    %5022 = vmatprep.subr.bf16.mxu0 %v4588
    %5023 = vmatpush1.bf16.msra.mxu0 %v4587
    %5024 = vmatprep.subr.bf16.mxu0 %v4592
    %5025 = vmatpush1.bf16.msra.mxu0 %v4591
    %5026 = vmatprep.subr.bf16.mxu0 %v4596
    %5027 = vmatpush1.bf16.msra.mxu0 %v4595
    %5028 = vmatprep.subr.bf16.mxu0 %v4600
    %5029 = vmatpush1.bf16.msra.mxu0 %v4599
    %5030 = vmatprep.subr.bf16.mxu0 %v4604
    %5031 = vmatpush1.bf16.msra.mxu0 %v4603
    %5032 = vmatprep.subr.bf16.mxu0 %v4608
    %5033 = vmatpush1.bf16.msra.mxu0 %v4607
    %5034 = vmatprep.subr.bf16.mxu0 %v4612
    %5035 = vmatpush1.bf16.msra.mxu0 %v4611
    %5036 = vmatprep.subr.bf16.mxu0 %v4616
    %5037 = vmatpush1.bf16.msra.mxu0 %v4615
    %5038 = vmatprep.subr.bf16.mxu0 %v4620
    %5039 = vmatpush1.bf16.msra.mxu0 %v4619
    %5040 = vmatprep.mubr.bf16.mxu0 %v3320
    %5041 = vmatmul.mubr.bf16.gmra.mrb[0].mxu0 %v3319
    %v5042 = vpop.f32.mrb[0].mxu0
    %v5043 = vadd.f32 %v5000, %v5042
    %v5044 = vpop.f32.mrb[0].mxu0
    %v5045 = vadd.f32 %v5002, %v5044
    %v5046 = vpop.f32.mrb[0].mxu0
    %v5047 = vadd.f32 %v5004, %v5046
    %v5048 = vpop.f32.mrb[0].mxu0
    %v5049 = vadd.f32 %v5006, %v5048
    %5050 = vdwg.mxu0
    %5051 = vmatprep.subr.bf16.mxu0 %v4370
    %5052 = vmatpush1.bf16.msra.mxu0 %v4369
    %5053 = vmatprep.subr.bf16.mxu0 %v4374
    %5054 = vmatpush1.bf16.msra.mxu0 %v4373
    %5055 = vmatprep.subr.bf16.mxu0 %v4378
    %5056 = vmatpush1.bf16.msra.mxu0 %v4377
    %5057 = vmatprep.subr.bf16.mxu0 %v4382
    %5058 = vmatpush1.bf16.msra.mxu0 %v4381
    %5059 = vmatprep.subr.bf16.mxu0 %v4386
    %5060 = vmatpush1.bf16.msra.mxu0 %v4385
    %5061 = vmatprep.subr.bf16.mxu0 %v4390
    %5062 = vmatpush1.bf16.msra.mxu0 %v4389
    %5063 = vmatprep.subr.bf16.mxu0 %v4394
    %5064 = vmatpush1.bf16.msra.mxu0 %v4393
    %5065 = vmatprep.subr.bf16.mxu0 %v4398
    %5066 = vmatpush1.bf16.msra.mxu0 %v4397
    %5067 = vmatprep.subr.bf16.mxu0 %v4402
    %5068 = vmatpush1.bf16.msra.mxu0 %v4401
    %5069 = vmatprep.subr.bf16.mxu0 %v4406
    %5070 = vmatpush1.bf16.msra.mxu0 %v4405
    %5071 = vmatprep.subr.bf16.mxu0 %v4410
    %5072 = vmatpush1.bf16.msra.mxu0 %v4409
    %5073 = vmatprep.subr.bf16.mxu0 %v4414
    %5074 = vmatpush1.bf16.msra.mxu0 %v4413
    %5075 = vmatprep.subr.bf16.mxu0 %v4418
    %5076 = vmatpush1.bf16.msra.mxu0 %v4417
    %5077 = vmatprep.subr.bf16.mxu0 %v4422
    %5078 = vmatpush1.bf16.msra.mxu0 %v4421
    %5079 = vmatprep.subr.bf16.mxu0 %v4426
    %5080 = vmatpush1.bf16.msra.mxu0 %v4425
    %5081 = vmatprep.subr.bf16.mxu0 %v4430
    %5082 = vmatpush1.bf16.msra.mxu0 %v4429
    %5083 = vmatprep.mubr.bf16.mxu0 %v3314
    %5084 = vmatmul.mubr.bf16.gmra.mrb[0].mxu0 %v3313
    %v5085 = vpop.f32.mrb[0].mxu0
    %v5086 = vadd.f32 %v3590, %v5085
    %v5087 = vpop.f32.mrb[0].mxu0
    %v5088 = vadd.f32 %v3594, %v5087
    %v5089 = vpop.f32.mrb[0].mxu0
    %v5090 = vadd.f32 %v3590, %v5089
    %v5091 = vpop.f32.mrb[0].mxu0
    %v5092 = vadd.f32 %v3594, %v5091
    %5093 = vdwg.mxu0
    %5094 = vmatprep.subr.bf16.mxu0 %v4434
    %5095 = vmatpush1.bf16.msra.mxu0 %v4433
    %5096 = vmatprep.subr.bf16.mxu0 %v4438
    %5097 = vmatpush1.bf16.msra.mxu0 %v4437
    %5098 = vmatprep.subr.bf16.mxu0 %v4442
    %5099 = vmatpush1.bf16.msra.mxu0 %v4441
    %5100 = vmatprep.subr.bf16.mxu0 %v4446
    %5101 = vmatpush1.bf16.msra.mxu0 %v4445
    %5102 = vmatprep.subr.bf16.mxu0 %v4450
    %5103 = vmatpush1.bf16.msra.mxu0 %v4449
    %5104 = vmatprep.subr.bf16.mxu0 %v4454
    %5105 = vmatpush1.bf16.msra.mxu0 %v4453
    %5106 = vmatprep.subr.bf16.mxu0 %v4458
    %5107 = vmatpush1.bf16.msra.mxu0 %v4457
    %5108 = vmatprep.subr.bf16.mxu0 %v4462
    %5109 = vmatpush1.bf16.msra.mxu0 %v4461
    %5110 = vmatprep.subr.bf16.mxu0 %v4466
    %5111 = vmatpush1.bf16.msra.mxu0 %v4465
    %5112 = vmatprep.subr.bf16.mxu0 %v4470
    %5113 = vmatpush1.bf16.msra.mxu0 %v4469
    %5114 = vmatprep.subr.bf16.mxu0 %v4474
    %5115 = vmatpush1.bf16.msra.mxu0 %v4473
    %5116 = vmatprep.subr.bf16.mxu0 %v4478
    %5117 = vmatpush1.bf16.msra.mxu0 %v4477
    %5118 = vmatprep.subr.bf16.mxu0 %v4482
    %5119 = vmatpush1.bf16.msra.mxu0 %v4481
    %5120 = vmatprep.subr.bf16.mxu0 %v4486
    %5121 = vmatpush1.bf16.msra.mxu0 %v4485
    %5122 = vmatprep.subr.bf16.mxu0 %v4490
    %5123 = vmatpush1.bf16.msra.mxu0 %v4489
    %5124 = vmatprep.subr.bf16.mxu0 %v4494
    %5125 = vmatpush1.bf16.msra.mxu0 %v4493
    %5126 = vmatprep.mubr.bf16.mxu0 %v3316
    %5127 = vmatmul.mubr.bf16.gmra.mrb[0].mxu0 %v3315
    %v5128 = vpop.f32.mrb[0].mxu0
    %v5129 = vadd.f32 %v5086, %v5128
    %v5130 = vpop.f32.mrb[0].mxu0
    %v5131 = vadd.f32 %v5088, %v5130
    %v5132 = vpop.f32.mrb[0].mxu0
    %v5133 = vadd.f32 %v5090, %v5132
    %v5134 = vpop.f32.mrb[0].mxu0
    %v5135 = vadd.f32 %v5092, %v5134
    %5136 = vdwg.mxu0
    %5137 = vmatprep.subr.bf16.mxu0 %v4498
    %5138 = vmatpush1.bf16.msra.mxu0 %v4497
    %5139 = vmatprep.subr.bf16.mxu0 %v4502
    %5140 = vmatpush1.bf16.msra.mxu0 %v4501
    %5141 = vmatprep.subr.bf16.mxu0 %v4506
    %5142 = vmatpush1.bf16.msra.mxu0 %v4505
    %5143 = vmatprep.subr.bf16.mxu0 %v4510
    %5144 = vmatpush1.bf16.msra.mxu0 %v4509
    %5145 = vmatprep.subr.bf16.mxu0 %v4514
    %5146 = vmatpush1.bf16.msra.mxu0 %v4513
    %5147 = vmatprep.subr.bf16.mxu0 %v4518
    %5148 = vmatpush1.bf16.msra.mxu0 %v4517
    %5149 = vmatprep.subr.bf16.mxu0 %v4522
    %5150 = vmatpush1.bf16.msra.mxu0 %v4521
    %5151 = vmatprep.subr.bf16.mxu0 %v4526
    %5152 = vmatpush1.bf16.msra.mxu0 %v4525
    %5153 = vmatprep.subr.bf16.mxu0 %v4530
    %5154 = vmatpush1.bf16.msra.mxu0 %v4529
    %5155 = vmatprep.subr.bf16.mxu0 %v4534
    %5156 = vmatpush1.bf16.msra.mxu0 %v4533
    %5157 = vmatprep.subr.bf16.mxu0 %v4538
    %5158 = vmatpush1.bf16.msra.mxu0 %v4537
    %5159 = vmatprep.subr.bf16.mxu0 %v4542
    %5160 = vmatpush1.bf16.msra.mxu0 %v4541
    %5161 = vmatprep.subr.bf16.mxu0 %v4546
    %5162 = vmatpush1.bf16.msra.mxu0 %v4545
    %5163 = vmatprep.subr.bf16.mxu0 %v4550
    %5164 = vmatpush1.bf16.msra.mxu0 %v4549
    %5165 = vmatprep.subr.bf16.mxu0 %v4554
    %5166 = vmatpush1.bf16.msra.mxu0 %v4553
    %5167 = vmatprep.subr.bf16.mxu0 %v4558
    %5168 = vmatpush1.bf16.msra.mxu0 %v4557
    %5169 = vmatprep.mubr.bf16.mxu0 %v3318
    %5170 = vmatmul.mubr.bf16.gmra.mrb[0].mxu0 %v3317
    %v5171 = vpop.f32.mrb[0].mxu0
    %v5172 = vadd.f32 %v5129, %v5171
    %v5173 = vpop.f32.mrb[0].mxu0
    %v5174 = vadd.f32 %v5131, %v5173
    %v5175 = vpop.f32.mrb[0].mxu0
    %v5176 = vadd.f32 %v5133, %v5175
    %v5177 = vpop.f32.mrb[0].mxu0
    %v5178 = vadd.f32 %v5135, %v5177
    %5179 = vdwg.mxu0
    %5180 = vmatprep.subr.bf16.mxu0 %v4562
    %5181 = vmatpush1.bf16.msra.mxu0 %v4561
    %5182 = vmatprep.subr.bf16.mxu0 %v4566
    %5183 = vmatpush1.bf16.msra.mxu0 %v4565
    %5184 = vmatprep.subr.bf16.mxu0 %v4570
    %5185 = vmatpush1.bf16.msra.mxu0 %v4569
    %5186 = vmatprep.subr.bf16.mxu0 %v4574
    %5187 = vmatpush1.bf16.msra.mxu0 %v4573
    %5188 = vmatprep.subr.bf16.mxu0 %v4578
    %5189 = vmatpush1.bf16.msra.mxu0 %v4577
    %5190 = vmatprep.subr.bf16.mxu0 %v4582
    %5191 = vmatpush1.bf16.msra.mxu0 %v4581
    %5192 = vmatprep.subr.bf16.mxu0 %v4586
    %5193 = vmatpush1.bf16.msra.mxu0 %v4585
    %5194 = vmatprep.subr.bf16.mxu0 %v4590
    %5195 = vmatpush1.bf16.msra.mxu0 %v4589
    %5196 = vmatprep.subr.bf16.mxu0 %v4594
    %5197 = vmatpush1.bf16.msra.mxu0 %v4593
    %5198 = vmatprep.subr.bf16.mxu0 %v4598
    %5199 = vmatpush1.bf16.msra.mxu0 %v4597
    %5200 = vmatprep.subr.bf16.mxu0 %v4602
    %5201 = vmatpush1.bf16.msra.mxu0 %v4601
    %5202 = vmatprep.subr.bf16.mxu0 %v4606
    %5203 = vmatpush1.bf16.msra.mxu0 %v4605
    %5204 = vmatprep.subr.bf16.mxu0 %v4610
    %5205 = vmatpush1.bf16.msra.mxu0 %v4609
    %5206 = vmatprep.subr.bf16.mxu0 %v4614
    %5207 = vmatpush1.bf16.msra.mxu0 %v4613
    %5208 = vmatprep.subr.bf16.mxu0 %v4618
    %5209 = vmatpush1.bf16.msra.mxu0 %v4617
    %5210 = vmatprep.subr.bf16.mxu0 %v4622
    %5211 = vmatpush1.bf16.msra.mxu0 %v4621
    %5212 = vmatprep.mubr.bf16.mxu0 %v3320
    %5213 = vmatmul.mubr.bf16.gmra.mrb[0].mxu0 %v3319
    %v5214 = vpop.f32.mrb[0].mxu0
    %v5215 = vadd.f32 %v5172, %v5214
    %v5216 = vpop.f32.mrb[0].mxu0
    %v5217 = vadd.f32 %v5174, %v5216
    %v5218 = vpop.f32.mrb[0].mxu0
    %v5219 = vadd.f32 %v5176, %v5218
    %v5220 = vpop.f32.mrb[0].mxu0
    %v5221 = vadd.f32 %v5178, %v5220
    %5222 = vdwg.mxu0
    %vm5223 = vcmp.gt.f32.partialorder %v5043, 0.0
    %vm5224 = vcmp.gt.f32.partialorder %v5045, 0.0
    %vm5225 = vcmp.gt.f32.partialorder %v5215, 0.0
    %vm5226 = vcmp.gt.f32.partialorder %v5217, 0.0
    %vm5227 = vcmp.gt.f32.partialorder %v5047, 0.0
    %vm5228 = vcmp.gt.f32.partialorder %v5049, 0.0
    %vm5229 = vcmp.gt.f32.partialorder %v5219, 0.0
    %vm5230 = vcmp.gt.f32.partialorder %v5221, 0.0
    %v5231 = vmul.f32 %v5043, 0.2
    %v5232 = vmul.f32 %v5045, 0.2
    %v5233 = vmul.f32 %v5215, 0.2
    %v5234 = vmul.f32 %v5217, 0.2
    %v5235 = vmul.f32 %v5047, 0.2
    %v5236 = vmul.f32 %v5049, 0.2
    %v5237 = vmul.f32 %v5219, 0.2
    %v5238 = vmul.f32 %v5221, 0.2
    %v5239 = vsel %vm5223, %v5043, %v5231
    %v5240 = vsel %vm5224, %v5045, %v5232
    %v5241 = vsel %vm5225, %v5215, %v5233
    %v5242 = vsel %vm5226, %v5217, %v5234
    %v5243 = vsel %vm5227, %v5047, %v5235
    %v5244 = vsel %vm5228, %v5049, %v5236
    %v5245 = vsel %vm5229, %v5219, %v5237
    %v5246 = vsel %vm5230, %v5221, %v5238
    %v5247 = vpack.c.bf16 %v5243, %v5239
    %v5248 = vpack.c.bf16 %v5244, %v5240
    %v5249 = vpack.c.bf16 %v5245, %v5241
    %v5250 = vpack.c.bf16 %v5246, %v5242
    %v5251 = vld [vmem:[#allocation11] sm:$0xff]
    %v5252 = vld [vmem:[#allocation11 + $0x8] sm:$0xff]
    %v5253 = vld [vmem:[#allocation11 + $0x10] sm:$0xff]
    %v5254 = vld [vmem:[#allocation11 + $0x18] sm:$0xff]
    %v5255 = vld [vmem:[#allocation11 + $0x20] sm:$0xff]
    %v5256 = vld [vmem:[#allocation11 + $0x28] sm:$0xff]
    %v5257 = vld [vmem:[#allocation11 + $0x30] sm:$0xff]
    %v5258 = vld [vmem:[#allocation11 + $0x38] sm:$0xff]
    %v5259 = vld [vmem:[#allocation11 + $0x40] sm:$0xff]
    %v5260 = vld [vmem:[#allocation11 + $0x48] sm:$0xff]
    %v5261 = vld [vmem:[#allocation11 + $0x50] sm:$0xff]
    %v5262 = vld [vmem:[#allocation11 + $0x58] sm:$0xff]
    %v5263 = vld [vmem:[#allocation11 + $0x60] sm:$0xff]
    %v5264 = vld [vmem:[#allocation11 + $0x68] sm:$0xff]
    %v5265 = vld [vmem:[#allocation11 + $0x70] sm:$0xff]
    %v5266 = vld [vmem:[#allocation11 + $0x78] sm:$0xff]
    %v5267 = vld [vmem:[#allocation11 + $0x80] sm:$0xff]
    %v5268 = vld [vmem:[#allocation11 + $0x88] sm:$0xff]
    %v5269 = vld [vmem:[#allocation11 + $0x90] sm:$0xff]
    %v5270 = vld [vmem:[#allocation11 + $0x98] sm:$0xff]
    %v5271 = vld [vmem:[#allocation11 + $0xa0] sm:$0xff]
    %v5272 = vld [vmem:[#allocation11 + $0xa8] sm:$0xff]
    %v5273 = vld [vmem:[#allocation11 + $0xb0] sm:$0xff]
    %v5274 = vld [vmem:[#allocation11 + $0xb8] sm:$0xff]
    %v5275 = vld [vmem:[#allocation11 + $0xc0] sm:$0xff]
    %v5276 = vld [vmem:[#allocation11 + $0xc8] sm:$0xff]
    %v5277 = vld [vmem:[#allocation11 + $0xd0] sm:$0xff]
    %v5278 = vld [vmem:[#allocation11 + $0xd8] sm:$0xff]
    %v5279 = vld [vmem:[#allocation11 + $0xe0] sm:$0xff]
    %v5280 = vld [vmem:[#allocation11 + $0xe8] sm:$0xff]
    %v5281 = vld [vmem:[#allocation11 + $0xf0] sm:$0xff]
    %v5282 = vld [vmem:[#allocation11 + $0xf8] sm:$0xff]
    %v5283 = vld [vmem:[#allocation11 + $0x100] sm:$0xff]
    %v5284 = vld [vmem:[#allocation11 + $0x108] sm:$0xff]
    %v5285 = vld [vmem:[#allocation11 + $0x110] sm:$0xff]
    %v5286 = vld [vmem:[#allocation11 + $0x118] sm:$0xff]
    %v5287 = vld [vmem:[#allocation11 + $0x120] sm:$0xff]
    %v5288 = vld [vmem:[#allocation11 + $0x128] sm:$0xff]
    %v5289 = vld [vmem:[#allocation11 + $0x130] sm:$0xff]
    %v5290 = vld [vmem:[#allocation11 + $0x138] sm:$0xff]
    %v5291 = vld [vmem:[#allocation11 + $0x140] sm:$0xff]
    %v5292 = vld [vmem:[#allocation11 + $0x148] sm:$0xff]
    %v5293 = vld [vmem:[#allocation11 + $0x150] sm:$0xff]
    %v5294 = vld [vmem:[#allocation11 + $0x158] sm:$0xff]
    %v5295 = vld [vmem:[#allocation11 + $0x160] sm:$0xff]
    %v5296 = vld [vmem:[#allocation11 + $0x168] sm:$0xff]
    %v5297 = vld [vmem:[#allocation11 + $0x170] sm:$0xff]
    %v5298 = vld [vmem:[#allocation11 + $0x178] sm:$0xff]
    %v5299 = vld [vmem:[#allocation11 + $0x180] sm:$0xff]
    %v5300 = vld [vmem:[#allocation11 + $0x188] sm:$0xff]
    %v5301 = vld [vmem:[#allocation11 + $0x190] sm:$0xff]
    %v5302 = vld [vmem:[#allocation11 + $0x198] sm:$0xff]
    %v5303 = vld [vmem:[#allocation11 + $0x1a0] sm:$0xff]
    %v5304 = vld [vmem:[#allocation11 + $0x1a8] sm:$0xff]
    %v5305 = vld [vmem:[#allocation11 + $0x1b0] sm:$0xff]
    %v5306 = vld [vmem:[#allocation11 + $0x1b8] sm:$0xff]
    %v5307 = vld [vmem:[#allocation11 + $0x1c0] sm:$0xff]
    %v5308 = vld [vmem:[#allocation11 + $0x1c8] sm:$0xff]
    %v5309 = vld [vmem:[#allocation11 + $0x1d0] sm:$0xff]
    %v5310 = vld [vmem:[#allocation11 + $0x1d8] sm:$0xff]
    %v5311 = vld [vmem:[#allocation11 + $0x1e0] sm:$0xff]
    %v5312 = vld [vmem:[#allocation11 + $0x1e8] sm:$0xff]
    %v5313 = vld [vmem:[#allocation11 + $0x1f0] sm:$0xff]
    %v5314 = vld [vmem:[#allocation11 + $0x1f8] sm:$0xff]
    %v5315 = vld [vmem:[#allocation13] sm:$0x3]
    %v5317 = vlaneseq
    %v5318 = vshrl.u32 %v5317, 7
    %v5319 = vsub.s32 0, %v5318
    %v5320 = vrot.slane %v5315, %v5319
    %v5321 = vlaneseq
    %v5322 = vshrl.u32 %v5321, 7
    %v5323 = vsub.s32 1, %v5322
    %v5324 = vrot.slane %v5315, %v5323
    %v5391 = vunpack.c.l.b16 %v5251
    %v5392 = vunpack.c.h.b16 %v5251
    %v5393 = vunpack.c.l.b16 %v5252
    %v5394 = vunpack.c.h.b16 %v5252
    %v5395 = vunpack.c.l.b16 %v5253
    %v5396 = vunpack.c.h.b16 %v5253
    %v5397 = vunpack.c.l.b16 %v5254
    %v5398 = vunpack.c.h.b16 %v5254
    %v5399 = vunpack.c.l.b16 %v5255
    %v5400 = vunpack.c.h.b16 %v5255
    %v5401 = vunpack.c.l.b16 %v5256
    %v5402 = vunpack.c.h.b16 %v5256
    %v5403 = vunpack.c.l.b16 %v5257
    %v5404 = vunpack.c.h.b16 %v5257
    %v5405 = vunpack.c.l.b16 %v5258
    %v5406 = vunpack.c.h.b16 %v5258
    %v5407 = vunpack.c.l.b16 %v5259
    %v5408 = vunpack.c.h.b16 %v5259
    %v5409 = vunpack.c.l.b16 %v5260
    %v5410 = vunpack.c.h.b16 %v5260
    %v5411 = vunpack.c.l.b16 %v5261
    %v5412 = vunpack.c.h.b16 %v5261
    %v5413 = vunpack.c.l.b16 %v5262
    %v5414 = vunpack.c.h.b16 %v5262
    %v5415 = vunpack.c.l.b16 %v5263
    %v5416 = vunpack.c.h.b16 %v5263
    %v5417 = vunpack.c.l.b16 %v5264
    %v5418 = vunpack.c.h.b16 %v5264
    %v5419 = vunpack.c.l.b16 %v5265
    %v5420 = vunpack.c.h.b16 %v5265
    %v5421 = vunpack.c.l.b16 %v5266
    %v5422 = vunpack.c.h.b16 %v5266
    %v5423 = vunpack.c.l.b16 %v5267
    %v5424 = vunpack.c.h.b16 %v5267
    %v5425 = vunpack.c.l.b16 %v5268
    %v5426 = vunpack.c.h.b16 %v5268
    %v5427 = vunpack.c.l.b16 %v5269
    %v5428 = vunpack.c.h.b16 %v5269
    %v5429 = vunpack.c.l.b16 %v5270
    %v5430 = vunpack.c.h.b16 %v5270
    %v5431 = vunpack.c.l.b16 %v5271
    %v5432 = vunpack.c.h.b16 %v5271
    %v5433 = vunpack.c.l.b16 %v5272
    %v5434 = vunpack.c.h.b16 %v5272
    %v5435 = vunpack.c.l.b16 %v5273
    %v5436 = vunpack.c.h.b16 %v5273
    %v5437 = vunpack.c.l.b16 %v5274
    %v5438 = vunpack.c.h.b16 %v5274
    %v5439 = vunpack.c.l.b16 %v5275
    %v5440 = vunpack.c.h.b16 %v5275
    %v5441 = vunpack.c.l.b16 %v5276
    %v5442 = vunpack.c.h.b16 %v5276
    %v5443 = vunpack.c.l.b16 %v5277
    %v5444 = vunpack.c.h.b16 %v5277
    %v5445 = vunpack.c.l.b16 %v5278
    %v5446 = vunpack.c.h.b16 %v5278
    %v5447 = vunpack.c.l.b16 %v5279
    %v5448 = vunpack.c.h.b16 %v5279
    %v5449 = vunpack.c.l.b16 %v5280
    %v5450 = vunpack.c.h.b16 %v5280
    %v5451 = vunpack.c.l.b16 %v5281
    %v5452 = vunpack.c.h.b16 %v5281
    %v5453 = vunpack.c.l.b16 %v5282
    %v5454 = vunpack.c.h.b16 %v5282
    %v5455 = vunpack.c.l.b16 %v5283
    %v5456 = vunpack.c.h.b16 %v5283
    %v5457 = vunpack.c.l.b16 %v5284
    %v5458 = vunpack.c.h.b16 %v5284
    %v5459 = vunpack.c.l.b16 %v5285
    %v5460 = vunpack.c.h.b16 %v5285
    %v5461 = vunpack.c.l.b16 %v5286
    %v5462 = vunpack.c.h.b16 %v5286
    %v5463 = vunpack.c.l.b16 %v5287
    %v5464 = vunpack.c.h.b16 %v5287
    %v5465 = vunpack.c.l.b16 %v5288
    %v5466 = vunpack.c.h.b16 %v5288
    %v5467 = vunpack.c.l.b16 %v5289
    %v5468 = vunpack.c.h.b16 %v5289
    %v5469 = vunpack.c.l.b16 %v5290
    %v5470 = vunpack.c.h.b16 %v5290
    %v5471 = vunpack.c.l.b16 %v5291
    %v5472 = vunpack.c.h.b16 %v5291
    %v5473 = vunpack.c.l.b16 %v5292
    %v5474 = vunpack.c.h.b16 %v5292
    %v5475 = vunpack.c.l.b16 %v5293
    %v5476 = vunpack.c.h.b16 %v5293
    %v5477 = vunpack.c.l.b16 %v5294
    %v5478 = vunpack.c.h.b16 %v5294
    %v5479 = vunpack.c.l.b16 %v5295
    %v5480 = vunpack.c.h.b16 %v5295
    %v5481 = vunpack.c.l.b16 %v5296
    %v5482 = vunpack.c.h.b16 %v5296
    %v5483 = vunpack.c.l.b16 %v5297
    %v5484 = vunpack.c.h.b16 %v5297
    %v5485 = vunpack.c.l.b16 %v5298
    %v5486 = vunpack.c.h.b16 %v5298
    %v5487 = vunpack.c.l.b16 %v5299
    %v5488 = vunpack.c.h.b16 %v5299
    %v5489 = vunpack.c.l.b16 %v5300
    %v5490 = vunpack.c.h.b16 %v5300
    %v5491 = vunpack.c.l.b16 %v5301
    %v5492 = vunpack.c.h.b16 %v5301
    %v5493 = vunpack.c.l.b16 %v5302
    %v5494 = vunpack.c.h.b16 %v5302
    %v5495 = vunpack.c.l.b16 %v5303
    %v5496 = vunpack.c.h.b16 %v5303
    %v5497 = vunpack.c.l.b16 %v5304
    %v5498 = vunpack.c.h.b16 %v5304
    %v5499 = vunpack.c.l.b16 %v5305
    %v5500 = vunpack.c.h.b16 %v5305
    %v5501 = vunpack.c.l.b16 %v5306
    %v5502 = vunpack.c.h.b16 %v5306
    %v5503 = vunpack.c.l.b16 %v5307
    %v5504 = vunpack.c.h.b16 %v5307
    %v5505 = vunpack.c.l.b16 %v5308
    %v5506 = vunpack.c.h.b16 %v5308
    %v5507 = vunpack.c.l.b16 %v5309
    %v5508 = vunpack.c.h.b16 %v5309
    %v5509 = vunpack.c.l.b16 %v5310
    %v5510 = vunpack.c.h.b16 %v5310
    %v5511 = vunpack.c.l.b16 %v5311
    %v5512 = vunpack.c.h.b16 %v5311
    %v5513 = vunpack.c.l.b16 %v5312
    %v5514 = vunpack.c.h.b16 %v5312
    %v5515 = vunpack.c.l.b16 %v5313
    %v5516 = vunpack.c.h.b16 %v5313
    %v5517 = vunpack.c.l.b16 %v5314
    %v5518 = vunpack.c.h.b16 %v5314
    %v5519 = vpack.c.b16 %v5393, %v5391
    %v5520 = vpack.c.b16 %v5394, %v5392
    %v5521 = vpack.c.b16 %v5397, %v5395
    %v5522 = vpack.c.b16 %v5398, %v5396
    %v5523 = vpack.c.b16 %v5401, %v5399
    %v5524 = vpack.c.b16 %v5402, %v5400
    %v5525 = vpack.c.b16 %v5405, %v5403
    %v5526 = vpack.c.b16 %v5406, %v5404
    %v5527 = vpack.c.b16 %v5409, %v5407
    %v5528 = vpack.c.b16 %v5410, %v5408
    %v5529 = vpack.c.b16 %v5413, %v5411
    %v5530 = vpack.c.b16 %v5414, %v5412
    %v5531 = vpack.c.b16 %v5417, %v5415
    %v5532 = vpack.c.b16 %v5418, %v5416
    %v5533 = vpack.c.b16 %v5421, %v5419
    %v5534 = vpack.c.b16 %v5422, %v5420
    %v5535 = vpack.c.b16 %v5425, %v5423
    %v5536 = vpack.c.b16 %v5426, %v5424
    %v5537 = vpack.c.b16 %v5429, %v5427
    %v5538 = vpack.c.b16 %v5430, %v5428
    %v5539 = vpack.c.b16 %v5433, %v5431
    %v5540 = vpack.c.b16 %v5434, %v5432
    %v5541 = vpack.c.b16 %v5437, %v5435
    %v5542 = vpack.c.b16 %v5438, %v5436
    %v5543 = vpack.c.b16 %v5441, %v5439
    %v5544 = vpack.c.b16 %v5442, %v5440
    %v5545 = vpack.c.b16 %v5445, %v5443
    %v5546 = vpack.c.b16 %v5446, %v5444
    %v5547 = vpack.c.b16 %v5449, %v5447
    %v5548 = vpack.c.b16 %v5450, %v5448
    %v5549 = vpack.c.b16 %v5453, %v5451
    %v5550 = vpack.c.b16 %v5454, %v5452
    %v5551 = vpack.c.b16 %v5457, %v5455
    %v5552 = vpack.c.b16 %v5458, %v5456
    %v5553 = vpack.c.b16 %v5461, %v5459
    %v5554 = vpack.c.b16 %v5462, %v5460
    %v5555 = vpack.c.b16 %v5465, %v5463
    %v5556 = vpack.c.b16 %v5466, %v5464
    %v5557 = vpack.c.b16 %v5469, %v5467
    %v5558 = vpack.c.b16 %v5470, %v5468
    %v5559 = vpack.c.b16 %v5473, %v5471
    %v5560 = vpack.c.b16 %v5474, %v5472
    %v5561 = vpack.c.b16 %v5477, %v5475
    %v5562 = vpack.c.b16 %v5478, %v5476
    %v5563 = vpack.c.b16 %v5481, %v5479
    %v5564 = vpack.c.b16 %v5482, %v5480
    %v5565 = vpack.c.b16 %v5485, %v5483
    %v5566 = vpack.c.b16 %v5486, %v5484
    %v5567 = vpack.c.b16 %v5489, %v5487
    %v5568 = vpack.c.b16 %v5490, %v5488
    %v5569 = vpack.c.b16 %v5493, %v5491
    %v5570 = vpack.c.b16 %v5494, %v5492
    %v5571 = vpack.c.b16 %v5497, %v5495
    %v5572 = vpack.c.b16 %v5498, %v5496
    %v5573 = vpack.c.b16 %v5501, %v5499
    %v5574 = vpack.c.b16 %v5502, %v5500
    %v5575 = vpack.c.b16 %v5505, %v5503
    %v5576 = vpack.c.b16 %v5506, %v5504
    %v5577 = vpack.c.b16 %v5509, %v5507
    %v5578 = vpack.c.b16 %v5510, %v5508
    %v5579 = vpack.c.b16 %v5513, %v5511
    %v5580 = vpack.c.b16 %v5514, %v5512
    %v5581 = vpack.c.b16 %v5517, %v5515
    %v5582 = vpack.c.b16 %v5518, %v5516
    %5647 = vmatprep.subr.bf16.mxu0 %v5520
    %5648 = vmatpush1.bf16.msra.mxu0 %v5519
    %5649 = vmatprep.subr.bf16.mxu0 %v5522
    %5650 = vmatpush1.bf16.msra.mxu0 %v5521
    %5651 = vmatprep.subr.bf16.mxu0 %v5524
    %5652 = vmatpush1.bf16.msra.mxu0 %v5523
    %5653 = vmatprep.subr.bf16.mxu0 %v5526
    %5654 = vmatpush1.bf16.msra.mxu0 %v5525
    %5655 = vmatprep.subr.bf16.mxu0 %v5528
    %5656 = vmatpush1.bf16.msra.mxu0 %v5527
    %5657 = vmatprep.subr.bf16.mxu0 %v5530
    %5658 = vmatpush1.bf16.msra.mxu0 %v5529
    %5659 = vmatprep.subr.bf16.mxu0 %v5532
    %5660 = vmatpush1.bf16.msra.mxu0 %v5531
    %5661 = vmatprep.subr.bf16.mxu0 %v5534
    %5662 = vmatpush1.bf16.msra.mxu0 %v5533
    %5663 = vmatprep.subr.bf16.mxu0 %v5536
    %5664 = vmatpush1.bf16.msra.mxu0 %v5535
    %5665 = vmatprep.subr.bf16.mxu0 %v5538
    %5666 = vmatpush1.bf16.msra.mxu0 %v5537
    %5667 = vmatprep.subr.bf16.mxu0 %v5540
    %5668 = vmatpush1.bf16.msra.mxu0 %v5539
    %5669 = vmatprep.subr.bf16.mxu0 %v5542
    %5670 = vmatpush1.bf16.msra.mxu0 %v5541
    %5671 = vmatprep.subr.bf16.mxu0 %v5544
    %5672 = vmatpush1.bf16.msra.mxu0 %v5543
    %5673 = vmatprep.subr.bf16.mxu0 %v5546
    %5674 = vmatpush1.bf16.msra.mxu0 %v5545
    %5675 = vmatprep.subr.bf16.mxu0 %v5548
    %5676 = vmatpush1.bf16.msra.mxu0 %v5547
    %5677 = vmatprep.subr.bf16.mxu0 %v5550
    %5678 = vmatpush1.bf16.msra.mxu0 %v5549
    %5679 = vmatprep.mubr.bf16.mxu0 %v5248
    %5680 = vmatmul.mubr.bf16.gmra.mrb[0].mxu0 %v5247
    %v5681 = vpop.f32.mrb[0].mxu0
    %v5682 = vadd.f32 %v5320, %v5681
    %v5683 = vpop.f32.mrb[0].mxu0
    %v5684 = vadd.f32 %v5324, %v5683
    %v5685 = vpop.f32.mrb[0].mxu0
    %v5686 = vadd.f32 %v5320, %v5685
    %v5687 = vpop.f32.mrb[0].mxu0
    %v5688 = vadd.f32 %v5324, %v5687
    %5689 = vdwg.mxu0
    %5690 = vmatprep.subr.bf16.mxu0 %v5552
    %5691 = vmatpush1.bf16.msra.mxu0 %v5551
    %5692 = vmatprep.subr.bf16.mxu0 %v5554
    %5693 = vmatpush1.bf16.msra.mxu0 %v5553
    %5694 = vmatprep.subr.bf16.mxu0 %v5556
    %5695 = vmatpush1.bf16.msra.mxu0 %v5555
    %5696 = vmatprep.subr.bf16.mxu0 %v5558
    %5697 = vmatpush1.bf16.msra.mxu0 %v5557
    %5698 = vmatprep.subr.bf16.mxu0 %v5560
    %5699 = vmatpush1.bf16.msra.mxu0 %v5559
    %5700 = vmatprep.subr.bf16.mxu0 %v5562
    %5701 = vmatpush1.bf16.msra.mxu0 %v5561
    %5702 = vmatprep.subr.bf16.mxu0 %v5564
    %5703 = vmatpush1.bf16.msra.mxu0 %v5563
    %5704 = vmatprep.subr.bf16.mxu0 %v5566
    %5705 = vmatpush1.bf16.msra.mxu0 %v5565
    %5706 = vmatprep.subr.bf16.mxu0 %v5568
    %5707 = vmatpush1.bf16.msra.mxu0 %v5567
    %5708 = vmatprep.subr.bf16.mxu0 %v5570
    %5709 = vmatpush1.bf16.msra.mxu0 %v5569
    %5710 = vmatprep.subr.bf16.mxu0 %v5572
    %5711 = vmatpush1.bf16.msra.mxu0 %v5571
    %5712 = vmatprep.subr.bf16.mxu0 %v5574
    %5713 = vmatpush1.bf16.msra.mxu0 %v5573
    %5714 = vmatprep.subr.bf16.mxu0 %v5576
    %5715 = vmatpush1.bf16.msra.mxu0 %v5575
    %5716 = vmatprep.subr.bf16.mxu0 %v5578
    %5717 = vmatpush1.bf16.msra.mxu0 %v5577
    %5718 = vmatprep.subr.bf16.mxu0 %v5580
    %5719 = vmatpush1.bf16.msra.mxu0 %v5579
    %5720 = vmatprep.subr.bf16.mxu0 %v5582
    %5721 = vmatpush1.bf16.msra.mxu0 %v5581
    %5722 = vmatprep.mubr.bf16.mxu0 %v5250
    %5723 = vmatmul.mubr.bf16.gmra.mrb[0].mxu0 %v5249
    %v5724 = vpop.f32.mrb[0].mxu0
    %v5725 = vadd.f32 %v5682, %v5724
    %v5726 = vpop.f32.mrb[0].mxu0
    %v5727 = vadd.f32 %v5684, %v5726
    %v5728 = vpop.f32.mrb[0].mxu0
    %v5729 = vadd.f32 %v5686, %v5728
    %v5730 = vpop.f32.mrb[0].mxu0
    %v5731 = vadd.f32 %v5688, %v5730
    %5732 = vdwg.mxu0
    %vm5733 = vcmp.gt.f32.partialorder %v5725, 0.0
    %vm5734 = vcmp.gt.f32.partialorder %v5727, 0.0
    %vm5735 = vcmp.gt.f32.partialorder %v5729, 0.0
    %vm5736 = vcmp.gt.f32.partialorder %v5731, 0.0
    %v5737 = vmul.f32 %v5725, 0.2
    %v5738 = vmul.f32 %v5727, 0.2
    %v5739 = vmul.f32 %v5729, 0.2
    %v5740 = vmul.f32 %v5731, 0.2
    %v5741 = vsel %vm5733, %v5725, %v5737
    %v5742 = vsel %vm5734, %v5727, %v5738
    %v5743 = vsel %vm5735, %v5729, %v5739
    %v5744 = vsel %vm5736, %v5731, %v5740
    %v5745 = vld [vmem:[#allocation14] sm:$0x3]
    %v5747 = vlaneseq
    %v5748 = vshrl.u32 %v5747, 7
    %v5749 = vsub.s32 0, %v5748
    %v5750 = vrot.slane %v5745, %v5749
    %v5751 = vlaneseq
    %v5752 = vshrl.u32 %v5751, 7
    %v5753 = vsub.s32 1, %v5752
    %v5754 = vrot.slane %v5745, %v5753
    %v5757 = vmul.f32 %v5741, %v5750
    %v5758 = vmul.f32 %v5742, %v5754
    %v5759 = vmul.f32 %v5743, %v5750
    %v5760 = vmul.f32 %v5744, %v5754
    %v5761 = vadd.f32 %v5757, %v5758
    %5762 = vadd.xlane.f32.xlu0 %v5761
    %v5763 = vpop.xlane.xlu0 %5762
    %v5764 = vadd.f32 %v5759, %v5760
    %5765 = vadd.xlane.f32.xlu0 %v5764
    %v5766 = vpop.xlane.xlu0 %5765
    %v5767 = vld [vmem:[#allocation2] sm:$0x1]
    %v5769 = vlaneseq
    %v5770 = vshrl.u32 %v5769, 7
    %v5771 = vsub.s32 0, %v5770
    %v5772 = vrot.slane %v5767, %v5771
    %v5774 = vadd.f32 %v5763, %v5772
    %v5775 = vadd.f32 %v5766, %v5772
    %v5776 = vsub.f32 0.0, %v5774
    %v5777 = vsub.f32 0.0, %v5775
    %v5778 = vmul.f32 %v5776, 1.442695
    %v5779 = vpow.pop %v5778
    %v5780 = vmul.f32 %v5777, 1.442695
    %v5781 = vpow.pop %v5780
    %v5782 = vadd.f32 %v5779, 1.0
    %v5783 = vadd.f32 %v5781, 1.0
    %v5784 = vrcp.pop %v5782
    %v5785 = vrcp.pop %v5783
    %vm5786 = vcmask 7168
    %5787 = vst.msk [vmem:[%s9] sm:$0xff] %vm5786, %v5784
    %5788 = vst.msk [vmem:[%s9 + $0x8] sm:$0xff] %vm5786, %v5785
    // Predicated region
    $region70: #{tpu_custom_call.1} parent=1 // pred_check
      _
    $region71: #{tpu_custom_call.1} parent=1 // pred_check_branch
      %5790 = sbr.rel (0) target = $region73
    $region72: #{tpu_custom_call.1} parent=1 // pred_region
      _
    $region73: #{tpu_custom_call.1} parent=1 // pred_fallthru
      _
    // Predicated region
    $region74: #{tpu_custom_call.1} parent=1 // pred_check
      _
    $region75: #{tpu_custom_call.1} parent=1 // pred_check_branch
      %5792 = sbr.rel (0) target = $region77
    $region76: #{tpu_custom_call.1} parent=1 // pred_region
      _
    $region77: #{tpu_custom_call.1} parent=1 // pred_fallthru
      _
    %5793 = vsyncpa [#allocation4], 1
    %5794 = vsyncpa [#allocation6], 1
    %5795 = vsyncpa [#allocation9], 1
    %5796 = vsyncpa [#allocation12], 1
    %5797 = vsyncpa [#allocation15], 1

</llo_original>
